<compile_context>
chip_gen: v7x
topology: tpu7x:2x2x1
jax: 0.10.0
libtpu: 0.0.40
codegen_flags: <defaults>
</compile_context>

<pallas_src>
import functools
import math

import jax
import jax.numpy as jnp
import numpy as np
from jax.experimental import pallas as pl
from jax.experimental.pallas import tpu as pltpu

_LN_EPS = 1e-5


def _round_up(x, m):
    return (x + m - 1) // m * m


def _layernorm(x, gamma, beta):
    mu = jnp.mean(x, axis=-1, keepdims=True)
    var = jnp.mean(jnp.square(x - mu), axis=-1, keepdims=True)
    return (x - mu) * jax.lax.rsqrt(var + _LN_EPS) * gamma + beta


def _device_config():
    """Per-generation token-tile targets and scoped-VMEM budget."""
    kind = ""
    try:
        kind = jax.devices()[0].device_kind.lower()
    except Exception:  # pragma: no cover - defensive
        pass
    if "v5" in kind or "v6" in kind:
        # 128 MiB VMEM parts: big token tiles, generous scoped-VMEM limit.
        return dict(tm_general=1024, tm_tail=1024, vmem=100 * 1024 * 1024)
    # v7x (64 MiB VMEM) and unknown parts: conservative.
    return dict(tm_general=512, tm_tail=256, vmem=48 * 1024 * 1024)


def _token_tiling(m, target):
    """Pick (tile, padded_m). Prefers divisors of m (no padding)."""
    target = max(8, target)
    if m <= target:
        # Expose >=2 grid steps when it is free (v7x dual-TC), keep 8-row tiles.
        if m >= 16 and m % 16 == 0:
            return m // 2, m
        return m, m
    t = (target // 8) * 8
    while t >= 8:
        if m % t == 0:
            return t, m
        t -= 8
    # Fallback: pad the token dim. Padded rows are all-zero -> LayerNorm yields
    # finite values (rsqrt(eps)) and the rows are sliced off afterwards.
    t = (target // 8) * 8
    return t, _round_up(m, t)


def _seq_tile(s, target):
    """Largest multiple-of-8 divisor of s that is <= target, else full s."""
    if s <= target:
        return s
    t = (max(8, target) // 8) * 8
    while t >= 8:
        if s % t == 0:
            return t
        t -= 8
    return s  # no clean divisor: single full-sequence KV tile (no key padding)


def _head_group(nhead, head_dim):
    """Heads per attention block so the lane width is >=128 (or full d_model)."""
    if head_dim % 128 == 0:
        return 1
    g = -(-128 // head_dim)  # ceil(128 / head_dim)
    if g <= nhead and nhead % g == 0 and 128 % head_dim == 0:
        return g
    return nhead  # block width == d_model (full last dim of the QKV slab)


# ----------------------------- kernels -------------------------------------


def ln_qkv_kernel(src_ref, g1_ref, b1_ref, wqkv_ref, bqkv_ref, qkv_ref, *, d_model):
    # src_ref: (TM, D) f32; wqkv_ref: (D, 3D) bf16; qkv_ref: (3, TM, D) bf16
    x = src_ref[...]
    xn = _layernorm(x, g1_ref[...], b1_ref[...])
    y = jnp.dot(xn.astype(jnp.bfloat16), wqkv_ref[...],
                preferred_element_type=jnp.float32) + bqkv_ref[...]
    y = y.astype(qkv_ref.dtype)
    qkv_ref[0] = y[:, :d_model]
    qkv_ref[1] = y[:, d_model:2 * d_model]
    qkv_ref[2] = y[:, 2 * d_model:]


def flash_attn_kernel(q_ref, k_ref, v_ref, o_ref, m_sc, l_sc, acc_sc, *,
                      scale, head_dim, heads_per_block):
    # q_ref: (1, 1, TQ, GW) bf16; k_ref/v_ref: (1, 1, TK, GW) bf16
    # o_ref: (1, TQ, GW); scratch: m/l (TQ, gh) f32, acc (TQ, GW) f32
    kv_i = pl.program_id(3)

    @pl.when(kv_i == 0)
    def _init():
        m_sc[...] = jnp.full_like(m_sc, -jnp.inf)
        l_sc[...] = jnp.zeros_like(l_sc)
        acc_sc[...] = jnp.zeros_like(acc_sc)

    q = q_ref[0, 0]
    k = k_ref[0, 0]
    v = v_ref[0, 0]

    for h in range(heads_per_block):
        sl = slice(h * head_dim, (h + 1) * head_dim)
        # scores = Q_h @ K_h^T  (bf16 operands, f32 accumulation)
        s = jax.lax.dot_general(q[:, sl], k[:, sl], (((1,), (1,)), ((), ())),
                                preferred_element_type=jnp.float32) * scale
        m_prev = m_sc[:, h:h + 1]
        m_new = jnp.maximum(m_prev, jnp.max(s, axis=-1, keepdims=True))
        alpha = jnp.exp(m_prev - m_new)
        p = jnp.exp(s - m_new)
        l_sc[:, h:h + 1] = alpha * l_sc[:, h:h + 1] + jnp.sum(p, axis=-1, keepdims=True)
        pv = jax.lax.dot_general(p.astype(jnp.bfloat16), v[:, sl],
                                 (((1,), (0,)), ((), ())),
                                 preferred_element_type=jnp.float32)
        acc_sc[:, sl] = alpha * acc_sc[:, sl] + pv
        m_sc[:, h:h + 1] = m_new

    @pl.when(kv_i == pl.num_programs(3) - 1)
    def _finalize():
        for h in range(heads_per_block):
            sl = slice(h * head_dim, (h + 1) * head_dim)
            inv_l = pl.reciprocal(l_sc[:, h:h + 1], approx=True)
            o_ref[0, :, sl] = (acc_sc[:, sl] * inv_l).astype(o_ref.dtype)


def attn_out_ffn_adapter_kernel(attn_ref, src_ref, wo_ref, bo_ref, g2_ref, b2_ref,
                                w1_ref, bf1_ref, w2_ref, bf2_ref,
                                wd_ref, bd_ref, wu_ref, bu_ref, o_ref):
    # fused: src1 = src + attn@Wo + bo ; norm2 ; FFN ; adapter ; residuals.
    bf16 = jnp.bfloat16
    x = src_ref[...]                                                   # (TM, D) f32
    proj = jnp.dot(attn_ref[...], wo_ref[...],
                   preferred_element_type=jnp.float32) + bo_ref[...]
    src1 = x + proj                                                    # dropout1: identity (eval)
    xn = _layernorm(src1, g2_ref[...], b2_ref[...])
    h = jnp.dot(xn.astype(bf16), w1_ref[...],
                preferred_element_type=jnp.float32) + bf1_ref[...]
    h = jnp.maximum(h, 0.0)                                            # FFN dropout: identity
    ffn = jnp.dot(h.astype(bf16), w2_ref[...],
                  preferred_element_type=jnp.float32) + bf2_ref[...]
    a = jnp.dot(ffn.astype(bf16), wd_ref[...],
                preferred_element_type=jnp.float32) + bd_ref[...]
    a = jnp.maximum(a, 0.0)
    ad = jnp.dot(a.astype(bf16), wu_ref[...],
                 preferred_element_type=jnp.float32) + bu_ref[...]     # adapter dropout: identity
    o_ref[...] = (src1 + ffn + ad).astype(o_ref.dtype)                 # dropout2: identity


# ----------------------------- wrapper --------------------------------------


def encoder_layer_forward(src, p, *, nhead):
    """src: (batch, seq, d_model). Weights stored as (in, out); biases 1-D."""
    batch, seq, d_model = src.shape
    assert d_model % nhead == 0
    head_dim = d_model // nhead
    d_ff = p["w_ffn1"].shape[1]
    bottleneck = p["w_down"].shape[1]
    f32, bf16 = jnp.float32, jnp.bfloat16

    cfg = _device_config()
    M = batch * seq
    x2d = src.reshape(M, d_model).astype(f32)          # free contiguous view

    # ---------------- kernel A: norm1 + fused QKV projection ----------------
    tm_a, mpad_a = _token_tiling(M, cfg["tm_general"])
    xa = jnp.pad(x2d, ((0, mpad_a - M), (0, 0))) if mpad_a != M else x2d

    g1 = p["ln1_gamma"].reshape(1, d_model).astype(f32)
    b1 = p["ln1_beta"].reshape(1, d_model).astype(f32)
    wqkv = p["w_qkv"].astype(bf16)                     # (D, 3D) = [Wq | Wk | Wv]
    bqkv = p["b_qkv"].reshape(1, 3 * d_model).astype(f32)

    qkv = pl.pallas_call(
        functools.partial(ln_qkv_kernel, d_model=d_model),
        out_shape=jax.ShapeDtypeStruct((3, mpad_a, d_model), bf16),
        grid=(mpad_a // tm_a,),
        in_specs=[
            pl.BlockSpec((tm_a, d_model), lambda i: (i, 0)),
            pl.BlockSpec((1, d_model), lambda i: (0, 0)),
            pl.BlockSpec((1, d_model), lambda i: (0, 0)),
            pl.BlockSpec((d_model, 3 * d_model), lambda i: (0, 0)),
            pl.BlockSpec((1, 3 * d_model), lambda i: (0, 0)),
        ],
        out_specs=pl.BlockSpec((3, tm_a, d_model), lambda i: (0, i, 0)),
        compiler_params=pltpu.CompilerParams(
            dimension_semantics=("parallel",), vmem_limit_bytes=cfg["vmem"]),
    )(xa, g1, b1, wqkv, bqkv)

    if mpad_a != M:
        qkv = qkv[:, :M]
    qkv = qkv.reshape(3, batch, seq, d_model)          # free contiguous view

    # ---------------- kernel B: flash attention ------------------------------
    gh = _head_group(nhead, head_dim)                  # heads per block (lane-dense)
    gw = gh * head_dim
    ngroups = nhead // gh
    tq = _seq_tile(seq, 256)
    tk = _seq_tile(seq, 512)
    scale = 1.0 / math.sqrt(head_dim)

    attn = pl.pallas_call(
        functools.partial(flash_attn_kernel, scale=scale, head_dim=head_dim,
                          heads_per_block=gh),
        out_shape=jax.ShapeDtypeStruct((batch, seq, d_model), bf16),
        grid=(batch, ngroups, seq // tq, seq // tk),
        in_specs=[
            pl.BlockSpec((1, 1, tq, gw), lambda b, g, qi, ki: (0, b, qi, g)),
            pl.BlockSpec((1, 1, tk, gw), lambda b, g, qi, ki: (1, b, ki, g)),
            pl.BlockSpec((1, 1, tk, gw), lambda b, g, qi, ki: (2, b, ki, g)),
        ],
        out_specs=pl.BlockSpec((1, tq, gw), lambda b, g, qi, ki: (b, qi, g)),
        scratch_shapes=[
            pltpu.VMEM((tq, gh), jnp.float32),     # running max per head
            pltpu.VMEM((tq, gh), jnp.float32),     # running denominator per head
            pltpu.VMEM((tq, gw), jnp.float32),     # output accumulator
        ],
        compiler_params=pltpu.CompilerParams(
            dimension_semantics=("parallel", "parallel", "parallel", "arbitrary"),
            vmem_limit_bytes=cfg["vmem"]),
    )(qkv, qkv, qkv)
    attn2d = attn.reshape(M, d_model)                  # free contiguous view

    # ------- kernel C: out-proj + residual + norm2 + FFN + adapter (fused) ---
    fp = _round_up(d_ff, 128)                          # zero-padding is exact
    bkp = _round_up(bottleneck, 128)
    wo = p["w_out"].astype(bf16)
    bo = p["b_out"].reshape(1, d_model).astype(f32)
    g2 = p["ln2_gamma"].reshape(1, d_model).astype(f32)
    b2 = p["ln2_beta"].reshape(1, d_model).astype(f32)
    w1 = jnp.pad(p["w_ffn1"], ((0, 0), (0, fp - d_ff))).astype(bf16)
    bf1 = jnp.pad(p["b_ffn1"], (0, fp - d_ff)).reshape(1, fp).astype(f32)
    w2 = jnp.pad(p["w_ffn2"], ((0, fp - d_ff), (0, 0))).astype(bf16)
    bf2 = p["b_ffn2"].reshape(1, d_model).astype(f32)
    wd = jnp.pad(p["w_down"], ((0, 0), (0, bkp - bottleneck))).astype(bf16)
    bd = jnp.pad(p["b_down"], (0, bkp - bottleneck)).reshape(1, bkp).astype(f32)
    wu = jnp.pad(p["w_up"], ((0, bkp - bottleneck), (0, 0))).astype(bf16)
    bu = p["b_up"].reshape(1, d_model).astype(f32)

    tm_d, mpad_d = _token_tiling(M, cfg["tm_tail"])
    if mpad_d != M:
        xd = jnp.pad(x2d, ((0, mpad_d - M), (0, 0)))
        attn_d = jnp.pad(attn2d, ((0, mpad_d - M), (0, 0)))
    else:
        xd, attn_d = x2d, attn2d

    # Resident bf16 weight bytes; single-buffer the constant-index weight specs
    # when they are big enough to threaten the (v7x) VMEM budget.
    weight_bytes = 2 * (d_model * d_model + 2 * d_model * fp + 2 * d_model * bkp)
    single_buffer = 2 * weight_bytes > cfg["vmem"] // 3

    def wspec(shape):
        if single_buffer:
            return pl.BlockSpec(shape, lambda i: (0, 0), pipeline_mode=pl.Buffered(1))
        return pl.BlockSpec(shape, lambda i: (0, 0))

    flops = 2 * mpad_d * d_model * (d_model + 2 * fp + 2 * bkp) + 10 * mpad_d * d_model
    bytes_acc = (2 * mpad_d * d_model        # attn (bf16)
                 + 8 * mpad_d * d_model      # src in + out (f32)
                 + weight_bytes
                 + 4 * (4 * d_model + fp + bkp))

    out2d = pl.pallas_call(
        attn_out_ffn_adapter_kernel,
        out_shape=jax.ShapeDtypeStruct((mpad_d, d_model), f32),
        grid=(mpad_d // tm_d,),
        in_specs=[
            pl.BlockSpec((tm_d, d_model), lambda i: (i, 0)),   # attention output
            pl.BlockSpec((tm_d, d_model), lambda i: (i, 0)),   # src (residual)
            wspec((d_model, d_model)),                         # Wo
            wspec((1, d_model)),                               # bo
            wspec((1, d_model)),                               # ln2 gamma
            wspec((1, d_model)),                               # ln2 beta
            wspec((d_model, fp)),                              # W1
            wspec((1, fp)),                                    # b1
            wspec((fp, d_model)),                              # W2
            wspec((1, d_model)),                               # b2
            wspec((d_model, bkp)),                             # W_down
            wspec((1, bkp)),                                   # b_down
            wspec((bkp, d_model)),                             # W_up
            wspec((1, d_model)),                               # b_up
        ],
        out_specs=pl.BlockSpec((tm_d, d_model), lambda i: (i, 0)),
        compiler_params=pltpu.CompilerParams(
            dimension_semantics=("parallel",), vmem_limit_bytes=cfg["vmem"]),
        cost_estimate=pl.CostEstimate(flops=int(flops), transcendentals=int(mpad_d),
                                      bytes_accessed=int(bytes_acc)),
    )(attn_d, xd, wo, bo, g2, b2, w1, bf1, w2, bf2, wd, bd, wu, bu)

    if mpad_d != M:
        out2d = out2d[:M]
    return out2d.reshape(batch, seq, d_model).astype(src.dtype)


# ----------------------------- reference ------------------------------------


def reference_layer(src, p, *, nhead):
    hp = functools.partial(jnp.matmul, precision=jax.lax.Precision.HIGHEST)

    def ln(x, g, b):
        mu = x.mean(-1, keepdims=True)
        var = jnp.square(x - mu).mean(-1, keepdims=True)
        return (x - mu) / jnp.sqrt(var + _LN_EPS) * g + b

    B, S, D = src.shape
    hd = D // nhead
    x1 = ln(src, p["ln1_gamma"], p["ln1_beta"])
    qkv = (hp(x1, p["w_qkv"]) + p["b_qkv"]).reshape(B, S, 3, nhead, hd)
    q = qkv[:, :, 0].transpose(0, 2, 1, 3)
    k = qkv[:, :, 1].transpose(0, 2, 1, 3)
    v = qkv[:, :, 2].transpose(0, 2, 1, 3)
    s = jnp.einsum("bhqd,bhkd->bhqk", q, k,
                   precision=jax.lax.Precision.HIGHEST) / math.sqrt(hd)
    m = jnp.max(s, axis=-1, keepdims=True)
    e = jnp.exp(s - m)
    pa = e / jnp.sum(e, axis=-1, keepdims=True)
    o = jnp.einsum("bhqk,bhkd->bhqd", pa, v,
                   precision=jax.lax.Precision.HIGHEST)
    o = o.transpose(0, 2, 1, 3).reshape(B, S, D)
    src1 = src + hp(o, p["w_out"]) + p["b_out"]           # dropout1 identity
    x2 = ln(src1, p["ln2_gamma"], p["ln2_beta"])
    h = jnp.maximum(hp(x2, p["w_ffn1"]) + p["b_ffn1"], 0.0)
    ffn = hp(h, p["w_ffn2"]) + p["b_ffn2"]
    a = jnp.maximum(hp(ffn, p["w_down"]) + p["b_down"], 0.0)
    ad = hp(a, p["w_up"]) + p["b_up"]
    return src1 + ffn + ad                                 # dropout2 identity


# ----------------------------- demo / self-test ------------------------------


if __name__ == "__main__":
    batch, seq = 2, 8
    d_model, nhead, d_ff, bottleneck = 32, 4, 64, 16

    key = jax.random.PRNGKey(0)
    ks = jax.random.split(key, 17)

    def unif(k, shape, fan_in):
        b = 1.0 / math.sqrt(fan_in)
        return jax.random.uniform(k, shape, jnp.float32, minval=-b, maxval=b)

    params = {
        "ln1_gamma": 1.0 + 0.1 * jax.random.normal(ks[0], (d_model,), jnp.float32),
        "ln1_beta": 0.1 * jax.random.normal(ks[1], (d_model,), jnp.float32),
        "w_qkv": unif(ks[2], (d_model, 3 * d_model), d_model),
        "b_qkv": unif(ks[3], (3 * d_model,), d_model),
        "w_out": unif(ks[4], (d_model, d_model), d_model),
        "b_out": unif(ks[5], (d_model,), d_model),
        "ln2_gamma": 1.0 + 0.1 * jax.random.normal(ks[6], (d_model,), jnp.float32),
        "ln2_beta": 0.1 * jax.random.normal(ks[7], (d_model,), jnp.float32),
        "w_ffn1": unif(ks[8], (d_model, d_ff), d_model),
        "b_ffn1": unif(ks[9], (d_ff,), d_model),
        "w_ffn2": unif(ks[10], (d_ff, d_model), d_ff),
        "b_ffn2": unif(ks[11], (d_model,), d_ff),
        "w_down": unif(ks[12], (d_model, bottleneck), d_model),
        "b_down": unif(ks[13], (bottleneck,), d_model),
        # Module default init zeroes the adapter up-projection; use random values
        # here so the numerical check actually exercises that path.
        "w_up": unif(ks[14], (bottleneck, d_model), bottleneck),
        "b_up": unif(ks[15], (d_model,), bottleneck),
    }

    src = jax.random.normal(ks[16], (batch, seq, d_model), jnp.float32)

    fwd = jax.jit(functools.partial(encoder_layer_forward, nhead=nhead))
    out = jax.block_until_ready(fwd(src, params))

    ref = reference_layer(src, params, nhead=nhead)
    # bf16 MXU operands (weights + activations) -> compare against the f32
    # reference with a bf16-appropriate tolerance.
    np.testing.assert_allclose(np.asarray(out), np.asarray(ref),
                               rtol=3e-2, atol=3e-2)

    print("KERNEL_OK")
</pallas_src>

<mosaic_0001>
module attributes {stable_mosaic.version = 11 : i64} {
  func.func @ln_qkv_kernel(%arg0: i32, %arg1: memref<8x32xf32, #tpu.memory_space<vmem>>, %arg2: memref<1x32xf32, #tpu.memory_space<vmem>>, %arg3: memref<1x32xf32, #tpu.memory_space<vmem>>, %arg4: memref<32x96xbf16, #tpu.memory_space<vmem>>, %arg5: memref<1x96xf32, #tpu.memory_space<vmem>>, %arg6: memref<3x8x32xbf16, #tpu.memory_space<vmem>>) attributes {dimension_semantics = [#tpu.dimension_semantics<parallel>], iteration_bounds = array<i64: 2>, scalar_prefetch = 0 : i64, scratch_operands = 0 : i64, tpu.core_type = #tpu.core_type<tc>, window_params = [{transform_indices = @transform_0, window_bounds = array<i64: 8, 32>}, {pipeline_mode = #tpu.pipeline_mode<synchronous>, transform_indices = @transform_1, window_bounds = array<i64: 1, 32>}, {pipeline_mode = #tpu.pipeline_mode<synchronous>, transform_indices = @transform_2, window_bounds = array<i64: 1, 32>}, {pipeline_mode = #tpu.pipeline_mode<synchronous>, transform_indices = @transform_3, window_bounds = array<i64: 32, 96>}, {pipeline_mode = #tpu.pipeline_mode<synchronous>, transform_indices = @transform_4, window_bounds = array<i64: 1, 96>}, {transform_indices = @transform_5, window_bounds = array<i64: 3, 8, 32>}]} {
    %c0 = arith.constant 0 : index
    %c0_0 = arith.constant 0 : index
    %0 = vector.load %arg1[%c0, %c0_0] : memref<8x32xf32, #tpu.memory_space<vmem>>, vector<8x32xf32>
    %c0_1 = arith.constant 0 : index
    %c0_2 = arith.constant 0 : index
    %1 = vector.load %arg2[%c0_1, %c0_2] : memref<1x32xf32, #tpu.memory_space<vmem>>, vector<1x32xf32>
    %c0_3 = arith.constant 0 : index
    %c0_4 = arith.constant 0 : index
    %2 = vector.load %arg3[%c0_3, %c0_4] : memref<1x32xf32, #tpu.memory_space<vmem>>, vector<1x32xf32>
    %cst = arith.constant dense<0.000000e+00> : vector<8xf32>
    %3 = vector.multi_reduction <add>, %0, %cst [1] : vector<8x32xf32> to vector<8xf32>
    %4 = vector.shape_cast %3 : vector<8xf32> to vector<8x1xf32>
    %cst_5 = arith.constant 3.200000e+01 : f32
    %5 = vector.broadcast %cst_5 : f32 to vector<8x1xf32>
    %6 = arith.divf %4, %5 : vector<8x1xf32>
    %7 = vector.broadcast %6 : vector<8x1xf32> to vector<8x32xf32>
    %8 = arith.subf %0, %7 : vector<8x32xf32>
    %9 = arith.mulf %8, %8 : vector<8x32xf32>
    %cst_6 = arith.constant dense<0.000000e+00> : vector<8xf32>
    %10 = vector.multi_reduction <add>, %9, %cst_6 [1] : vector<8x32xf32> to vector<8xf32>
    %11 = vector.shape_cast %10 : vector<8xf32> to vector<8x1xf32>
    %cst_7 = arith.constant 3.200000e+01 : f32
    %12 = vector.broadcast %cst_7 : f32 to vector<8x1xf32>
    %13 = arith.divf %11, %12 : vector<8x1xf32>
    %14 = vector.broadcast %6 : vector<8x1xf32> to vector<8x32xf32>
    %15 = arith.subf %0, %14 : vector<8x32xf32>
    %cst_8 = arith.constant 9.99999974E-6 : f32
    %16 = vector.broadcast %cst_8 : f32 to vector<8x1xf32>
    %17 = arith.addf %13, %16 : vector<8x1xf32>
    %18 = math.rsqrt %17 : vector<8x1xf32>
    %19 = vector.broadcast %18 : vector<8x1xf32> to vector<8x32xf32>
    %20 = arith.mulf %15, %19 : vector<8x32xf32>
    %21 = vector.broadcast %1 : vector<1x32xf32> to vector<8x32xf32>
    %22 = arith.mulf %20, %21 : vector<8x32xf32>
    %23 = vector.broadcast %2 : vector<1x32xf32> to vector<8x32xf32>
    %24 = arith.addf %22, %23 : vector<8x32xf32>
    %25 = arith.truncf %24 : vector<8x32xf32> to vector<8x32xbf16>
    %c0_9 = arith.constant 0 : index
    %c0_10 = arith.constant 0 : index
    %26 = vector.load %arg4[%c0_9, %c0_10] : memref<32x96xbf16, #tpu.memory_space<vmem>>, vector<32x96xbf16>
    %cst_11 = arith.constant dense<0.000000e+00> : vector<8x96xf32>
    %27 = tpu.matmul %25, %26, %cst_11 {dimension_numbers = #tpu.dot_dimension_numbers<[1], [0], [0], [1], [0, 0, 1, 1], [], []>} : vector<8x32xbf16>, vector<32x96xbf16>, vector<8x96xf32> -> vector<8x96xf32>
    %c0_12 = arith.constant 0 : index
    %c0_13 = arith.constant 0 : index
    %28 = vector.load %arg5[%c0_12, %c0_13] : memref<1x96xf32, #tpu.memory_space<vmem>>, vector<1x96xf32>
    %29 = vector.broadcast %28 : vector<1x96xf32> to vector<8x96xf32>
    %30 = arith.addf %27, %29 : vector<8x96xf32>
    %31 = arith.truncf %30 : vector<8x96xf32> to vector<8x96xbf16>
    %32 = vector.extract_strided_slice %31 {offsets = [0, 0], sizes = [8, 32], strides = [1, 1]} : vector<8x96xbf16> to vector<8x32xbf16>
    %c0_14 = arith.constant 0 : index
    %c0_15 = arith.constant 0 : index
    %c0_16 = arith.constant 0 : index
    %33 = vector.load %arg6[%c0_14, %c0_15, %c0_16] : memref<3x8x32xbf16, #tpu.memory_space<vmem>>, vector<1x8x32xbf16>
    %34 = vector.shape_cast %33 : vector<1x8x32xbf16> to vector<8x32xbf16>
    %35 = vector.shape_cast %32 : vector<8x32xbf16> to vector<1x8x32xbf16>
    tpu.vector_store %arg6[%c0_14, %c0_15, %c0_16], %35 {strides = array<i32>} : memref<3x8x32xbf16, #tpu.memory_space<vmem>>, vector<1x8x32xbf16>,
    %36 = vector.extract_strided_slice %31 {offsets = [0, 32], sizes = [8, 32], strides = [1, 1]} : vector<8x96xbf16> to vector<8x32xbf16>
    %c1 = arith.constant 1 : index
    %c0_17 = arith.constant 0 : index
    %c0_18 = arith.constant 0 : index
    %37 = vector.load %arg6[%c1, %c0_17, %c0_18] : memref<3x8x32xbf16, #tpu.memory_space<vmem>>, vector<1x8x32xbf16>
    %38 = vector.shape_cast %37 : vector<1x8x32xbf16> to vector<8x32xbf16>
    %39 = vector.shape_cast %36 : vector<8x32xbf16> to vector<1x8x32xbf16>
    tpu.vector_store %arg6[%c1, %c0_17, %c0_18], %39 {strides = array<i32>} : memref<3x8x32xbf16, #tpu.memory_space<vmem>>, vector<1x8x32xbf16>,
    %40 = vector.extract_strided_slice %31 {offsets = [0, 64], sizes = [8, 32], strides = [1, 1]} : vector<8x96xbf16> to vector<8x32xbf16>
    %c2 = arith.constant 2 : index
    %c0_19 = arith.constant 0 : index
    %c0_20 = arith.constant 0 : index
    %41 = vector.load %arg6[%c2, %c0_19, %c0_20] : memref<3x8x32xbf16, #tpu.memory_space<vmem>>, vector<1x8x32xbf16>
    %42 = vector.shape_cast %41 : vector<1x8x32xbf16> to vector<8x32xbf16>
    %43 = vector.shape_cast %40 : vector<8x32xbf16> to vector<1x8x32xbf16>
    tpu.vector_store %arg6[%c2, %c0_19, %c0_20], %43 {strides = array<i32>} : memref<3x8x32xbf16, #tpu.memory_space<vmem>>, vector<1x8x32xbf16>,
    return
  }
  func.func @transform_0(%arg0: i32) -> (i32, i32) {
    %c0_i32 = arith.constant 0 : i32
    %c0_i32_0 = arith.constant 0 : i32
    return %arg0, %c0_i32 : i32, i32
  }
  func.func @transform_1(%arg0: i32) -> (i32, i32) {
    %c0_i32 = arith.constant 0 : i32
    %c0_i32_0 = arith.constant 0 : i32
    %c0_i32_1 = arith.constant 0 : i32
    return %c0_i32, %c0_i32_0 : i32, i32
  }
  func.func @transform_2(%arg0: i32) -> (i32, i32) {
    %c0_i32 = arith.constant 0 : i32
    %c0_i32_0 = arith.constant 0 : i32
    %c0_i32_1 = arith.constant 0 : i32
    return %c0_i32, %c0_i32_0 : i32, i32
  }
  func.func @transform_3(%arg0: i32) -> (i32, i32) {
    %c0_i32 = arith.constant 0 : i32
    %c0_i32_0 = arith.constant 0 : i32
    %c0_i32_1 = arith.constant 0 : i32
    return %c0_i32, %c0_i32_0 : i32, i32
  }
  func.func @transform_4(%arg0: i32) -> (i32, i32) {
    %c0_i32 = arith.constant 0 : i32
    %c0_i32_0 = arith.constant 0 : i32
    %c0_i32_1 = arith.constant 0 : i32
    return %c0_i32, %c0_i32_0 : i32, i32
  }
  func.func @transform_5(%arg0: i32) -> (i32, i32, i32) {
    %c0_i32 = arith.constant 0 : i32
    %c0_i32_0 = arith.constant 0 : i32
    %c0_i32_1 = arith.constant 0 : i32
    return %c0_i32, %arg0, %c0_i32_0 : i32, i32, i32
  }
}

module attributes {stable_mosaic.version = 11 : i64} {
  func.func @flash_attn_kernel(%arg0: i32, %arg1: i32, %arg2: i32, %arg3: i32, %arg4: memref<1x1x8x32xbf16, #tpu.memory_space<vmem>>, %arg5: memref<1x1x8x32xbf16, #tpu.memory_space<vmem>>, %arg6: memref<1x1x8x32xbf16, #tpu.memory_space<vmem>>, %arg7: memref<1x8x32xbf16, #tpu.memory_space<vmem>>, %arg8: memref<8x4xf32, #tpu.memory_space<vmem>>, %arg9: memref<8x4xf32, #tpu.memory_space<vmem>>, %arg10: memref<8x32xf32, #tpu.memory_space<vmem>>) attributes {dimension_semantics = [#tpu.dimension_semantics<parallel>, #tpu.dimension_semantics<parallel>, #tpu.dimension_semantics<parallel>, #tpu.dimension_semantics<arbitrary>], iteration_bounds = array<i64: 2, 1, 1, 1>, scalar_prefetch = 0 : i64, scratch_operands = 3 : i64, tpu.core_type = #tpu.core_type<tc>, window_params = [{transform_indices = @transform_0, window_bounds = array<i64: 1, 1, 8, 32>}, {transform_indices = @transform_1, window_bounds = array<i64: 1, 1, 8, 32>}, {transform_indices = @transform_2, window_bounds = array<i64: 1, 1, 8, 32>}, {transform_indices = @transform_3, window_bounds = array<i64: 1, 8, 32>}]} {
    %c0_i32 = arith.constant 0 : i32
    %0 = arith.cmpi eq, %arg3, %c0_i32 : i32
    %1 = arith.extui %0 : i1 to i32
    %c0_i32_0 = arith.constant 0 : i32
    %2 = arith.cmpi ne, %1, %c0_i32_0 : i32
    scf.if %2 {
      %cst_75 = arith.constant 0xFF800000 : f32
      %128 = vector.broadcast %cst_75 : f32 to vector<8x4xf32>
      %c0_76 = arith.constant 0 : index
      %c0_77 = arith.constant 0 : index
      %129 = vector.load %arg8[%c0_76, %c0_77] : memref<8x4xf32, #tpu.memory_space<vmem>>, vector<8x4xf32>
      tpu.vector_store %arg8[%c0_76, %c0_77], %128 {strides = array<i32>} : memref<8x4xf32, #tpu.memory_space<vmem>>, vector<8x4xf32>,
      %cst_78 = arith.constant 0.000000e+00 : f32
      %130 = vector.broadcast %cst_78 : f32 to vector<8x4xf32>
      %c0_79 = arith.constant 0 : index
      %c0_80 = arith.constant 0 : index
      %131 = vector.load %arg9[%c0_79, %c0_80] : memref<8x4xf32, #tpu.memory_space<vmem>>, vector<8x4xf32>
      tpu.vector_store %arg9[%c0_79, %c0_80], %130 {strides = array<i32>} : memref<8x4xf32, #tpu.memory_space<vmem>>, vector<8x4xf32>,
      %cst_81 = arith.constant 0.000000e+00 : f32
      %132 = vector.broadcast %cst_81 : f32 to vector<8x32xf32>
      %c0_82 = arith.constant 0 : index
      %c0_83 = arith.constant 0 : index
      %133 = vector.load %arg10[%c0_82, %c0_83] : memref<8x32xf32, #tpu.memory_space<vmem>>, vector<8x32xf32>
      tpu.vector_store %arg10[%c0_82, %c0_83], %132 {strides = array<i32>} : memref<8x32xf32, #tpu.memory_space<vmem>>, vector<8x32xf32>,
    } else {
    }
    %c0 = arith.constant 0 : index
    %c0_1 = arith.constant 0 : index
    %c0_2 = arith.constant 0 : index
    %c0_3 = arith.constant 0 : index
    %3 = vector.load %arg4[%c0, %c0_1, %c0_2, %c0_3] : memref<1x1x8x32xbf16, #tpu.memory_space<vmem>>, vector<1x1x8x32xbf16>
    %4 = vector.shape_cast %3 : vector<1x1x8x32xbf16> to vector<8x32xbf16>
    %c0_4 = arith.constant 0 : index
    %c0_5 = arith.constant 0 : index
    %c0_6 = arith.constant 0 : index
    %c0_7 = arith.constant 0 : index
    %5 = vector.load %arg5[%c0_4, %c0_5, %c0_6, %c0_7] : memref<1x1x8x32xbf16, #tpu.memory_space<vmem>>, vector<1x1x8x32xbf16>
    %6 = vector.shape_cast %5 : vector<1x1x8x32xbf16> to vector<8x32xbf16>
    %c0_8 = arith.constant 0 : index
    %c0_9 = arith.constant 0 : index
    %c0_10 = arith.constant 0 : index
    %c0_11 = arith.constant 0 : index
    %7 = vector.load %arg6[%c0_8, %c0_9, %c0_10, %c0_11] : memref<1x1x8x32xbf16, #tpu.memory_space<vmem>>, vector<1x1x8x32xbf16>
    %8 = vector.shape_cast %7 : vector<1x1x8x32xbf16> to vector<8x32xbf16>
    %9 = vector.extract_strided_slice %4 {offsets = [0, 0], sizes = [8, 8], strides = [1, 1]} : vector<8x32xbf16> to vector<8x8xbf16>
    %10 = vector.extract_strided_slice %6 {offsets = [0, 0], sizes = [8, 8], strides = [1, 1]} : vector<8x32xbf16> to vector<8x8xbf16>
    %cst = arith.constant dense<0.000000e+00> : vector<8x8xf32>
    %11 = tpu.matmul %9, %10, %cst {dimension_numbers = #tpu.dot_dimension_numbers<[1], [1], [0], [0], [0, 0, 1, 0], [], []>} : vector<8x8xbf16>, vector<8x8xbf16>, vector<8x8xf32> -> vector<8x8xf32>
    %cst_12 = arith.constant 0.353553385 : f32
    %12 = vector.broadcast %cst_12 : f32 to vector<8x8xf32>
    %13 = arith.mulf %11, %12 : vector<8x8xf32>
    %c0_13 = arith.constant 0 : index
    %c0_14 = arith.constant 0 : index
    %14 = vector.load %arg8[%c0_13, %c0_14] : memref<8x4xf32, #tpu.memory_space<vmem>>, vector<8x1xf32>
    %cst_15 = arith.constant dense<0xFF800000> : vector<8xf32>
    %15 = vector.multi_reduction <maximumf>, %13, %cst_15 [1] : vector<8x8xf32> to vector<8xf32>
    %16 = vector.shape_cast %15 : vector<8xf32> to vector<8x1xf32>
    %17 = arith.maximumf %14, %16 : vector<8x1xf32>
    %18 = arith.subf %14, %17 : vector<8x1xf32>
    %19 = math.exp %18 : vector<8x1xf32>
    %20 = vector.broadcast %17 : vector<8x1xf32> to vector<8x8xf32>
    %21 = arith.subf %13, %20 : vector<8x8xf32>
    %22 = math.exp %21 : vector<8x8xf32>
    %c0_16 = arith.constant 0 : index
    %c0_17 = arith.constant 0 : index
    %23 = vector.load %arg9[%c0_16, %c0_17] : memref<8x4xf32, #tpu.memory_space<vmem>>, vector<8x1xf32>
    %24 = arith.mulf %19, %23 : vector<8x1xf32>
    %cst_18 = arith.constant dense<0.000000e+00> : vector<8xf32>
    %25 = vector.multi_reduction <add>, %22, %cst_18 [1] : vector<8x8xf32> to vector<8xf32>
    %26 = vector.shape_cast %25 : vector<8xf32> to vector<8x1xf32>
    %27 = arith.addf %24, %26 : vector<8x1xf32>
    %c0_19 = arith.constant 0 : index
    %c0_20 = arith.constant 0 : index
    %28 = vector.load %arg9[%c0_19, %c0_20] : memref<8x4xf32, #tpu.memory_space<vmem>>, vector<8x1xf32>
    tpu.vector_store %arg9[%c0_19, %c0_20], %27 {strides = array<i32>} : memref<8x4xf32, #tpu.memory_space<vmem>>, vector<8x1xf32>,
    %29 = arith.truncf %22 : vector<8x8xf32> to vector<8x8xbf16>
    %30 = vector.extract_strided_slice %8 {offsets = [0, 0], sizes = [8, 8], strides = [1, 1]} : vector<8x32xbf16> to vector<8x8xbf16>
    %cst_21 = arith.constant dense<0.000000e+00> : vector<8x8xf32>
    %31 = tpu.matmul %29, %30, %cst_21 {dimension_numbers = #tpu.dot_dimension_numbers<[1], [0], [0], [1], [0, 0, 1, 1], [], []>} : vector<8x8xbf16>, vector<8x8xbf16>, vector<8x8xf32> -> vector<8x8xf32>
    %c0_22 = arith.constant 0 : index
    %c0_23 = arith.constant 0 : index
    %32 = vector.load %arg10[%c0_22, %c0_23] : memref<8x32xf32, #tpu.memory_space<vmem>>, vector<8x8xf32>
    %33 = vector.broadcast %19 : vector<8x1xf32> to vector<8x8xf32>
    %34 = arith.mulf %33, %32 : vector<8x8xf32>
    %35 = arith.addf %34, %31 : vector<8x8xf32>
    %c0_24 = arith.constant 0 : index
    %c0_25 = arith.constant 0 : index
    %36 = vector.load %arg10[%c0_24, %c0_25] : memref<8x32xf32, #tpu.memory_space<vmem>>, vector<8x8xf32>
    tpu.vector_store %arg10[%c0_24, %c0_25], %35 {strides = array<i32>} : memref<8x32xf32, #tpu.memory_space<vmem>>, vector<8x8xf32>,
    %c0_26 = arith.constant 0 : index
    %c0_27 = arith.constant 0 : index
    %37 = vector.load %arg8[%c0_26, %c0_27] : memref<8x4xf32, #tpu.memory_space<vmem>>, vector<8x1xf32>
    tpu.vector_store %arg8[%c0_26, %c0_27], %17 {strides = array<i32>} : memref<8x4xf32, #tpu.memory_space<vmem>>, vector<8x1xf32>,
    %38 = vector.extract_strided_slice %4 {offsets = [0, 8], sizes = [8, 8], strides = [1, 1]} : vector<8x32xbf16> to vector<8x8xbf16>
    %39 = vector.extract_strided_slice %6 {offsets = [0, 8], sizes = [8, 8], strides = [1, 1]} : vector<8x32xbf16> to vector<8x8xbf16>
    %cst_28 = arith.constant dense<0.000000e+00> : vector<8x8xf32>
    %40 = tpu.matmul %38, %39, %cst_28 {dimension_numbers = #tpu.dot_dimension_numbers<[1], [1], [0], [0], [0, 0, 1, 0], [], []>} : vector<8x8xbf16>, vector<8x8xbf16>, vector<8x8xf32> -> vector<8x8xf32>
    %cst_29 = arith.constant 0.353553385 : f32
    %41 = vector.broadcast %cst_29 : f32 to vector<8x8xf32>
    %42 = arith.mulf %40, %41 : vector<8x8xf32>
    %c0_30 = arith.constant 0 : index
    %c1 = arith.constant 1 : index
    %43 = vector.load %arg8[%c0_30, %c1] : memref<8x4xf32, #tpu.memory_space<vmem>>, vector<8x1xf32>
    %cst_31 = arith.constant dense<0xFF800000> : vector<8xf32>
    %44 = vector.multi_reduction <maximumf>, %42, %cst_31 [1] : vector<8x8xf32> to vector<8xf32>
    %45 = vector.shape_cast %44 : vector<8xf32> to vector<8x1xf32>
    %46 = arith.maximumf %43, %45 : vector<8x1xf32>
    %47 = arith.subf %43, %46 : vector<8x1xf32>
    %48 = math.exp %47 : vector<8x1xf32>
    %49 = vector.broadcast %46 : vector<8x1xf32> to vector<8x8xf32>
    %50 = arith.subf %42, %49 : vector<8x8xf32>
    %51 = math.exp %50 : vector<8x8xf32>
    %c0_32 = arith.constant 0 : index
    %c1_33 = arith.constant 1 : index
    %52 = vector.load %arg9[%c0_32, %c1_33] : memref<8x4xf32, #tpu.memory_space<vmem>>, vector<8x1xf32>
    %53 = arith.mulf %48, %52 : vector<8x1xf32>
    %cst_34 = arith.constant dense<0.000000e+00> : vector<8xf32>
    %54 = vector.multi_reduction <add>, %51, %cst_34 [1] : vector<8x8xf32> to vector<8xf32>
    %55 = vector.shape_cast %54 : vector<8xf32> to vector<8x1xf32>
    %56 = arith.addf %53, %55 : vector<8x1xf32>
    %c0_35 = arith.constant 0 : index
    %c1_36 = arith.constant 1 : index
    %57 = vector.load %arg9[%c0_35, %c1_36] : memref<8x4xf32, #tpu.memory_space<vmem>>, vector<8x1xf32>
    tpu.vector_store %arg9[%c0_35, %c1_36], %56 {strides = array<i32>} : memref<8x4xf32, #tpu.memory_space<vmem>>, vector<8x1xf32>,
    %58 = arith.truncf %51 : vector<8x8xf32> to vector<8x8xbf16>
    %59 = vector.extract_strided_slice %8 {offsets = [0, 8], sizes = [8, 8], strides = [1, 1]} : vector<8x32xbf16> to vector<8x8xbf16>
    %cst_37 = arith.constant dense<0.000000e+00> : vector<8x8xf32>
    %60 = tpu.matmul %58, %59, %cst_37 {dimension_numbers = #tpu.dot_dimension_numbers<[1], [0], [0], [1], [0, 0, 1, 1], [], []>} : vector<8x8xbf16>, vector<8x8xbf16>, vector<8x8xf32> -> vector<8x8xf32>
    %c0_38 = arith.constant 0 : index
    %c8 = arith.constant 8 : index
    %61 = vector.load %arg10[%c0_38, %c8] : memref<8x32xf32, #tpu.memory_space<vmem>>, vector<8x8xf32>
    %62 = vector.broadcast %48 : vector<8x1xf32> to vector<8x8xf32>
    %63 = arith.mulf %62, %61 : vector<8x8xf32>
    %64 = arith.addf %63, %60 : vector<8x8xf32>
    %c0_39 = arith.constant 0 : index
    %c8_40 = arith.constant 8 : index
    %65 = vector.load %arg10[%c0_39, %c8_40] : memref<8x32xf32, #tpu.memory_space<vmem>>, vector<8x8xf32>
    tpu.vector_store %arg10[%c0_39, %c8_40], %64 {strides = array<i32>} : memref<8x32xf32, #tpu.memory_space<vmem>>, vector<8x8xf32>,
    %c0_41 = arith.constant 0 : index
    %c1_42 = arith.constant 1 : index
    %66 = vector.load %arg8[%c0_41, %c1_42] : memref<8x4xf32, #tpu.memory_space<vmem>>, vector<8x1xf32>
    tpu.vector_store %arg8[%c0_41, %c1_42], %46 {strides = array<i32>} : memref<8x4xf32, #tpu.memory_space<vmem>>, vector<8x1xf32>,
    %67 = vector.extract_strided_slice %4 {offsets = [0, 16], sizes = [8, 8], strides = [1, 1]} : vector<8x32xbf16> to vector<8x8xbf16>
    %68 = vector.extract_strided_slice %6 {offsets = [0, 16], sizes = [8, 8], strides = [1, 1]} : vector<8x32xbf16> to vector<8x8xbf16>
    %cst_43 = arith.constant dense<0.000000e+00> : vector<8x8xf32>
    %69 = tpu.matmul %67, %68, %cst_43 {dimension_numbers = #tpu.dot_dimension_numbers<[1], [1], [0], [0], [0, 0, 1, 0], [], []>} : vector<8x8xbf16>, vector<8x8xbf16>, vector<8x8xf32> -> vector<8x8xf32>
    %cst_44 = arith.constant 0.353553385 : f32
    %70 = vector.broadcast %cst_44 : f32 to vector<8x8xf32>
    %71 = arith.mulf %69, %70 : vector<8x8xf32>
    %c0_45 = arith.constant 0 : index
    %c2 = arith.constant 2 : index
    %72 = vector.load %arg8[%c0_45, %c2] : memref<8x4xf32, #tpu.memory_space<vmem>>, vector<8x1xf32>
    %cst_46 = arith.constant dense<0xFF800000> : vector<8xf32>
    %73 = vector.multi_reduction <maximumf>, %71, %cst_46 [1] : vector<8x8xf32> to vector<8xf32>
    %74 = vector.shape_cast %73 : vector<8xf32> to vector<8x1xf32>
    %75 = arith.maximumf %72, %74 : vector<8x1xf32>
    %76 = arith.subf %72, %75 : vector<8x1xf32>
    %77 = math.exp %76 : vector<8x1xf32>
    %78 = vector.broadcast %75 : vector<8x1xf32> to vector<8x8xf32>
    %79 = arith.subf %71, %78 : vector<8x8xf32>
    %80 = math.exp %79 : vector<8x8xf32>
    %c0_47 = arith.constant 0 : index
    %c2_48 = arith.constant 2 : index
    %81 = vector.load %arg9[%c0_47, %c2_48] : memref<8x4xf32, #tpu.memory_space<vmem>>, vector<8x1xf32>
    %82 = arith.mulf %77, %81 : vector<8x1xf32>
    %cst_49 = arith.constant dense<0.000000e+00> : vector<8xf32>
    %83 = vector.multi_reduction <add>, %80, %cst_49 [1] : vector<8x8xf32> to vector<8xf32>
    %84 = vector.shape_cast %83 : vector<8xf32> to vector<8x1xf32>
    %85 = arith.addf %82, %84 : vector<8x1xf32>
    %c0_50 = arith.constant 0 : index
    %c2_51 = arith.constant 2 : index
    %86 = vector.load %arg9[%c0_50, %c2_51] : memref<8x4xf32, #tpu.memory_space<vmem>>, vector<8x1xf32>
    tpu.vector_store %arg9[%c0_50, %c2_51], %85 {strides = array<i32>} : memref<8x4xf32, #tpu.memory_space<vmem>>, vector<8x1xf32>,
    %87 = arith.truncf %80 : vector<8x8xf32> to vector<8x8xbf16>
    %88 = vector.extract_strided_slice %8 {offsets = [0, 16], sizes = [8, 8], strides = [1, 1]} : vector<8x32xbf16> to vector<8x8xbf16>
    %cst_52 = arith.constant dense<0.000000e+00> : vector<8x8xf32>
    %89 = tpu.matmul %87, %88, %cst_52 {dimension_numbers = #tpu.dot_dimension_numbers<[1], [0], [0], [1], [0, 0, 1, 1], [], []>} : vector<8x8xbf16>, vector<8x8xbf16>, vector<8x8xf32> -> vector<8x8xf32>
    %c0_53 = arith.constant 0 : index
    %c16 = arith.constant 16 : index
    %90 = vector.load %arg10[%c0_53, %c16] : memref<8x32xf32, #tpu.memory_space<vmem>>, vector<8x8xf32>
    %91 = vector.broadcast %77 : vector<8x1xf32> to vector<8x8xf32>
    %92 = arith.mulf %91, %90 : vector<8x8xf32>
    %93 = arith.addf %92, %89 : vector<8x8xf32>
    %c0_54 = arith.constant 0 : index
    %c16_55 = arith.constant 16 : index
    %94 = vector.load %arg10[%c0_54, %c16_55] : memref<8x32xf32, #tpu.memory_space<vmem>>, vector<8x8xf32>
    tpu.vector_store %arg10[%c0_54, %c16_55], %93 {strides = array<i32>} : memref<8x32xf32, #tpu.memory_space<vmem>>, vector<8x8xf32>,
    %c0_56 = arith.constant 0 : index
    %c2_57 = arith.constant 2 : index
    %95 = vector.load %arg8[%c0_56, %c2_57] : memref<8x4xf32, #tpu.memory_space<vmem>>, vector<8x1xf32>
    tpu.vector_store %arg8[%c0_56, %c2_57], %75 {strides = array<i32>} : memref<8x4xf32, #tpu.memory_space<vmem>>, vector<8x1xf32>,
    %96 = vector.extract_strided_slice %4 {offsets = [0, 24], sizes = [8, 8], strides = [1, 1]} : vector<8x32xbf16> to vector<8x8xbf16>
    %97 = vector.extract_strided_slice %6 {offsets = [0, 24], sizes = [8, 8], strides = [1, 1]} : vector<8x32xbf16> to vector<8x8xbf16>
    %cst_58 = arith.constant dense<0.000000e+00> : vector<8x8xf32>
    %98 = tpu.matmul %96, %97, %cst_58 {dimension_numbers = #tpu.dot_dimension_numbers<[1], [1], [0], [0], [0, 0, 1, 0], [], []>} : vector<8x8xbf16>, vector<8x8xbf16>, vector<8x8xf32> -> vector<8x8xf32>
    %cst_59 = arith.constant 0.353553385 : f32
    %99 = vector.broadcast %cst_59 : f32 to vector<8x8xf32>
    %100 = arith.mulf %98, %99 : vector<8x8xf32>
    %c0_60 = arith.constant 0 : index
    %c3 = arith.constant 3 : index
    %101 = vector.load %arg8[%c0_60, %c3] : memref<8x4xf32, #tpu.memory_space<vmem>>, vector<8x1xf32>
    %cst_61 = arith.constant dense<0xFF800000> : vector<8xf32>
    %102 = vector.multi_reduction <maximumf>, %100, %cst_61 [1] : vector<8x8xf32> to vector<8xf32>
    %103 = vector.shape_cast %102 : vector<8xf32> to vector<8x1xf32>
    %104 = arith.maximumf %101, %103 : vector<8x1xf32>
    %105 = arith.subf %101, %104 : vector<8x1xf32>
    %106 = math.exp %105 : vector<8x1xf32>
    %107 = vector.broadcast %104 : vector<8x1xf32> to vector<8x8xf32>
    %108 = arith.subf %100, %107 : vector<8x8xf32>
    %109 = math.exp %108 : vector<8x8xf32>
    %c0_62 = arith.constant 0 : index
    %c3_63 = arith.constant 3 : index
    %110 = vector.load %arg9[%c0_62, %c3_63] : memref<8x4xf32, #tpu.memory_space<vmem>>, vector<8x1xf32>
    %111 = arith.mulf %106, %110 : vector<8x1xf32>
    %cst_64 = arith.constant dense<0.000000e+00> : vector<8xf32>
    %112 = vector.multi_reduction <add>, %109, %cst_64 [1] : vector<8x8xf32> to vector<8xf32>
    %113 = vector.shape_cast %112 : vector<8xf32> to vector<8x1xf32>
    %114 = arith.addf %111, %113 : vector<8x1xf32>
    %c0_65 = arith.constant 0 : index
    %c3_66 = arith.constant 3 : index
    %115 = vector.load %arg9[%c0_65, %c3_66] : memref<8x4xf32, #tpu.memory_space<vmem>>, vector<8x1xf32>
    tpu.vector_store %arg9[%c0_65, %c3_66], %114 {strides = array<i32>} : memref<8x4xf32, #tpu.memory_space<vmem>>, vector<8x1xf32>,
    %116 = arith.truncf %109 : vector<8x8xf32> to vector<8x8xbf16>
    %117 = vector.extract_strided_slice %8 {offsets = [0, 24], sizes = [8, 8], strides = [1, 1]} : vector<8x32xbf16> to vector<8x8xbf16>
    %cst_67 = arith.constant dense<0.000000e+00> : vector<8x8xf32>
    %118 = tpu.matmul %116, %117, %cst_67 {dimension_numbers = #tpu.dot_dimension_numbers<[1], [0], [0], [1], [0, 0, 1, 1], [], []>} : vector<8x8xbf16>, vector<8x8xbf16>, vector<8x8xf32> -> vector<8x8xf32>
    %c0_68 = arith.constant 0 : index
    %c24 = arith.constant 24 : index
    %119 = vector.load %arg10[%c0_68, %c24] : memref<8x32xf32, #tpu.memory_space<vmem>>, vector<8x8xf32>
    %120 = vector.broadcast %106 : vector<8x1xf32> to vector<8x8xf32>
    %121 = arith.mulf %120, %119 : vector<8x8xf32>
    %122 = arith.addf %121, %118 : vector<8x8xf32>
    %c0_69 = arith.constant 0 : index
    %c24_70 = arith.constant 24 : index
    %123 = vector.load %arg10[%c0_69, %c24_70] : memref<8x32xf32, #tpu.memory_space<vmem>>, vector<8x8xf32>
    tpu.vector_store %arg10[%c0_69, %c24_70], %122 {strides = array<i32>} : memref<8x32xf32, #tpu.memory_space<vmem>>, vector<8x8xf32>,
    %c0_71 = arith.constant 0 : index
    %c3_72 = arith.constant 3 : index
    %124 = vector.load %arg8[%c0_71, %c3_72] : memref<8x4xf32, #tpu.memory_space<vmem>>, vector<8x1xf32>
    tpu.vector_store %arg8[%c0_71, %c3_72], %104 {strides = array<i32>} : memref<8x4xf32, #tpu.memory_space<vmem>>, vector<8x1xf32>,
    %c0_i32_73 = arith.constant 0 : i32
    %125 = arith.cmpi eq, %arg3, %c0_i32_73 : i32
    %126 = arith.extui %125 : i1 to i32
    %c0_i32_74 = arith.constant 0 : i32
    %127 = arith.cmpi ne, %126, %c0_i32_74 : i32
    scf.if %127 {
      %c0_75 = arith.constant 0 : index
      %c0_76 = arith.constant 0 : index
      %128 = vector.load %arg9[%c0_75, %c0_76] : memref<8x4xf32, #tpu.memory_space<vmem>>, vector<8x1xf32>
      %129 = tpu.reciprocal %128 {approx = true} : vector<8x1xf32> -> vector<8x1xf32>
      %c0_77 = arith.constant 0 : index
      %c0_78 = arith.constant 0 : index
      %130 = vector.load %arg10[%c0_77, %c0_78] : memref<8x32xf32, #tpu.memory_space<vmem>>, vector<8x8xf32>
      %131 = vector.broadcast %129 : vector<8x1xf32> to vector<8x8xf32>
      %132 = arith.mulf %130, %131 : vector<8x8xf32>
      %133 = arith.truncf %132 : vector<8x8xf32> to vector<8x8xbf16>
      %c0_79 = arith.constant 0 : index
      %c0_80 = arith.constant 0 : index
      %c0_81 = arith.constant 0 : index
      %134 = vector.load %arg7[%c0_79, %c0_80, %c0_81] : memref<1x8x32xbf16, #tpu.memory_space<vmem>>, vector<1x8x8xbf16>
      %135 = vector.shape_cast %134 : vector<1x8x8xbf16> to vector<8x8xbf16>
      %136 = vector.shape_cast %133 : vector<8x8xbf16> to vector<1x8x8xbf16>
      tpu.vector_store %arg7[%c0_79, %c0_80, %c0_81], %136 {strides = array<i32>} : memref<1x8x32xbf16, #tpu.memory_space<vmem>>, vector<1x8x8xbf16>,
      %c0_82 = arith.constant 0 : index
      %c1_83 = arith.constant 1 : index
      %137 = vector.load %arg9[%c0_82, %c1_83] : memref<8x4xf32, #tpu.memory_space<vmem>>, vector<8x1xf32>
      %138 = tpu.reciprocal %137 {approx = true} : vector<8x1xf32> -> vector<8x1xf32>
      %c0_84 = arith.constant 0 : index
      %c8_85 = arith.constant 8 : index
      %139 = vector.load %arg10[%c0_84, %c8_85] : memref<8x32xf32, #tpu.memory_space<vmem>>, vector<8x8xf32>
      %140 = vector.broadcast %138 : vector<8x1xf32> to vector<8x8xf32>
      %141 = arith.mulf %139, %140 : vector<8x8xf32>
      %142 = arith.truncf %141 : vector<8x8xf32> to vector<8x8xbf16>
      %c0_86 = arith.constant 0 : index
      %c0_87 = arith.constant 0 : index
      %c8_88 = arith.constant 8 : index
      %143 = vector.load %arg7[%c0_86, %c0_87, %c8_88] : memref<1x8x32xbf16, #tpu.memory_space<vmem>>, vector<1x8x8xbf16>
      %144 = vector.shape_cast %143 : vector<1x8x8xbf16> to vector<8x8xbf16>
      %145 = vector.shape_cast %142 : vector<8x8xbf16> to vector<1x8x8xbf16>
      tpu.vector_store %arg7[%c0_86, %c0_87, %c8_88], %145 {strides = array<i32>} : memref<1x8x32xbf16, #tpu.memory_space<vmem>>, vector<1x8x8xbf16>,
      %c0_89 = arith.constant 0 : index
      %c2_90 = arith.constant 2 : index
      %146 = vector.load %arg9[%c0_89, %c2_90] : memref<8x4xf32, #tpu.memory_space<vmem>>, vector<8x1xf32>
      %147 = tpu.reciprocal %146 {approx = true} : vector<8x1xf32> -> vector<8x1xf32>
      %c0_91 = arith.constant 0 : index
      %c16_92 = arith.constant 16 : index
      %148 = vector.load %arg10[%c0_91, %c16_92] : memref<8x32xf32, #tpu.memory_space<vmem>>, vector<8x8xf32>
      %149 = vector.broadcast %147 : vector<8x1xf32> to vector<8x8xf32>
      %150 = arith.mulf %148, %149 : vector<8x8xf32>
      %151 = arith.truncf %150 : vector<8x8xf32> to vector<8x8xbf16>
      %c0_93 = arith.constant 0 : index
      %c0_94 = arith.constant 0 : index
      %c16_95 = arith.constant 16 : index
      %152 = vector.load %arg7[%c0_93, %c0_94, %c16_95] : memref<1x8x32xbf16, #tpu.memory_space<vmem>>, vector<1x8x8xbf16>
      %153 = vector.shape_cast %152 : vector<1x8x8xbf16> to vector<8x8xbf16>
      %154 = vector.shape_cast %151 : vector<8x8xbf16> to vector<1x8x8xbf16>
      tpu.vector_store %arg7[%c0_93, %c0_94, %c16_95], %154 {strides = array<i32>} : memref<1x8x32xbf16, #tpu.memory_space<vmem>>, vector<1x8x8xbf16>,
      %c0_96 = arith.constant 0 : index
      %c3_97 = arith.constant 3 : index
      %155 = vector.load %arg9[%c0_96, %c3_97] : memref<8x4xf32, #tpu.memory_space<vmem>>, vector<8x1xf32>
      %156 = tpu.reciprocal %155 {approx = true} : vector<8x1xf32> -> vector<8x1xf32>
      %c0_98 = arith.constant 0 : index
      %c24_99 = arith.constant 24 : index
      %157 = vector.load %arg10[%c0_98, %c24_99] : memref<8x32xf32, #tpu.memory_space<vmem>>, vector<8x8xf32>
      %158 = vector.broadcast %156 : vector<8x1xf32> to vector<8x8xf32>
      %159 = arith.mulf %157, %158 : vector<8x8xf32>
      %160 = arith.truncf %159 : vector<8x8xf32> to vector<8x8xbf16>
      %c0_100 = arith.constant 0 : index
      %c0_101 = arith.constant 0 : index
      %c24_102 = arith.constant 24 : index
      %161 = vector.load %arg7[%c0_100, %c0_101, %c24_102] : memref<1x8x32xbf16, #tpu.memory_space<vmem>>, vector<1x8x8xbf16>
      %162 = vector.shape_cast %161 : vector<1x8x8xbf16> to vector<8x8xbf16>
      %163 = vector.shape_cast %160 : vector<8x8xbf16> to vector<1x8x8xbf16>
      tpu.vector_store %arg7[%c0_100, %c0_101, %c24_102], %163 {strides = array<i32>} : memref<1x8x32xbf16, #tpu.memory_space<vmem>>, vector<1x8x8xbf16>,
    } else {
    }
    return
  }
  func.func @transform_0(%arg0: i32, %arg1: i32, %arg2: i32, %arg3: i32) -> (i32, i32, i32, i32) {
    %c0_i32 = arith.constant 0 : i32
    %c0_i32_0 = arith.constant 0 : i32
    return %c0_i32, %arg0, %arg2, %arg1 : i32, i32, i32, i32
  }
  func.func @transform_1(%arg0: i32, %arg1: i32, %arg2: i32, %arg3: i32) -> (i32, i32, i32, i32) {
    %c1_i32 = arith.constant 1 : i32
    %c0_i32 = arith.constant 0 : i32
    return %c1_i32, %arg0, %arg3, %arg1 : i32, i32, i32, i32
  }
  func.func @transform_2(%arg0: i32, %arg1: i32, %arg2: i32, %arg3: i32) -> (i32, i32, i32, i32) {
    %c2_i32 = arith.constant 2 : i32
    %c0_i32 = arith.constant 0 : i32
    return %c2_i32, %arg0, %arg3, %arg1 : i32, i32, i32, i32
  }
  func.func @transform_3(%arg0: i32, %arg1: i32, %arg2: i32, %arg3: i32) -> (i32, i32, i32) {
    %c0_i32 = arith.constant 0 : i32
    return %arg0, %arg2, %arg1 : i32, i32, i32
  }
}

module attributes {stable_mosaic.version = 11 : i64} {
  func.func @attn_out_ffn_adapter_kernel(%arg0: i32, %arg1: memref<8x32xbf16, #tpu.memory_space<vmem>>, %arg2: memref<8x32xf32, #tpu.memory_space<vmem>>, %arg3: memref<32x32xbf16, #tpu.memory_space<vmem>>, %arg4: memref<1x32xf32, #tpu.memory_space<vmem>>, %arg5: memref<1x32xf32, #tpu.memory_space<vmem>>, %arg6: memref<1x32xf32, #tpu.memory_space<vmem>>, %arg7: memref<32x128xbf16, #tpu.memory_space<vmem>>, %arg8: memref<1x128xf32, #tpu.memory_space<vmem>>, %arg9: memref<128x32xbf16, #tpu.memory_space<vmem>>, %arg10: memref<1x32xf32, #tpu.memory_space<vmem>>, %arg11: memref<32x128xbf16, #tpu.memory_space<vmem>>, %arg12: memref<1x128xf32, #tpu.memory_space<vmem>>, %arg13: memref<128x32xbf16, #tpu.memory_space<vmem>>, %arg14: memref<1x32xf32, #tpu.memory_space<vmem>>, %arg15: memref<8x32xf32, #tpu.memory_space<vmem>>) attributes {dimension_semantics = [#tpu.dimension_semantics<parallel>], iteration_bounds = array<i64: 2>, scalar_prefetch = 0 : i64, scratch_operands = 0 : i64, tpu.core_type = #tpu.core_type<tc>, window_params = [{transform_indices = @transform_0, window_bounds = array<i64: 8, 32>}, {transform_indices = @transform_1, window_bounds = array<i64: 8, 32>}, {pipeline_mode = #tpu.pipeline_mode<synchronous>, transform_indices = @transform_2, window_bounds = array<i64: 32, 32>}, {pipeline_mode = #tpu.pipeline_mode<synchronous>, transform_indices = @transform_3, window_bounds = array<i64: 1, 32>}, {pipeline_mode = #tpu.pipeline_mode<synchronous>, transform_indices = @transform_4, window_bounds = array<i64: 1, 32>}, {pipeline_mode = #tpu.pipeline_mode<synchronous>, transform_indices = @transform_5, window_bounds = array<i64: 1, 32>}, {pipeline_mode = #tpu.pipeline_mode<synchronous>, transform_indices = @transform_6, window_bounds = array<i64: 32, 128>}, {pipeline_mode = #tpu.pipeline_mode<synchronous>, transform_indices = @transform_7, window_bounds = array<i64: 1, 128>}, {pipeline_mode = #tpu.pipeline_mode<synchronous>, transform_indices = @transform_8, window_bounds = array<i64: 128, 32>}, {pipeline_mode = #tpu.pipeline_mode<synchronous>, transform_indices = @transform_9, window_bounds = array<i64: 1, 32>}, {pipeline_mode = #tpu.pipeline_mode<synchronous>, transform_indices = @transform_10, window_bounds = array<i64: 32, 128>}, {pipeline_mode = #tpu.pipeline_mode<synchronous>, transform_indices = @transform_11, window_bounds = array<i64: 1, 128>}, {pipeline_mode = #tpu.pipeline_mode<synchronous>, transform_indices = @transform_12, window_bounds = array<i64: 128, 32>}, {pipeline_mode = #tpu.pipeline_mode<synchronous>, transform_indices = @transform_13, window_bounds = array<i64: 1, 32>}, {transform_indices = @transform_14, window_bounds = array<i64: 8, 32>}]} {
    %c0 = arith.constant 0 : index
    %c0_0 = arith.constant 0 : index
    %0 = vector.load %arg2[%c0, %c0_0] : memref<8x32xf32, #tpu.memory_space<vmem>>, vector<8x32xf32>
    %c0_1 = arith.constant 0 : index
    %c0_2 = arith.constant 0 : index
    %1 = vector.load %arg1[%c0_1, %c0_2] : memref<8x32xbf16, #tpu.memory_space<vmem>>, vector<8x32xbf16>
    %c0_3 = arith.constant 0 : index
    %c0_4 = arith.constant 0 : index
    %2 = vector.load %arg3[%c0_3, %c0_4] : memref<32x32xbf16, #tpu.memory_space<vmem>>, vector<32x32xbf16>
    %cst = arith.constant dense<0.000000e+00> : vector<8x32xf32>
    %3 = tpu.matmul %1, %2, %cst {dimension_numbers = #tpu.dot_dimension_numbers<[1], [0], [0], [1], [0, 0, 1, 1], [], []>} : vector<8x32xbf16>, vector<32x32xbf16>, vector<8x32xf32> -> vector<8x32xf32>
    %c0_5 = arith.constant 0 : index
    %c0_6 = arith.constant 0 : index
    %4 = vector.load %arg4[%c0_5, %c0_6] : memref<1x32xf32, #tpu.memory_space<vmem>>, vector<1x32xf32>
    %5 = vector.broadcast %4 : vector<1x32xf32> to vector<8x32xf32>
    %6 = arith.addf %3, %5 : vector<8x32xf32>
    %7 = arith.addf %0, %6 : vector<8x32xf32>
    %c0_7 = arith.constant 0 : index
    %c0_8 = arith.constant 0 : index
    %8 = vector.load %arg5[%c0_7, %c0_8] : memref<1x32xf32, #tpu.memory_space<vmem>>, vector<1x32xf32>
    %c0_9 = arith.constant 0 : index
    %c0_10 = arith.constant 0 : index
    %9 = vector.load %arg6[%c0_9, %c0_10] : memref<1x32xf32, #tpu.memory_space<vmem>>, vector<1x32xf32>
    %cst_11 = arith.constant dense<0.000000e+00> : vector<8xf32>
    %10 = vector.multi_reduction <add>, %7, %cst_11 [1] : vector<8x32xf32> to vector<8xf32>
    %11 = vector.shape_cast %10 : vector<8xf32> to vector<8x1xf32>
    %cst_12 = arith.constant 3.200000e+01 : f32
    %12 = vector.broadcast %cst_12 : f32 to vector<8x1xf32>
    %13 = arith.divf %11, %12 : vector<8x1xf32>
    %14 = vector.broadcast %13 : vector<8x1xf32> to vector<8x32xf32>
    %15 = arith.subf %7, %14 : vector<8x32xf32>
    %16 = arith.mulf %15, %15 : vector<8x32xf32>
    %cst_13 = arith.constant dense<0.000000e+00> : vector<8xf32>
    %17 = vector.multi_reduction <add>, %16, %cst_13 [1] : vector<8x32xf32> to vector<8xf32>
    %18 = vector.shape_cast %17 : vector<8xf32> to vector<8x1xf32>
    %cst_14 = arith.constant 3.200000e+01 : f32
    %19 = vector.broadcast %cst_14 : f32 to vector<8x1xf32>
    %20 = arith.divf %18, %19 : vector<8x1xf32>
    %21 = vector.broadcast %13 : vector<8x1xf32> to vector<8x32xf32>
    %22 = arith.subf %7, %21 : vector<8x32xf32>
    %cst_15 = arith.constant 9.99999974E-6 : f32
    %23 = vector.broadcast %cst_15 : f32 to vector<8x1xf32>
    %24 = arith.addf %20, %23 : vector<8x1xf32>
    %25 = math.rsqrt %24 : vector<8x1xf32>
    %26 = vector.broadcast %25 : vector<8x1xf32> to vector<8x32xf32>
    %27 = arith.mulf %22, %26 : vector<8x32xf32>
    %28 = vector.broadcast %8 : vector<1x32xf32> to vector<8x32xf32>
    %29 = arith.mulf %27, %28 : vector<8x32xf32>
    %30 = vector.broadcast %9 : vector<1x32xf32> to vector<8x32xf32>
    %31 = arith.addf %29, %30 : vector<8x32xf32>
    %32 = arith.truncf %31 : vector<8x32xf32> to vector<8x32xbf16>
    %c0_16 = arith.constant 0 : index
    %c0_17 = arith.constant 0 : index
    %33 = vector.load %arg7[%c0_16, %c0_17] : memref<32x128xbf16, #tpu.memory_space<vmem>>, vector<32x128xbf16>
    %cst_18 = arith.constant dense<0.000000e+00> : vector<8x128xf32>
    %34 = tpu.matmul %32, %33, %cst_18 {dimension_numbers = #tpu.dot_dimension_numbers<[1], [0], [0], [1], [0, 0, 1, 1], [], []>} : vector<8x32xbf16>, vector<32x128xbf16>, vector<8x128xf32> -> vector<8x128xf32>
    %c0_19 = arith.constant 0 : index
    %c0_20 = arith.constant 0 : index
    %35 = vector.load %arg8[%c0_19, %c0_20] : memref<1x128xf32, #tpu.memory_space<vmem>>, vector<1x128xf32>
    %36 = vector.broadcast %35 : vector<1x128xf32> to vector<8x128xf32>
    %37 = arith.addf %34, %36 : vector<8x128xf32>
    %cst_21 = arith.constant 0.000000e+00 : f32
    %38 = vector.broadcast %cst_21 : f32 to vector<8x128xf32>
    %39 = arith.maximumf %37, %38 : vector<8x128xf32>
    %40 = arith.truncf %39 : vector<8x128xf32> to vector<8x128xbf16>
    %c0_22 = arith.constant 0 : index
    %c0_23 = arith.constant 0 : index
    %41 = vector.load %arg9[%c0_22, %c0_23] : memref<128x32xbf16, #tpu.memory_space<vmem>>, vector<128x32xbf16>
    %cst_24 = arith.constant dense<0.000000e+00> : vector<8x32xf32>
    %42 = tpu.matmul %40, %41, %cst_24 {dimension_numbers = #tpu.dot_dimension_numbers<[1], [0], [0], [1], [0, 0, 1, 1], [], []>} : vector<8x128xbf16>, vector<128x32xbf16>, vector<8x32xf32> -> vector<8x32xf32>
    %c0_25 = arith.constant 0 : index
    %c0_26 = arith.constant 0 : index
    %43 = vector.load %arg10[%c0_25, %c0_26] : memref<1x32xf32, #tpu.memory_space<vmem>>, vector<1x32xf32>
    %44 = vector.broadcast %43 : vector<1x32xf32> to vector<8x32xf32>
    %45 = arith.addf %42, %44 : vector<8x32xf32>
    %46 = arith.truncf %45 : vector<8x32xf32> to vector<8x32xbf16>
    %c0_27 = arith.constant 0 : index
    %c0_28 = arith.constant 0 : index
    %47 = vector.load %arg11[%c0_27, %c0_28] : memref<32x128xbf16, #tpu.memory_space<vmem>>, vector<32x128xbf16>
    %cst_29 = arith.constant dense<0.000000e+00> : vector<8x128xf32>
    %48 = tpu.matmul %46, %47, %cst_29 {dimension_numbers = #tpu.dot_dimension_numbers<[1], [0], [0], [1], [0, 0, 1, 1], [], []>} : vector<8x32xbf16>, vector<32x128xbf16>, vector<8x128xf32> -> vector<8x128xf32>
    %c0_30 = arith.constant 0 : index
    %c0_31 = arith.constant 0 : index
    %49 = vector.load %arg12[%c0_30, %c0_31] : memref<1x128xf32, #tpu.memory_space<vmem>>, vector<1x128xf32>
    %50 = vector.broadcast %49 : vector<1x128xf32> to vector<8x128xf32>
    %51 = arith.addf %48, %50 : vector<8x128xf32>
    %cst_32 = arith.constant 0.000000e+00 : f32
    %52 = vector.broadcast %cst_32 : f32 to vector<8x128xf32>
    %53 = arith.maximumf %51, %52 : vector<8x128xf32>
    %54 = arith.truncf %53 : vector<8x128xf32> to vector<8x128xbf16>
    %c0_33 = arith.constant 0 : index
    %c0_34 = arith.constant 0 : index
    %55 = vector.load %arg13[%c0_33, %c0_34] : memref<128x32xbf16, #tpu.memory_space<vmem>>, vector<128x32xbf16>
    %cst_35 = arith.constant dense<0.000000e+00> : vector<8x32xf32>
    %56 = tpu.matmul %54, %55, %cst_35 {dimension_numbers = #tpu.dot_dimension_numbers<[1], [0], [0], [1], [0, 0, 1, 1], [], []>} : vector<8x128xbf16>, vector<128x32xbf16>, vector<8x32xf32> -> vector<8x32xf32>
    %c0_36 = arith.constant 0 : index
    %c0_37 = arith.constant 0 : index
    %57 = vector.load %arg14[%c0_36, %c0_37] : memref<1x32xf32, #tpu.memory_space<vmem>>, vector<1x32xf32>
    %58 = vector.broadcast %57 : vector<1x32xf32> to vector<8x32xf32>
    %59 = arith.addf %56, %58 : vector<8x32xf32>
    %60 = arith.addf %7, %45 : vector<8x32xf32>
    %61 = arith.addf %60, %59 : vector<8x32xf32>
    %c0_38 = arith.constant 0 : index
    %c0_39 = arith.constant 0 : index
    %62 = vector.load %arg15[%c0_38, %c0_39] : memref<8x32xf32, #tpu.memory_space<vmem>>, vector<8x32xf32>
    tpu.vector_store %arg15[%c0_38, %c0_39], %61 {strides = array<i32>} : memref<8x32xf32, #tpu.memory_space<vmem>>, vector<8x32xf32>,
    return
  }
  func.func @transform_0(%arg0: i32) -> (i32, i32) {
    %c0_i32 = arith.constant 0 : i32
    %c0_i32_0 = arith.constant 0 : i32
    return %arg0, %c0_i32 : i32, i32
  }
  func.func @transform_1(%arg0: i32) -> (i32, i32) {
    %c0_i32 = arith.constant 0 : i32
    %c0_i32_0 = arith.constant 0 : i32
    return %arg0, %c0_i32 : i32, i32
  }
  func.func @transform_2(%arg0: i32) -> (i32, i32) {
    %c0_i32 = arith.constant 0 : i32
    %c0_i32_0 = arith.constant 0 : i32
    %c0_i32_1 = arith.constant 0 : i32
    return %c0_i32, %c0_i32_0 : i32, i32
  }
  func.func @transform_3(%arg0: i32) -> (i32, i32) {
    %c0_i32 = arith.constant 0 : i32
    %c0_i32_0 = arith.constant 0 : i32
    %c0_i32_1 = arith.constant 0 : i32
    return %c0_i32, %c0_i32_0 : i32, i32
  }
  func.func @transform_4(%arg0: i32) -> (i32, i32) {
    %c0_i32 = arith.constant 0 : i32
    %c0_i32_0 = arith.constant 0 : i32
    %c0_i32_1 = arith.constant 0 : i32
    return %c0_i32, %c0_i32_0 : i32, i32
  }
  func.func @transform_5(%arg0: i32) -> (i32, i32) {
    %c0_i32 = arith.constant 0 : i32
    %c0_i32_0 = arith.constant 0 : i32
    %c0_i32_1 = arith.constant 0 : i32
    return %c0_i32, %c0_i32_0 : i32, i32
  }
  func.func @transform_6(%arg0: i32) -> (i32, i32) {
    %c0_i32 = arith.constant 0 : i32
    %c0_i32_0 = arith.constant 0 : i32
    %c0_i32_1 = arith.constant 0 : i32
    return %c0_i32, %c0_i32_0 : i32, i32
  }
  func.func @transform_7(%arg0: i32) -> (i32, i32) {
    %c0_i32 = arith.constant 0 : i32
    %c0_i32_0 = arith.constant 0 : i32
    %c0_i32_1 = arith.constant 0 : i32
    return %c0_i32, %c0_i32_0 : i32, i32
  }
  func.func @transform_8(%arg0: i32) -> (i32, i32) {
    %c0_i32 = arith.constant 0 : i32
    %c0_i32_0 = arith.constant 0 : i32
    %c0_i32_1 = arith.constant 0 : i32
    return %c0_i32, %c0_i32_0 : i32, i32
  }
  func.func @transform_9(%arg0: i32) -> (i32, i32) {
    %c0_i32 = arith.constant 0 : i32
    %c0_i32_0 = arith.constant 0 : i32
    %c0_i32_1 = arith.constant 0 : i32
    return %c0_i32, %c0_i32_0 : i32, i32
  }
  func.func @transform_10(%arg0: i32) -> (i32, i32) {
    %c0_i32 = arith.constant 0 : i32
    %c0_i32_0 = arith.constant 0 : i32
    %c0_i32_1 = arith.constant 0 : i32
    return %c0_i32, %c0_i32_0 : i32, i32
  }
  func.func @transform_11(%arg0: i32) -> (i32, i32) {
    %c0_i32 = arith.constant 0 : i32
    %c0_i32_0 = arith.constant 0 : i32
    %c0_i32_1 = arith.constant 0 : i32
    return %c0_i32, %c0_i32_0 : i32, i32
  }
  func.func @transform_12(%arg0: i32) -> (i32, i32) {
    %c0_i32 = arith.constant 0 : i32
    %c0_i32_0 = arith.constant 0 : i32
    %c0_i32_1 = arith.constant 0 : i32
    return %c0_i32, %c0_i32_0 : i32, i32
  }
  func.func @transform_13(%arg0: i32) -> (i32, i32) {
    %c0_i32 = arith.constant 0 : i32
    %c0_i32_0 = arith.constant 0 : i32
    %c0_i32_1 = arith.constant 0 : i32
    return %c0_i32, %c0_i32_0 : i32, i32
  }
  func.func @transform_14(%arg0: i32) -> (i32, i32) {
    %c0_i32 = arith.constant 0 : i32
    %c0_i32_0 = arith.constant 0 : i32
    return %arg0, %c0_i32 : i32, i32
  }
}

</mosaic_0001>

<llo_original>
// kernel: encoder_layer_forward.3
$region0: #{encoder_layer_forward.3}
  #allocation0 [shape = 'u32[]', space=smem, size = 0x4, offset = 0x4, fixed_abs, tag = 'smem constant byte address 0x4 - core index']
  #allocation1 [shape = 'u32[144,128]{1,0:T(1,128)}', space=vmem, size = 0x12000, scoped, tag = 'internal scratch']
  %s0 = inlined_call_operand.vmem [shape: f32[16,32], index: 0, kind: input, shape index: {}]
  %s1 = inlined_call_operand.vmem [shape: f32[1,32], index: 1, kind: input, shape index: {}]
  %s2 = inlined_call_operand.vmem [shape: f32[1,32], index: 2, kind: input, shape index: {}]
  %s3 = inlined_call_operand.vmem [shape: bf16[32,96], index: 3, kind: input, shape index: {}]
  %s4 = inlined_call_operand.vmem [shape: f32[1,96], index: 4, kind: input, shape index: {}]
  %s5 = inlined_call_operand.vmem [shape: bf16[3,16,32], index: 5, kind: output, shape index: {}]
  %s6 = sld [smem:[#allocation0]]
  $region90: #{encoder_layer_forward.3} parent=0
    _
  %s8 = ssub.s32 1, %s6
  %s9 = scalar_select 0, %s8, %s6
  $region1: #{encoder_layer_forward.3} parent=0
    #allocation2 [shape = 'u8[12288]{0}', space=vmem, size = 0x3000, scoped, tag = 'output window, operand 0']
    loop: start=0, step=1, limit=4
    $region2: #{encoder_layer_forward.3} parent=1 // loop_pre_header
      _
    $region3: #{encoder_layer_forward.3} parent=1 // loop_header
      %s11 = sphi 0, %s15
      %p12 = scmp.ge.s32.totalorder %s11, 4
      %s21 = sphi 0, %s23
      %s24 = sphi 0, %s21
      %s25 = sphi 0, %s24
      %s41 = sphi 0, %s25
      %s45 = sphi 0, %s45
      %s47 = sphi 0, %s45
      %s48 = sphi 0, %s47
      %s62 = sphi 0, %s48
      %s66 = sphi 0, %s66
      %s68 = sphi 0, %s66
      %s69 = sphi 0, %s68
      %s83 = sphi 0, %s69
      %s87 = sphi 0, %s87
      %s89 = sphi 0, %s87
      %s90 = sphi 0, %s89
      %s104 = sphi 0, %s90
      %s108 = sphi 0, %s108
      %s110 = sphi 0, %s108
      %s111 = sphi 0, %s110
      %s125 = sphi 0, %s111
      %s131 = sphi 0, %s133
      %s134 = sphi 0, %s131
      %s135 = sphi 0, %s134
      %s151 = sphi 0, %s135
    $region4: #{encoder_layer_forward.3} parent=1 // loop_header_branch
      %14 = sbr.rel (%p12) target = $region8
    $region5: #{encoder_layer_forward.3} parent=1 // loop_body
      %s16 = ssub.s32 %s11, 1
      %s17 = ssub.s32 %s11, 2
      %s18 = sadd.s32 %s11, 1
      %s19 = ssub.s32 %s11, %s18
      %p20 = scmp.eq.s32.totalorder %s19, 0
      %s22 = sadd.s32 %s21, 1
      %s23 = scalar_select %p20, %s21, %s22
      %p26 = pneg %p20
      %p27 = scmp.eq.s32.totalorder %s11, 1
      %p28 = por %p26, %p27
      %p29 = scmp.ne.s32.totalorder %s21, %s24
      %p30 = scmp.eq.s32.totalorder %s11, 0
      %p31 = por %p29, %p30
      %p32 = scmp.ne.s32.totalorder %s21, %s24
      %p33 = scmp.eq.s32.totalorder %s16, 1
      %p34 = por %p32, %p33
      %p35 = scmp.ne.s32.totalorder %s24, %s25
      %p36 = scmp.eq.s32.totalorder %s16, 0
      %p37 = por %p35, %p36
      %p38 = scmp.ne.s32.totalorder %s24, %s25
      %p39 = scmp.eq.s32.totalorder %s17, 1
      %p40 = por %p38, %p39
      %p42 = scmp.ne.s32.totalorder %s25, %s41
      %p43 = scmp.eq.s32.totalorder %s17, 0
      %p44 = por %p42, %p43
      %s46 = sadd.s32 %s45, 1
      %p49 = scmp.eq.s32.totalorder %s11, 1
      %p50 = scmp.ne.s32.totalorder %s45, %s47
      %p51 = scmp.eq.s32.totalorder %s11, 0
      %p52 = por %p50, %p51
      %p53 = scmp.ne.s32.totalorder %s45, %s47
      %p54 = scmp.eq.s32.totalorder %s16, 1
      %p55 = por %p53, %p54
      %p56 = scmp.ne.s32.totalorder %s47, %s48
      %p57 = scmp.eq.s32.totalorder %s16, 0
      %p58 = por %p56, %p57
      %p59 = scmp.ne.s32.totalorder %s47, %s48
      %p60 = scmp.eq.s32.totalorder %s17, 1
      %p61 = por %p59, %p60
      %p63 = scmp.ne.s32.totalorder %s48, %s62
      %p64 = scmp.eq.s32.totalorder %s17, 0
      %p65 = por %p63, %p64
      %s67 = sadd.s32 %s66, 1
      %p70 = scmp.eq.s32.totalorder %s11, 1
      %p71 = scmp.ne.s32.totalorder %s66, %s68
      %p72 = scmp.eq.s32.totalorder %s11, 0
      %p73 = por %p71, %p72
      %p74 = scmp.ne.s32.totalorder %s66, %s68
      %p75 = scmp.eq.s32.totalorder %s16, 1
      %p76 = por %p74, %p75
      %p77 = scmp.ne.s32.totalorder %s68, %s69
      %p78 = scmp.eq.s32.totalorder %s16, 0
      %p79 = por %p77, %p78
      %p80 = scmp.ne.s32.totalorder %s68, %s69
      %p81 = scmp.eq.s32.totalorder %s17, 1
      %p82 = por %p80, %p81
      %p84 = scmp.ne.s32.totalorder %s69, %s83
      %p85 = scmp.eq.s32.totalorder %s17, 0
      %p86 = por %p84, %p85
      %s88 = sadd.s32 %s87, 1
      %p91 = scmp.eq.s32.totalorder %s11, 1
      %p92 = scmp.ne.s32.totalorder %s87, %s89
      %p93 = scmp.eq.s32.totalorder %s11, 0
      %p94 = por %p92, %p93
      %p95 = scmp.ne.s32.totalorder %s87, %s89
      %p96 = scmp.eq.s32.totalorder %s16, 1
      %p97 = por %p95, %p96
      %p98 = scmp.ne.s32.totalorder %s89, %s90
      %p99 = scmp.eq.s32.totalorder %s16, 0
      %p100 = por %p98, %p99
      %p101 = scmp.ne.s32.totalorder %s89, %s90
      %p102 = scmp.eq.s32.totalorder %s17, 1
      %p103 = por %p101, %p102
      %p105 = scmp.ne.s32.totalorder %s90, %s104
      %p106 = scmp.eq.s32.totalorder %s17, 0
      %p107 = por %p105, %p106
      %s109 = sadd.s32 %s108, 1
      %p112 = scmp.eq.s32.totalorder %s11, 1
      %p113 = scmp.ne.s32.totalorder %s108, %s110
      %p114 = scmp.eq.s32.totalorder %s11, 0
      %p115 = por %p113, %p114
      %p116 = scmp.ne.s32.totalorder %s108, %s110
      %p117 = scmp.eq.s32.totalorder %s16, 1
      %p118 = por %p116, %p117
      %p119 = scmp.ne.s32.totalorder %s110, %s111
      %p120 = scmp.eq.s32.totalorder %s16, 0
      %p121 = por %p119, %p120
      %p122 = scmp.ne.s32.totalorder %s110, %s111
      %p123 = scmp.eq.s32.totalorder %s17, 1
      %p124 = por %p122, %p123
      %p126 = scmp.ne.s32.totalorder %s111, %s125
      %p127 = scmp.eq.s32.totalorder %s17, 0
      %p128 = por %p126, %p127
      %s129 = ssub.s32 %s11, %s18
      %p130 = scmp.eq.s32.totalorder %s129, 0
      %s132 = sadd.s32 %s131, 1
      %s133 = scalar_select %p130, %s131, %s132
      %p136 = pneg %p130
      %p137 = scmp.eq.s32.totalorder %s11, 1
      %p138 = por %p136, %p137
      %p139 = scmp.ne.s32.totalorder %s131, %s134
      %p140 = scmp.eq.s32.totalorder %s11, 0
      %p141 = por %p139, %p140
      %p142 = scmp.ne.s32.totalorder %s131, %s134
      %p143 = scmp.eq.s32.totalorder %s16, 1
      %p144 = por %p142, %p143
      %p145 = scmp.ne.s32.totalorder %s134, %s135
      %p146 = scmp.eq.s32.totalorder %s16, 0
      %p147 = por %p145, %p146
      %p148 = scmp.ne.s32.totalorder %s134, %s135
      %p149 = scmp.eq.s32.totalorder %s17, 1
      %p150 = por %p148, %p149
      %p152 = scmp.ne.s32.totalorder %s135, %s151
      %p153 = scmp.eq.s32.totalorder %s17, 0
      %p154 = por %p152, %p153
      %p155 = scmp.le.s32.totalorder 1, %s11
      %p156 = scmp.lt.s32.totalorder %s11, 3
      %p157 = pnand %p155, %p156
      %p158 = pneg %p157
      // Predicated region
      $region9: #{encoder_layer_forward.3} parent=5 // pred_check
        _
      $region10: #{encoder_layer_forward.3} parent=5 // pred_check_branch
        %160 = sbr.rel (%p157) target = $region12
      $region11: #{encoder_layer_forward.3} parent=5 // pred_region
        %s161 = ssub.s32 %s11, 1
        // Predicated region
        $region13: #{encoder_layer_forward.3} parent=11 // pred_check
          %p162 = pneg %p58
        $region14: #{encoder_layer_forward.3} parent=11 // pred_check_branch
          %164 = sbr.rel (%p162) target = $region16
        $region15: #{encoder_layer_forward.3} parent=11 // pred_region
          _
        $region16: #{encoder_layer_forward.3} parent=11 // pred_fallthru
          _
        // Predicated region
        $region17: #{encoder_layer_forward.3} parent=11 // pred_check
          %p165 = pneg %p79
        $region18: #{encoder_layer_forward.3} parent=11 // pred_check_branch
          %167 = sbr.rel (%p165) target = $region20
        $region19: #{encoder_layer_forward.3} parent=11 // pred_region
          _
        $region20: #{encoder_layer_forward.3} parent=11 // pred_fallthru
          _
        // Predicated region
        $region21: #{encoder_layer_forward.3} parent=11 // pred_check
          %p168 = pneg %p100
        $region22: #{encoder_layer_forward.3} parent=11 // pred_check_branch
          %170 = sbr.rel (%p168) target = $region24
        $region23: #{encoder_layer_forward.3} parent=11 // pred_region
          _
        $region24: #{encoder_layer_forward.3} parent=11 // pred_fallthru
          _
        // Predicated region
        $region25: #{encoder_layer_forward.3} parent=11 // pred_check
          %p171 = pneg %p121
        $region26: #{encoder_layer_forward.3} parent=11 // pred_check_branch
          %173 = sbr.rel (%p171) target = $region28
        $region27: #{encoder_layer_forward.3} parent=11 // pred_region
          _
        $region28: #{encoder_layer_forward.3} parent=11 // pred_fallthru
          _
      $region12: #{encoder_layer_forward.3} parent=5 // pred_fallthru
        _
      %p174 = scmp.lt.s32.totalorder %s11, 2
      // Predicated region
      $region29: #{encoder_layer_forward.3} parent=5 // pred_check
        %p175 = pneg %p174
      $region30: #{encoder_layer_forward.3} parent=5 // pred_check_branch
        %177 = sbr.rel (%p175) target = $region32
      $region31: #{encoder_layer_forward.3} parent=5 // pred_region
        // Predicated region
        $region33: #{encoder_layer_forward.3} parent=31 // pred_check
          %p178 = pneg %p31
        $region34: #{encoder_layer_forward.3} parent=31 // pred_check_branch
          %180 = sbr.rel (%p178) target = $region36
        $region35: #{encoder_layer_forward.3} parent=31 // pred_region
          %p181 = scmp.lt.s32.totalorder %s11, 1
          %s182 = scalar_select %p181, %s11, 1
          %s183 = smul.addr %s182, 8
          %s184 = scalar_lea.vmem %s0, %s183
        $region36: #{encoder_layer_forward.3} parent=31 // pred_fallthru
          _
      $region32: #{encoder_layer_forward.3} parent=5 // pred_fallthru
        _
      %p185 = scmp.le.s32.totalorder 1, %s11
      %p186 = scmp.lt.s32.totalorder %s11, 3
      %p187 = pnand %p185, %p186
      %p188 = pneg %p187
      // Predicated region
      $region37: #{encoder_layer_forward.3} parent=5 // pred_check
        _
      $region38: #{encoder_layer_forward.3} parent=5 // pred_check_branch
        %190 = sbr.rel (%p187) target = $region40
      $region39: #{encoder_layer_forward.3} parent=5 // pred_region
        %s191 = ssub.s32 %s11, 1
        %p192 = scmp.lt.s32.totalorder %s16, 1
        %s193 = scalar_select %p192, %s16, 1
        %s194 = smul.addr %s193, 8
        %s195 = scalar_lea.vmem %s0, %s194
        %p196 = pneg %p37
        %p197 = pneg %p34
        %p198 = pneg %p58
        %p199 = pneg %p55
        %p200 = pneg %p79
        %p201 = pneg %p76
        %p202 = pneg %p100
        %p203 = pneg %p97
        %p204 = pneg %p121
        %p205 = pneg %p118
        %p206 = pneg %p147
        %p207 = pneg %p144
        %s208 = sand.u32 %s134, 1
        %s209 = sand.u32 %s134, 1
        %s210 = smul.addr %s209, 12
        %s211 = scalar_lea.vmem [#allocation2], %s210
        %p212 = scmp.lt.s32.totalorder %s16, 1
        %s213 = scalar_select %p212, %s16, 1
        %s214 = smul.addr %s213, 8
        %s215 = scalar_lea.vmem %s0, %s214
        %v217 = vld [vmem:[%s215] sm:$0xff]
        %v218 = vld [vmem:[%s1] sm:$0x1]
        %v219 = vld [vmem:[%s2] sm:$0x1]
        %vm220 = vcmask 261120
        %v221 = vsel %vm220, %v217, 0.0
        %222 = vadd.xlane.f32.xlu0 %v221
        %v223 = vpop.xlane.xlu0 %222
        %v224 = vrcp.pop 32.0
        %v225 = vmul.f32 %v223, %v224
        %v226 = vsub.f32 %v217, %v225
        %v227 = vmul.f32 %v226, %v226
        %v228 = vsel %vm220, %v227, 0.0
        %229 = vadd.xlane.f32.xlu0 %v228
        %v230 = vpop.xlane.xlu0 %229
        %v231 = vmul.f32 %v230, %v224
        %v232 = vadd.f32 %v231, 1e-05
        %v233 = vrsqrt.pop %v232
        %v234 = vmul.f32 %v226, %v233
        %v236 = vlaneseq
        %v237 = vshrl.u32 %v236, 7
        %v238 = vsub.s32 0, %v237
        %v239 = vrot.slane %v218, %v238
        %v241 = vmul.f32 %v234, %v239
        %v243 = vlaneseq
        %v244 = vshrl.u32 %v243, 7
        %v245 = vsub.s32 0, %v244
        %v246 = vrot.slane %v219, %v245
        %v248 = vadd.f32 %v241, %v246
        %v249 = vpack.c.bf16 %v248, %v248
        %v250 = vld [vmem:[%s3] sm:$0xf]
        %v251 = vld [vmem:[%s3 + $0x4] sm:$0xf]
        %v252 = vld [vmem:[%s3 + $0x8] sm:$0xf]
        %v253 = vld [vmem:[%s3 + $0xc] sm:$0xf]
        %v254 = vld [vmem:[%s4] sm:$0x1]
        %v256 = vlaneseq
        %v257 = vshrl.u32 %v256, 7
        %v258 = vsub.s32 0, %v257
        %v259 = vrot.slane %v254, %v258
        %v265 = vunpack.c.l.b16 %v250
        %v266 = vunpack.c.l.b16 %v251
        %v267 = vunpack.c.l.b16 %v252
        %v268 = vunpack.c.l.b16 %v253
        %v269 = vpack.c.b16 %v266, %v265
        %v270 = vpack.c.b16 %v268, %v267
        %v274 = vsel %vm220, %v249, 0
        %276 = vmatprep.subr.bf16.mxu0 0
        %277 = vmatpush1.bf16.msra.mxu0 %v269
        %278 = vmatprep.subr.bf16.mxu0 0
        %279 = vmatpush1.bf16.msra.mxu0 %v270
        %280 = vmatprep.subr.bf16.mxu0 0
        %281 = vmatpush1.bf16.msra.mxu0 0
        %282 = vmatprep.subr.bf16.mxu0 0
        %283 = vmatpush1.bf16.msra.mxu0 0
        %284 = vmatprep.subr.bf16.mxu0 0
        %285 = vmatpush1.bf16.msra.mxu0 0
        %286 = vmatprep.subr.bf16.mxu0 0
        %287 = vmatpush1.bf16.msra.mxu0 0
        %288 = vmatprep.subr.bf16.mxu0 0
        %289 = vmatpush1.bf16.msra.mxu0 0
        %290 = vmatprep.subr.bf16.mxu0 0
        %291 = vmatpush1.bf16.msra.mxu0 0
        %292 = vmatprep.subr.bf16.mxu0 0
        %293 = vmatpush1.bf16.msra.mxu0 0
        %294 = vmatprep.subr.bf16.mxu0 0
        %295 = vmatpush1.bf16.msra.mxu0 0
        %296 = vmatprep.subr.bf16.mxu0 0
        %297 = vmatpush1.bf16.msra.mxu0 0
        %298 = vmatprep.subr.bf16.mxu0 0
        %299 = vmatpush1.bf16.msra.mxu0 0
        %300 = vmatprep.subr.bf16.mxu0 0
        %301 = vmatpush1.bf16.msra.mxu0 0
        %302 = vmatprep.subr.bf16.mxu0 0
        %303 = vmatpush1.bf16.msra.mxu0 0
        %304 = vmatprep.subr.bf16.mxu0 0
        %305 = vmatpush1.bf16.msra.mxu0 0
        %306 = vmatprep.subr.bf16.mxu0 0
        %307 = vmatpush1.bf16.msra.mxu0 0
        %308 = vmatprep.mubr.bf16.mxu0 0
        %309 = vmatmul.mubr.bf16.gmra.mrb[0].mxu0 %v274
        %v310 = vpop.f32.mrb[0].mxu0
        %v311 = vadd.f32 %v259, %v310
        %v312 = vpop.f32.mrb[0].mxu0
        %v313 = vpop.f32.mrb[0].mxu0
        %v314 = vpop.f32.mrb[0].mxu0
        %315 = vdwg.mxu0
        %v316 = vpack.c.bf16 %v311, %v311
        %vm317 = vcmask 257024
        %318 = vst.msk [vmem:[%s211] sm:$0xf] %vm317, %v316
        %v320 = vunpack.c.l.b16 %v316
        %v321 = vpack.c.b16 %v320, %v320
        %322 = vrot.lane.b32.xlu0 %v321, 96
        %v323 = vpop.permute.xlu0 %322
        %s325 = scalar_lea.vmem %s211, 4 [#allocation2]
        %326 = vst.msk [vmem:[%s325] sm:$0xf] %vm317, %v323
        %327 = vrot.lane.b32.xlu0 %v321, 64
        %v328 = vpop.permute.xlu0 %327
        %s330 = scalar_lea.vmem %s211, 8 [#allocation2]
        %331 = vst.msk [vmem:[%s330] sm:$0xf] %vm317, %v328
        %s332 = sand.u32 %s134, 1
        %s333 = sand.u32 %s134, 1
        %s334 = smul.addr %s333, 12
        %s335 = scalar_lea.vmem [#allocation2], %s334
        // Predicated region
        $region41: #{encoder_layer_forward.3} parent=39 // pred_check
          %p336 = pneg %p144
        $region42: #{encoder_layer_forward.3} parent=39 // pred_check_branch
          %338 = sbr.rel (%p336) target = $region44
        $region43: #{encoder_layer_forward.3} parent=39 // pred_region
          %s339 = smul.addr %s16, 4
          %s340 = scalar_lea.vmem %s5, %s339
          // Predicated region
          $region45: #{encoder_layer_forward.3} parent=43 // pred_check
            _
          $region46: #{encoder_layer_forward.3} parent=43 // pred_check_branch
            %342 = sbr.rel (0) target = $region48
          $region47: #{encoder_layer_forward.3} parent=43 // pred_region
            // Predicated region
            $region49: #{encoder_layer_forward.3} parent=47 // pred_check
              _
            $region50: #{encoder_layer_forward.3} parent=47 // pred_check_branch
              %344 = sbr.rel target = $region52
            $region51: #{encoder_layer_forward.3} parent=47 // pred_region
              // Predicated region
              $region64: #{encoder_layer_forward.3} parent=51 // pred_check
                _
              $region65: #{encoder_layer_forward.3} parent=51 // pred_check_branch
                %363 = sbr.rel (0) target = $region67
              $region66: #{encoder_layer_forward.3} parent=51 // pred_region
                loop: start=0, step=1, limit=1
                $region68: #{encoder_layer_forward.3} parent=66 // loop_pre_header
                  _
                $region69: #{encoder_layer_forward.3} parent=66 // loop_header
                  %s365 = sphi 0, %s369
                  %p366 = scmp.ge.s32.totalorder %s365, 1
                  %s370 = sphi %s335, %s335
                  %s371 = sphi %s340, %s340
                $region70: #{encoder_layer_forward.3} parent=66 // loop_header_branch
                  %368 = sbr.rel (%p366) target = $region74
                $region71: #{encoder_layer_forward.3} parent=66 // loop_body
                  _
                $region72: #{encoder_layer_forward.3} parent=66 // loop_footer
                  %s369 = sadd.s32 1, %s365
                $region73: #{encoder_layer_forward.3} parent=66 // loop_footer_branch
                  %364 = sbr.rel target = $region69
                $region74: #{encoder_layer_forward.3} parent=66 // loop_exit
                  _
                loop: start=0, step=1, limit=1
                $region75: #{encoder_layer_forward.3} parent=66 // loop_pre_header
                  _
                $region76: #{encoder_layer_forward.3} parent=66 // loop_header
                  %s374 = sphi 0, %s378
                  %p375 = scmp.ge.s32.totalorder %s374, 1
                  %s379 = sphi %s335, %s335
                  %s380 = sphi %s340, %s340
                $region77: #{encoder_layer_forward.3} parent=66 // loop_header_branch
                  %377 = sbr.rel (%p375) target = $region81
                $region78: #{encoder_layer_forward.3} parent=66 // loop_body
                  %v381 = vld [vmem:[%s379] sm:$0xf]
                  %382 = vst [vmem:[%s380] sm:$0xf] %v381
                  %v383 = vld [vmem:[%s379 + $0x4] sm:$0xf]
                  %384 = vst [vmem:[%s380 + $0x8] sm:$0xf] %v383
                  %v385 = vld [vmem:[%s379 + $0x8] sm:$0xf]
                  %386 = vst [vmem:[%s380 + $0x10] sm:$0xf] %v385
                $region79: #{encoder_layer_forward.3} parent=66 // loop_footer
                  %s378 = sadd.s32 1, %s374
                $region80: #{encoder_layer_forward.3} parent=66 // loop_footer_branch
                  %373 = sbr.rel target = $region76
                $region81: #{encoder_layer_forward.3} parent=66 // loop_exit
                  _
              $region67: #{encoder_layer_forward.3} parent=51 // pred_fallthru
                _
            $region52: #{encoder_layer_forward.3} parent=47 // pred_fallthru
              _
            // Predicated region
            $region53: #{encoder_layer_forward.3} parent=47 // pred_check
              _
            $region54: #{encoder_layer_forward.3} parent=47 // pred_check_branch
              %346 = sbr.rel (0) target = $region56
            $region55: #{encoder_layer_forward.3} parent=47 // pred_region
              loop: start=0, step=1, limit=1
              $region57: #{encoder_layer_forward.3} parent=55 // loop_pre_header
                _
              $region58: #{encoder_layer_forward.3} parent=55 // loop_header
                %s349 = sphi 0, %s353
                %p350 = scmp.ge.s32.totalorder %s349, 1
                %s354 = sphi %s335, %s335
                %s355 = sphi %s340, %s340
              $region59: #{encoder_layer_forward.3} parent=55 // loop_header_branch
                %352 = sbr.rel (%p350) target = $region63
              $region60: #{encoder_layer_forward.3} parent=55 // loop_body
                %v356 = vld [vmem:[%s354] sm:$0xf]
                %357 = vst [vmem:[%s355] sm:$0xf] %v356
                %v358 = vld [vmem:[%s354 + $0x4] sm:$0xf]
                %359 = vst [vmem:[%s355 + $0x8] sm:$0xf] %v358
                %v360 = vld [vmem:[%s354 + $0x8] sm:$0xf]
                %361 = vst [vmem:[%s355 + $0x10] sm:$0xf] %v360
              $region61: #{encoder_layer_forward.3} parent=55 // loop_footer
                %s353 = sadd.s32 1, %s349
              $region62: #{encoder_layer_forward.3} parent=55 // loop_footer_branch
                %348 = sbr.rel target = $region58
              $region63: #{encoder_layer_forward.3} parent=55 // loop_exit
                _
            $region56: #{encoder_layer_forward.3} parent=47 // pred_fallthru
              _
          $region48: #{encoder_layer_forward.3} parent=43 // pred_fallthru
            _
          %387 = vnop
        $region44: #{encoder_layer_forward.3} parent=39 // pred_fallthru
          _
      $region40: #{encoder_layer_forward.3} parent=5 // pred_fallthru
        _
      %p388 = scmp.le.s32.totalorder 2, %s11
      // Predicated region
      $region82: #{encoder_layer_forward.3} parent=5 // pred_check
        %p389 = pneg %p388
      $region83: #{encoder_layer_forward.3} parent=5 // pred_check_branch
        %391 = sbr.rel (%p389) target = $region85
      $region84: #{encoder_layer_forward.3} parent=5 // pred_region
        %s392 = ssub.s32 %s11, 2
        // Predicated region
        $region86: #{encoder_layer_forward.3} parent=84 // pred_check
          %p393 = pneg %p150
        $region87: #{encoder_layer_forward.3} parent=84 // pred_check_branch
          %395 = sbr.rel (%p393) target = $region89
        $region88: #{encoder_layer_forward.3} parent=84 // pred_region
          %s396 = sand.u32 %s135, 1
          %s397 = sand.u32 %s135, 1
          %s398 = smul.addr %s397, 12
          %s399 = scalar_lea.vmem [#allocation2], %s398
        $region89: #{encoder_layer_forward.3} parent=84 // pred_fallthru
          _
      $region85: #{encoder_layer_forward.3} parent=5 // pred_fallthru
        _
    $region6: #{encoder_layer_forward.3} parent=1 // loop_footer
      %s15 = sadd.s32 1, %s11
    $region7: #{encoder_layer_forward.3} parent=1 // loop_footer_branch
      %10 = sbr.rel target = $region3
    $region8: #{encoder_layer_forward.3} parent=1 // loop_exit
      _

// kernel: encoder_layer_forward.5
$region0: #{encoder_layer_forward.5}
  #allocation0 [shape = 'u32[]', space=smem, size = 0x4, offset = 0x4, fixed_abs, tag = 'smem constant byte address 0x4 - core index']
  #allocation1 [shape = 'u32[144,128]{1,0:T(1,128)}', space=vmem, size = 0x12000, scoped, tag = 'internal scratch']
  %s0 = inlined_call_operand.vmem [shape: bf16[16,32], index: 0, kind: input, shape index: {}]
  %s1 = inlined_call_operand.vmem [shape: f32[16,32], index: 1, kind: input, shape index: {}]
  %s2 = inlined_call_operand.vmem [shape: bf16[32,32], index: 2, kind: input, shape index: {}]
  %s3 = inlined_call_operand.vmem [shape: f32[1,32], index: 3, kind: input, shape index: {}]
  %s4 = inlined_call_operand.vmem [shape: f32[1,32], index: 4, kind: input, shape index: {}]
  %s5 = inlined_call_operand.vmem [shape: f32[1,32], index: 5, kind: input, shape index: {}]
  %s6 = inlined_call_operand.vmem [shape: bf16[32,128], index: 6, kind: input, shape index: {}]
  %s7 = inlined_call_operand.vmem [shape: f32[1,128], index: 7, kind: input, shape index: {}]
  %s8 = inlined_call_operand.vmem [shape: bf16[128,32], index: 8, kind: input, shape index: {}]
  %s9 = inlined_call_operand.vmem [shape: f32[1,32], index: 9, kind: input, shape index: {}]
  %s10 = inlined_call_operand.vmem [shape: bf16[32,128], index: 10, kind: input, shape index: {}]
  %s11 = inlined_call_operand.vmem [shape: f32[1,128], index: 11, kind: input, shape index: {}]
  %s12 = inlined_call_operand.vmem [shape: bf16[128,32], index: 12, kind: input, shape index: {}]
  %s13 = inlined_call_operand.vmem [shape: f32[1,32], index: 13, kind: input, shape index: {}]
  %s14 = inlined_call_operand.hbm [shape: f32[16,32], index: 14, kind: output, shape index: {}]
  %s15 = sld [smem:[#allocation0]]
  $region89: #{encoder_layer_forward.5} parent=0
    _
  %s17 = ssub.s32 1, %s15
  %s18 = scalar_select 0, %s17, %s15
  $region1: #{encoder_layer_forward.5} parent=0
    #allocation2 [shape = 'u8[8192]{0}', space=vmem, size = 0x2000, scoped, tag = 'output window, operand 0']
    #allocation3 [shape = 's32[2]{0}', space=sflag, size = 0x8, scoped, tag = 'scoped memory for encoder_layer_forward.5']
    %19 = vsyncpa [#allocation3], 0
    %s20 = scalar_lea.sflag [#allocation3], 1
    %21 = vsyncpa %s20, 0
    loop: start=0, step=1, limit=4
    $region2: #{encoder_layer_forward.5} parent=1 // loop_pre_header
      _
    $region3: #{encoder_layer_forward.5} parent=1 // loop_header
      %s23 = sphi 0, %s27
      %p24 = scmp.ge.s32.totalorder %s23, 4
      %s33 = sphi 0, %s35
      %s36 = sphi 0, %s33
      %s37 = sphi 0, %s36
      %s53 = sphi 0, %s37
      %s59 = sphi 0, %s61
      %s62 = sphi 0, %s59
      %s63 = sphi 0, %s62
      %s79 = sphi 0, %s63
      %s83 = sphi 0, %s83
      %s85 = sphi 0, %s83
      %s86 = sphi 0, %s85
      %s100 = sphi 0, %s86
      %s104 = sphi 0, %s104
      %s106 = sphi 0, %s104
      %s107 = sphi 0, %s106
      %s121 = sphi 0, %s107
      %s125 = sphi 0, %s125
      %s127 = sphi 0, %s125
      %s128 = sphi 0, %s127
      %s142 = sphi 0, %s128
      %s146 = sphi 0, %s146
      %s148 = sphi 0, %s146
      %s149 = sphi 0, %s148
      %s163 = sphi 0, %s149
      %s167 = sphi 0, %s167
      %s169 = sphi 0, %s167
      %s170 = sphi 0, %s169
      %s184 = sphi 0, %s170
      %s188 = sphi 0, %s188
      %s190 = sphi 0, %s188
      %s191 = sphi 0, %s190
      %s205 = sphi 0, %s191
      %s209 = sphi 0, %s209
      %s211 = sphi 0, %s209
      %s212 = sphi 0, %s211
      %s226 = sphi 0, %s212
      %s230 = sphi 0, %s230
      %s232 = sphi 0, %s230
      %s233 = sphi 0, %s232
      %s247 = sphi 0, %s233
      %s251 = sphi 0, %s251
      %s253 = sphi 0, %s251
      %s254 = sphi 0, %s253
      %s268 = sphi 0, %s254
      %s272 = sphi 0, %s272
      %s274 = sphi 0, %s272
      %s275 = sphi 0, %s274
      %s289 = sphi 0, %s275
      %s293 = sphi 0, %s293
      %s295 = sphi 0, %s293
      %s296 = sphi 0, %s295
      %s310 = sphi 0, %s296
      %s314 = sphi 0, %s314
      %s316 = sphi 0, %s314
      %s317 = sphi 0, %s316
      %s331 = sphi 0, %s317
      %s337 = sphi 0, %s339
      %s340 = sphi 0, %s337
      %s341 = sphi 0, %s340
      %s357 = sphi 0, %s341
    $region4: #{encoder_layer_forward.5} parent=1 // loop_header_branch
      %26 = sbr.rel (%p24) target = $region8
    $region5: #{encoder_layer_forward.5} parent=1 // loop_body
      %s28 = ssub.s32 %s23, 1
      %s29 = ssub.s32 %s23, 2
      %s30 = sadd.s32 %s23, 1
      %s31 = ssub.s32 %s23, %s30
      %p32 = scmp.eq.s32.totalorder %s31, 0
      %s34 = sadd.s32 %s33, 1
      %s35 = scalar_select %p32, %s33, %s34
      %p38 = pneg %p32
      %p39 = scmp.eq.s32.totalorder %s23, 1
      %p40 = por %p38, %p39
      %p41 = scmp.ne.s32.totalorder %s33, %s36
      %p42 = scmp.eq.s32.totalorder %s23, 0
      %p43 = por %p41, %p42
      %p44 = scmp.ne.s32.totalorder %s33, %s36
      %p45 = scmp.eq.s32.totalorder %s28, 1
      %p46 = por %p44, %p45
      %p47 = scmp.ne.s32.totalorder %s36, %s37
      %p48 = scmp.eq.s32.totalorder %s28, 0
      %p49 = por %p47, %p48
      %p50 = scmp.ne.s32.totalorder %s36, %s37
      %p51 = scmp.eq.s32.totalorder %s29, 1
      %p52 = por %p50, %p51
      %p54 = scmp.ne.s32.totalorder %s37, %s53
      %p55 = scmp.eq.s32.totalorder %s29, 0
      %p56 = por %p54, %p55
      %s57 = ssub.s32 %s23, %s30
      %p58 = scmp.eq.s32.totalorder %s57, 0
      %s60 = sadd.s32 %s59, 1
      %s61 = scalar_select %p58, %s59, %s60
      %p64 = pneg %p58
      %p65 = scmp.eq.s32.totalorder %s23, 1
      %p66 = por %p64, %p65
      %p67 = scmp.ne.s32.totalorder %s59, %s62
      %p68 = scmp.eq.s32.totalorder %s23, 0
      %p69 = por %p67, %p68
      %p70 = scmp.ne.s32.totalorder %s59, %s62
      %p71 = scmp.eq.s32.totalorder %s28, 1
      %p72 = por %p70, %p71
      %p73 = scmp.ne.s32.totalorder %s62, %s63
      %p74 = scmp.eq.s32.totalorder %s28, 0
      %p75 = por %p73, %p74
      %p76 = scmp.ne.s32.totalorder %s62, %s63
      %p77 = scmp.eq.s32.totalorder %s29, 1
      %p78 = por %p76, %p77
      %p80 = scmp.ne.s32.totalorder %s63, %s79
      %p81 = scmp.eq.s32.totalorder %s29, 0
      %p82 = por %p80, %p81
      %s84 = sadd.s32 %s83, 1
      %p87 = scmp.eq.s32.totalorder %s23, 1
      %p88 = scmp.ne.s32.totalorder %s83, %s85
      %p89 = scmp.eq.s32.totalorder %s23, 0
      %p90 = por %p88, %p89
      %p91 = scmp.ne.s32.totalorder %s83, %s85
      %p92 = scmp.eq.s32.totalorder %s28, 1
      %p93 = por %p91, %p92
      %p94 = scmp.ne.s32.totalorder %s85, %s86
      %p95 = scmp.eq.s32.totalorder %s28, 0
      %p96 = por %p94, %p95
      %p97 = scmp.ne.s32.totalorder %s85, %s86
      %p98 = scmp.eq.s32.totalorder %s29, 1
      %p99 = por %p97, %p98
      %p101 = scmp.ne.s32.totalorder %s86, %s100
      %p102 = scmp.eq.s32.totalorder %s29, 0
      %p103 = por %p101, %p102
      %s105 = sadd.s32 %s104, 1
      %p108 = scmp.eq.s32.totalorder %s23, 1
      %p109 = scmp.ne.s32.totalorder %s104, %s106
      %p110 = scmp.eq.s32.totalorder %s23, 0
      %p111 = por %p109, %p110
      %p112 = scmp.ne.s32.totalorder %s104, %s106
      %p113 = scmp.eq.s32.totalorder %s28, 1
      %p114 = por %p112, %p113
      %p115 = scmp.ne.s32.totalorder %s106, %s107
      %p116 = scmp.eq.s32.totalorder %s28, 0
      %p117 = por %p115, %p116
      %p118 = scmp.ne.s32.totalorder %s106, %s107
      %p119 = scmp.eq.s32.totalorder %s29, 1
      %p120 = por %p118, %p119
      %p122 = scmp.ne.s32.totalorder %s107, %s121
      %p123 = scmp.eq.s32.totalorder %s29, 0
      %p124 = por %p122, %p123
      %s126 = sadd.s32 %s125, 1
      %p129 = scmp.eq.s32.totalorder %s23, 1
      %p130 = scmp.ne.s32.totalorder %s125, %s127
      %p131 = scmp.eq.s32.totalorder %s23, 0
      %p132 = por %p130, %p131
      %p133 = scmp.ne.s32.totalorder %s125, %s127
      %p134 = scmp.eq.s32.totalorder %s28, 1
      %p135 = por %p133, %p134
      %p136 = scmp.ne.s32.totalorder %s127, %s128
      %p137 = scmp.eq.s32.totalorder %s28, 0
      %p138 = por %p136, %p137
      %p139 = scmp.ne.s32.totalorder %s127, %s128
      %p140 = scmp.eq.s32.totalorder %s29, 1
      %p141 = por %p139, %p140
      %p143 = scmp.ne.s32.totalorder %s128, %s142
      %p144 = scmp.eq.s32.totalorder %s29, 0
      %p145 = por %p143, %p144
      %s147 = sadd.s32 %s146, 1
      %p150 = scmp.eq.s32.totalorder %s23, 1
      %p151 = scmp.ne.s32.totalorder %s146, %s148
      %p152 = scmp.eq.s32.totalorder %s23, 0
      %p153 = por %p151, %p152
      %p154 = scmp.ne.s32.totalorder %s146, %s148
      %p155 = scmp.eq.s32.totalorder %s28, 1
      %p156 = por %p154, %p155
      %p157 = scmp.ne.s32.totalorder %s148, %s149
      %p158 = scmp.eq.s32.totalorder %s28, 0
      %p159 = por %p157, %p158
      %p160 = scmp.ne.s32.totalorder %s148, %s149
      %p161 = scmp.eq.s32.totalorder %s29, 1
      %p162 = por %p160, %p161
      %p164 = scmp.ne.s32.totalorder %s149, %s163
      %p165 = scmp.eq.s32.totalorder %s29, 0
      %p166 = por %p164, %p165
      %s168 = sadd.s32 %s167, 1
      %p171 = scmp.eq.s32.totalorder %s23, 1
      %p172 = scmp.ne.s32.totalorder %s167, %s169
      %p173 = scmp.eq.s32.totalorder %s23, 0
      %p174 = por %p172, %p173
      %p175 = scmp.ne.s32.totalorder %s167, %s169
      %p176 = scmp.eq.s32.totalorder %s28, 1
      %p177 = por %p175, %p176
      %p178 = scmp.ne.s32.totalorder %s169, %s170
      %p179 = scmp.eq.s32.totalorder %s28, 0
      %p180 = por %p178, %p179
      %p181 = scmp.ne.s32.totalorder %s169, %s170
      %p182 = scmp.eq.s32.totalorder %s29, 1
      %p183 = por %p181, %p182
      %p185 = scmp.ne.s32.totalorder %s170, %s184
      %p186 = scmp.eq.s32.totalorder %s29, 0
      %p187 = por %p185, %p186
      %s189 = sadd.s32 %s188, 1
      %p192 = scmp.eq.s32.totalorder %s23, 1
      %p193 = scmp.ne.s32.totalorder %s188, %s190
      %p194 = scmp.eq.s32.totalorder %s23, 0
      %p195 = por %p193, %p194
      %p196 = scmp.ne.s32.totalorder %s188, %s190
      %p197 = scmp.eq.s32.totalorder %s28, 1
      %p198 = por %p196, %p197
      %p199 = scmp.ne.s32.totalorder %s190, %s191
      %p200 = scmp.eq.s32.totalorder %s28, 0
      %p201 = por %p199, %p200
      %p202 = scmp.ne.s32.totalorder %s190, %s191
      %p203 = scmp.eq.s32.totalorder %s29, 1
      %p204 = por %p202, %p203
      %p206 = scmp.ne.s32.totalorder %s191, %s205
      %p207 = scmp.eq.s32.totalorder %s29, 0
      %p208 = por %p206, %p207
      %s210 = sadd.s32 %s209, 1
      %p213 = scmp.eq.s32.totalorder %s23, 1
      %p214 = scmp.ne.s32.totalorder %s209, %s211
      %p215 = scmp.eq.s32.totalorder %s23, 0
      %p216 = por %p214, %p215
      %p217 = scmp.ne.s32.totalorder %s209, %s211
      %p218 = scmp.eq.s32.totalorder %s28, 1
      %p219 = por %p217, %p218
      %p220 = scmp.ne.s32.totalorder %s211, %s212
      %p221 = scmp.eq.s32.totalorder %s28, 0
      %p222 = por %p220, %p221
      %p223 = scmp.ne.s32.totalorder %s211, %s212
      %p224 = scmp.eq.s32.totalorder %s29, 1
      %p225 = por %p223, %p224
      %p227 = scmp.ne.s32.totalorder %s212, %s226
      %p228 = scmp.eq.s32.totalorder %s29, 0
      %p229 = por %p227, %p228
      %s231 = sadd.s32 %s230, 1
      %p234 = scmp.eq.s32.totalorder %s23, 1
      %p235 = scmp.ne.s32.totalorder %s230, %s232
      %p236 = scmp.eq.s32.totalorder %s23, 0
      %p237 = por %p235, %p236
      %p238 = scmp.ne.s32.totalorder %s230, %s232
      %p239 = scmp.eq.s32.totalorder %s28, 1
      %p240 = por %p238, %p239
      %p241 = scmp.ne.s32.totalorder %s232, %s233
      %p242 = scmp.eq.s32.totalorder %s28, 0
      %p243 = por %p241, %p242
      %p244 = scmp.ne.s32.totalorder %s232, %s233
      %p245 = scmp.eq.s32.totalorder %s29, 1
      %p246 = por %p244, %p245
      %p248 = scmp.ne.s32.totalorder %s233, %s247
      %p249 = scmp.eq.s32.totalorder %s29, 0
      %p250 = por %p248, %p249
      %s252 = sadd.s32 %s251, 1
      %p255 = scmp.eq.s32.totalorder %s23, 1
      %p256 = scmp.ne.s32.totalorder %s251, %s253
      %p257 = scmp.eq.s32.totalorder %s23, 0
      %p258 = por %p256, %p257
      %p259 = scmp.ne.s32.totalorder %s251, %s253
      %p260 = scmp.eq.s32.totalorder %s28, 1
      %p261 = por %p259, %p260
      %p262 = scmp.ne.s32.totalorder %s253, %s254
      %p263 = scmp.eq.s32.totalorder %s28, 0
      %p264 = por %p262, %p263
      %p265 = scmp.ne.s32.totalorder %s253, %s254
      %p266 = scmp.eq.s32.totalorder %s29, 1
      %p267 = por %p265, %p266
      %p269 = scmp.ne.s32.totalorder %s254, %s268
      %p270 = scmp.eq.s32.totalorder %s29, 0
      %p271 = por %p269, %p270
      %s273 = sadd.s32 %s272, 1
      %p276 = scmp.eq.s32.totalorder %s23, 1
      %p277 = scmp.ne.s32.totalorder %s272, %s274
      %p278 = scmp.eq.s32.totalorder %s23, 0
      %p279 = por %p277, %p278
      %p280 = scmp.ne.s32.totalorder %s272, %s274
      %p281 = scmp.eq.s32.totalorder %s28, 1
      %p282 = por %p280, %p281
      %p283 = scmp.ne.s32.totalorder %s274, %s275
      %p284 = scmp.eq.s32.totalorder %s28, 0
      %p285 = por %p283, %p284
      %p286 = scmp.ne.s32.totalorder %s274, %s275
      %p287 = scmp.eq.s32.totalorder %s29, 1
      %p288 = por %p286, %p287
      %p290 = scmp.ne.s32.totalorder %s275, %s289
      %p291 = scmp.eq.s32.totalorder %s29, 0
      %p292 = por %p290, %p291
      %s294 = sadd.s32 %s293, 1
      %p297 = scmp.eq.s32.totalorder %s23, 1
      %p298 = scmp.ne.s32.totalorder %s293, %s295
      %p299 = scmp.eq.s32.totalorder %s23, 0
      %p300 = por %p298, %p299
      %p301 = scmp.ne.s32.totalorder %s293, %s295
      %p302 = scmp.eq.s32.totalorder %s28, 1
      %p303 = por %p301, %p302
      %p304 = scmp.ne.s32.totalorder %s295, %s296
      %p305 = scmp.eq.s32.totalorder %s28, 0
      %p306 = por %p304, %p305
      %p307 = scmp.ne.s32.totalorder %s295, %s296
      %p308 = scmp.eq.s32.totalorder %s29, 1
      %p309 = por %p307, %p308
      %p311 = scmp.ne.s32.totalorder %s296, %s310
      %p312 = scmp.eq.s32.totalorder %s29, 0
      %p313 = por %p311, %p312
      %s315 = sadd.s32 %s314, 1
      %p318 = scmp.eq.s32.totalorder %s23, 1
      %p319 = scmp.ne.s32.totalorder %s314, %s316
      %p320 = scmp.eq.s32.totalorder %s23, 0
      %p321 = por %p319, %p320
      %p322 = scmp.ne.s32.totalorder %s314, %s316
      %p323 = scmp.eq.s32.totalorder %s28, 1
      %p324 = por %p322, %p323
      %p325 = scmp.ne.s32.totalorder %s316, %s317
      %p326 = scmp.eq.s32.totalorder %s28, 0
      %p327 = por %p325, %p326
      %p328 = scmp.ne.s32.totalorder %s316, %s317
      %p329 = scmp.eq.s32.totalorder %s29, 1
      %p330 = por %p328, %p329
      %p332 = scmp.ne.s32.totalorder %s317, %s331
      %p333 = scmp.eq.s32.totalorder %s29, 0
      %p334 = por %p332, %p333
      %s335 = ssub.s32 %s23, %s30
      %p336 = scmp.eq.s32.totalorder %s335, 0
      %s338 = sadd.s32 %s337, 1
      %s339 = scalar_select %p336, %s337, %s338
      %p342 = pneg %p336
      %p343 = scmp.eq.s32.totalorder %s23, 1
      %p344 = por %p342, %p343
      %p345 = scmp.ne.s32.totalorder %s337, %s340
      %p346 = scmp.eq.s32.totalorder %s23, 0
      %p347 = por %p345, %p346
      %p348 = scmp.ne.s32.totalorder %s337, %s340
      %p349 = scmp.eq.s32.totalorder %s28, 1
      %p350 = por %p348, %p349
      %p351 = scmp.ne.s32.totalorder %s340, %s341
      %p352 = scmp.eq.s32.totalorder %s28, 0
      %p353 = por %p351, %p352
      %p354 = scmp.ne.s32.totalorder %s340, %s341
      %p355 = scmp.eq.s32.totalorder %s29, 1
      %p356 = por %p354, %p355
      %p358 = scmp.ne.s32.totalorder %s341, %s357
      %p359 = scmp.eq.s32.totalorder %s29, 0
      %p360 = por %p358, %p359
      %p361 = scmp.le.s32.totalorder 1, %s23
      %p362 = scmp.lt.s32.totalorder %s23, 3
      %p363 = pnand %p361, %p362
      %p364 = pneg %p363
      // Predicated region
      $region9: #{encoder_layer_forward.5} parent=5 // pred_check
        _
      $region10: #{encoder_layer_forward.5} parent=5 // pred_check_branch
        %366 = sbr.rel (%p363) target = $region12
      $region11: #{encoder_layer_forward.5} parent=5 // pred_region
        %s367 = ssub.s32 %s23, 1
        // Predicated region
        $region13: #{encoder_layer_forward.5} parent=11 // pred_check
          %p368 = pneg %p96
        $region14: #{encoder_layer_forward.5} parent=11 // pred_check_branch
          %370 = sbr.rel (%p368) target = $region16
        $region15: #{encoder_layer_forward.5} parent=11 // pred_region
          _
        $region16: #{encoder_layer_forward.5} parent=11 // pred_fallthru
          _
        // Predicated region
        $region17: #{encoder_layer_forward.5} parent=11 // pred_check
          %p371 = pneg %p117
        $region18: #{encoder_layer_forward.5} parent=11 // pred_check_branch
          %373 = sbr.rel (%p371) target = $region20
        $region19: #{encoder_layer_forward.5} parent=11 // pred_region
          _
        $region20: #{encoder_layer_forward.5} parent=11 // pred_fallthru
          _
        // Predicated region
        $region21: #{encoder_layer_forward.5} parent=11 // pred_check
          %p374 = pneg %p138
        $region22: #{encoder_layer_forward.5} parent=11 // pred_check_branch
          %376 = sbr.rel (%p374) target = $region24
        $region23: #{encoder_layer_forward.5} parent=11 // pred_region
          _
        $region24: #{encoder_layer_forward.5} parent=11 // pred_fallthru
          _
        // Predicated region
        $region25: #{encoder_layer_forward.5} parent=11 // pred_check
          %p377 = pneg %p159
        $region26: #{encoder_layer_forward.5} parent=11 // pred_check_branch
          %379 = sbr.rel (%p377) target = $region28
        $region27: #{encoder_layer_forward.5} parent=11 // pred_region
          _
        $region28: #{encoder_layer_forward.5} parent=11 // pred_fallthru
          _
        // Predicated region
        $region29: #{encoder_layer_forward.5} parent=11 // pred_check
          %p380 = pneg %p180
        $region30: #{encoder_layer_forward.5} parent=11 // pred_check_branch
          %382 = sbr.rel (%p380) target = $region32
        $region31: #{encoder_layer_forward.5} parent=11 // pred_region
          _
        $region32: #{encoder_layer_forward.5} parent=11 // pred_fallthru
          _
        // Predicated region
        $region33: #{encoder_layer_forward.5} parent=11 // pred_check
          %p383 = pneg %p201
        $region34: #{encoder_layer_forward.5} parent=11 // pred_check_branch
          %385 = sbr.rel (%p383) target = $region36
        $region35: #{encoder_layer_forward.5} parent=11 // pred_region
          _
        $region36: #{encoder_layer_forward.5} parent=11 // pred_fallthru
          _
        // Predicated region
        $region37: #{encoder_layer_forward.5} parent=11 // pred_check
          %p386 = pneg %p222
        $region38: #{encoder_layer_forward.5} parent=11 // pred_check_branch
          %388 = sbr.rel (%p386) target = $region40
        $region39: #{encoder_layer_forward.5} parent=11 // pred_region
          _
        $region40: #{encoder_layer_forward.5} parent=11 // pred_fallthru
          _
        // Predicated region
        $region41: #{encoder_layer_forward.5} parent=11 // pred_check
          %p389 = pneg %p243
        $region42: #{encoder_layer_forward.5} parent=11 // pred_check_branch
          %391 = sbr.rel (%p389) target = $region44
        $region43: #{encoder_layer_forward.5} parent=11 // pred_region
          _
        $region44: #{encoder_layer_forward.5} parent=11 // pred_fallthru
          _
        // Predicated region
        $region45: #{encoder_layer_forward.5} parent=11 // pred_check
          %p392 = pneg %p264
        $region46: #{encoder_layer_forward.5} parent=11 // pred_check_branch
          %394 = sbr.rel (%p392) target = $region48
        $region47: #{encoder_layer_forward.5} parent=11 // pred_region
          _
        $region48: #{encoder_layer_forward.5} parent=11 // pred_fallthru
          _
        // Predicated region
        $region49: #{encoder_layer_forward.5} parent=11 // pred_check
          %p395 = pneg %p285
        $region50: #{encoder_layer_forward.5} parent=11 // pred_check_branch
          %397 = sbr.rel (%p395) target = $region52
        $region51: #{encoder_layer_forward.5} parent=11 // pred_region
          _
        $region52: #{encoder_layer_forward.5} parent=11 // pred_fallthru
          _
        // Predicated region
        $region53: #{encoder_layer_forward.5} parent=11 // pred_check
          %p398 = pneg %p306
        $region54: #{encoder_layer_forward.5} parent=11 // pred_check_branch
          %400 = sbr.rel (%p398) target = $region56
        $region55: #{encoder_layer_forward.5} parent=11 // pred_region
          _
        $region56: #{encoder_layer_forward.5} parent=11 // pred_fallthru
          _
        // Predicated region
        $region57: #{encoder_layer_forward.5} parent=11 // pred_check
          %p401 = pneg %p327
        $region58: #{encoder_layer_forward.5} parent=11 // pred_check_branch
          %403 = sbr.rel (%p401) target = $region60
        $region59: #{encoder_layer_forward.5} parent=11 // pred_region
          _
        $region60: #{encoder_layer_forward.5} parent=11 // pred_fallthru
          _
      $region12: #{encoder_layer_forward.5} parent=5 // pred_fallthru
        _
      %p404 = scmp.lt.s32.totalorder %s23, 2
      // Predicated region
      $region61: #{encoder_layer_forward.5} parent=5 // pred_check
        %p405 = pneg %p404
      $region62: #{encoder_layer_forward.5} parent=5 // pred_check_branch
        %407 = sbr.rel (%p405) target = $region64
      $region63: #{encoder_layer_forward.5} parent=5 // pred_region
        // Predicated region
        $region65: #{encoder_layer_forward.5} parent=63 // pred_check
          %p408 = pneg %p43
        $region66: #{encoder_layer_forward.5} parent=63 // pred_check_branch
          %410 = sbr.rel (%p408) target = $region68
        $region67: #{encoder_layer_forward.5} parent=63 // pred_region
          %p411 = scmp.lt.s32.totalorder %s23, 1
          %s412 = scalar_select %p411, %s23, 1
          %s413 = smul.addr %s412, 4
          %s414 = scalar_lea.vmem %s0, %s413
        $region68: #{encoder_layer_forward.5} parent=63 // pred_fallthru
          _
        // Predicated region
        $region69: #{encoder_layer_forward.5} parent=63 // pred_check
          %p415 = pneg %p69
        $region70: #{encoder_layer_forward.5} parent=63 // pred_check_branch
          %417 = sbr.rel (%p415) target = $region72
        $region71: #{encoder_layer_forward.5} parent=63 // pred_region
          %p418 = scmp.lt.s32.totalorder %s23, 1
          %s419 = scalar_select %p418, %s23, 1
          %s420 = smul.addr %s419, 8
          %s421 = scalar_lea.vmem %s1, %s420
        $region72: #{encoder_layer_forward.5} parent=63 // pred_fallthru
          _
      $region64: #{encoder_layer_forward.5} parent=5 // pred_fallthru
        _
      %p422 = scmp.le.s32.totalorder 1, %s23
      %p423 = scmp.lt.s32.totalorder %s23, 3
      %p424 = pnand %p422, %p423
      %p425 = pneg %p424
      // Predicated region
      $region73: #{encoder_layer_forward.5} parent=5 // pred_check
        _
      $region74: #{encoder_layer_forward.5} parent=5 // pred_check_branch
        %427 = sbr.rel (%p424) target = $region76
      $region75: #{encoder_layer_forward.5} parent=5 // pred_region
        %s428 = ssub.s32 %s23, 1
        %p429 = scmp.lt.s32.totalorder %s28, 1
        %s430 = scalar_select %p429, %s28, 1
        %s431 = smul.addr %s430, 4
        %s432 = scalar_lea.vmem %s0, %s431
        %p433 = pneg %p49
        %p434 = pneg %p46
        %p435 = scmp.lt.s32.totalorder %s28, 1
        %s436 = scalar_select %p435, %s28, 1
        %s437 = smul.addr %s436, 8
        %s438 = scalar_lea.vmem %s1, %s437
        %p439 = pneg %p75
        %p440 = pneg %p72
        %p441 = pneg %p96
        %p442 = pneg %p93
        %p443 = pneg %p117
        %p444 = pneg %p114
        %p445 = pneg %p138
        %p446 = pneg %p135
        %p447 = pneg %p159
        %p448 = pneg %p156
        %p449 = pneg %p180
        %p450 = pneg %p177
        %p451 = pneg %p201
        %p452 = pneg %p198
        %p453 = pneg %p222
        %p454 = pneg %p219
        %p455 = pneg %p243
        %p456 = pneg %p240
        %p457 = pneg %p264
        %p458 = pneg %p261
        %p459 = pneg %p285
        %p460 = pneg %p282
        %p461 = pneg %p306
        %p462 = pneg %p303
        %p463 = pneg %p327
        %p464 = pneg %p324
        %p465 = pneg %p353
        %p466 = pneg %p350
        %s467 = sand.u32 %s340, 1
        %s468 = scalar_lea.sflag [#allocation3], %s467
        %s469 = sand.u32 %s340, 1
        %s470 = smul.addr %s469, 8
        %s471 = scalar_lea.vmem [#allocation2], %s470
        %p472 = scmp.lt.s32.totalorder %s28, 1
        %s473 = scalar_select %p472, %s28, 1
        %s474 = smul.addr %s473, 4
        %s475 = scalar_lea.vmem %s0, %s474
        %p476 = scmp.lt.s32.totalorder %s28, 1
        %s477 = scalar_select %p476, %s28, 1
        %s478 = smul.addr %s477, 8
        %s479 = scalar_lea.vmem %s1, %s478
        %v481 = vld [vmem:[%s479] sm:$0xff]
        %v482 = vld [vmem:[%s475] sm:$0xf]
        %v483 = vld [vmem:[%s2] sm:$0xf]
        %v484 = vld [vmem:[%s2 + $0x4] sm:$0xf]
        %v485 = vld [vmem:[%s2 + $0x8] sm:$0xf]
        %v486 = vld [vmem:[%s2 + $0xc] sm:$0xf]
        %v487 = vld [vmem:[%s3] sm:$0x1]
        %v489 = vlaneseq
        %v490 = vshrl.u32 %v489, 7
        %v491 = vsub.s32 0, %v490
        %v492 = vrot.slane %v487, %v491
        %v498 = vunpack.c.l.b16 %v483
        %v499 = vunpack.c.l.b16 %v484
        %v500 = vunpack.c.l.b16 %v485
        %v501 = vunpack.c.l.b16 %v486
        %v502 = vpack.c.b16 %v499, %v498
        %v503 = vpack.c.b16 %v501, %v500
        %vm506 = vcmask 261120
        %v508 = vsel %vm506, %v482, 0
        %510 = vmatprep.subr.bf16.mxu0 0
        %511 = vmatpush1.bf16.msra.mxu0 %v502
        %512 = vmatprep.subr.bf16.mxu0 0
        %513 = vmatpush1.bf16.msra.mxu0 %v503
        %514 = vmatprep.subr.bf16.mxu0 0
        %515 = vmatpush1.bf16.msra.mxu0 0
        %516 = vmatprep.subr.bf16.mxu0 0
        %517 = vmatpush1.bf16.msra.mxu0 0
        %518 = vmatprep.subr.bf16.mxu0 0
        %519 = vmatpush1.bf16.msra.mxu0 0
        %520 = vmatprep.subr.bf16.mxu0 0
        %521 = vmatpush1.bf16.msra.mxu0 0
        %522 = vmatprep.subr.bf16.mxu0 0
        %523 = vmatpush1.bf16.msra.mxu0 0
        %524 = vmatprep.subr.bf16.mxu0 0
        %525 = vmatpush1.bf16.msra.mxu0 0
        %526 = vmatprep.subr.bf16.mxu0 0
        %527 = vmatpush1.bf16.msra.mxu0 0
        %528 = vmatprep.subr.bf16.mxu0 0
        %529 = vmatpush1.bf16.msra.mxu0 0
        %530 = vmatprep.subr.bf16.mxu0 0
        %531 = vmatpush1.bf16.msra.mxu0 0
        %532 = vmatprep.subr.bf16.mxu0 0
        %533 = vmatpush1.bf16.msra.mxu0 0
        %534 = vmatprep.subr.bf16.mxu0 0
        %535 = vmatpush1.bf16.msra.mxu0 0
        %536 = vmatprep.subr.bf16.mxu0 0
        %537 = vmatpush1.bf16.msra.mxu0 0
        %538 = vmatprep.subr.bf16.mxu0 0
        %539 = vmatpush1.bf16.msra.mxu0 0
        %540 = vmatprep.subr.bf16.mxu0 0
        %541 = vmatpush1.bf16.msra.mxu0 0
        %542 = vmatprep.mubr.bf16.mxu0 0
        %543 = vmatmul.mubr.bf16.gmra.mrb[0].mxu0 %v508
        %v544 = vpop.f32.mrb[0].mxu0
        %v545 = vadd.f32 %v492, %v544
        %v546 = vpop.f32.mrb[0].mxu0
        %v547 = vpop.f32.mrb[0].mxu0
        %v548 = vpop.f32.mrb[0].mxu0
        %549 = vdwg.mxu0
        %v550 = vadd.f32 %v481, %v545
        %v551 = vld [vmem:[%s4] sm:$0x1]
        %v552 = vld [vmem:[%s5] sm:$0x1]
        %v553 = vsel %vm506, %v550, 0.0
        %554 = vadd.xlane.f32.xlu0 %v553
        %v555 = vpop.xlane.xlu0 %554
        %v556 = vrcp.pop 32.0
        %v557 = vmul.f32 %v555, %v556
        %v558 = vsub.f32 %v550, %v557
        %v559 = vmul.f32 %v558, %v558
        %v560 = vsel %vm506, %v559, 0.0
        %561 = vadd.xlane.f32.xlu0 %v560
        %v562 = vpop.xlane.xlu0 %561
        %v563 = vmul.f32 %v562, %v556
        %v564 = vadd.f32 %v563, 1e-05
        %v565 = vrsqrt.pop %v564
        %v566 = vmul.f32 %v558, %v565
        %v568 = vlaneseq
        %v569 = vshrl.u32 %v568, 7
        %v570 = vsub.s32 0, %v569
        %v571 = vrot.slane %v551, %v570
        %v573 = vmul.f32 %v566, %v571
        %v575 = vlaneseq
        %v576 = vshrl.u32 %v575, 7
        %v577 = vsub.s32 0, %v576
        %v578 = vrot.slane %v552, %v577
        %v580 = vadd.f32 %v573, %v578
        %v581 = vpack.c.bf16 %v580, %v580
        %v582 = vld [vmem:[%s6] sm:$0xf]
        %v583 = vld [vmem:[%s6 + $0x4] sm:$0xf]
        %v584 = vld [vmem:[%s6 + $0x8] sm:$0xf]
        %v585 = vld [vmem:[%s6 + $0xc] sm:$0xf]
        %v586 = vld [vmem:[%s7] sm:$0x1]
        %v588 = vlaneseq
        %v589 = vshrl.u32 %v588, 7
        %v590 = vsub.s32 0, %v589
        %v591 = vrot.slane %v586, %v590
        %v597 = vunpack.c.l.b16 %v582
        %v598 = vunpack.c.l.b16 %v583
        %v599 = vunpack.c.l.b16 %v584
        %v600 = vunpack.c.l.b16 %v585
        %v601 = vpack.c.b16 %v598, %v597
        %v602 = vpack.c.b16 %v600, %v599
        %v606 = vsel %vm506, %v581, 0
        %608 = vmatprep.subr.bf16.mxu0 0
        %609 = vmatpush1.bf16.msra.mxu0 %v601
        %610 = vmatprep.subr.bf16.mxu0 0
        %611 = vmatpush1.bf16.msra.mxu0 %v602
        %612 = vmatprep.subr.bf16.mxu0 0
        %613 = vmatpush1.bf16.msra.mxu0 0
        %614 = vmatprep.subr.bf16.mxu0 0
        %615 = vmatpush1.bf16.msra.mxu0 0
        %616 = vmatprep.subr.bf16.mxu0 0
        %617 = vmatpush1.bf16.msra.mxu0 0
        %618 = vmatprep.subr.bf16.mxu0 0
        %619 = vmatpush1.bf16.msra.mxu0 0
        %620 = vmatprep.subr.bf16.mxu0 0
        %621 = vmatpush1.bf16.msra.mxu0 0
        %622 = vmatprep.subr.bf16.mxu0 0
        %623 = vmatpush1.bf16.msra.mxu0 0
        %624 = vmatprep.subr.bf16.mxu0 0
        %625 = vmatpush1.bf16.msra.mxu0 0
        %626 = vmatprep.subr.bf16.mxu0 0
        %627 = vmatpush1.bf16.msra.mxu0 0
        %628 = vmatprep.subr.bf16.mxu0 0
        %629 = vmatpush1.bf16.msra.mxu0 0
        %630 = vmatprep.subr.bf16.mxu0 0
        %631 = vmatpush1.bf16.msra.mxu0 0
        %632 = vmatprep.subr.bf16.mxu0 0
        %633 = vmatpush1.bf16.msra.mxu0 0
        %634 = vmatprep.subr.bf16.mxu0 0
        %635 = vmatpush1.bf16.msra.mxu0 0
        %636 = vmatprep.subr.bf16.mxu0 0
        %637 = vmatpush1.bf16.msra.mxu0 0
        %638 = vmatprep.subr.bf16.mxu0 0
        %639 = vmatpush1.bf16.msra.mxu0 0
        %640 = vmatprep.mubr.bf16.mxu0 0
        %641 = vmatmul.mubr.bf16.gmra.mrb[0].mxu0 %v606
        %v642 = vpop.f32.mrb[0].mxu0
        %v643 = vadd.f32 %v591, %v642
        %v644 = vpop.f32.mrb[0].mxu0
        %v645 = vpop.f32.mrb[0].mxu0
        %v646 = vpop.f32.mrb[0].mxu0
        %647 = vdwg.mxu0
        %v648 = vmax.f32 %v643, 0.0
        %v649 = vpack.c.bf16 %v648, %v648
        %v650 = vld [vmem:[%s8] sm:$0xf]
        %v651 = vld [vmem:[%s8 + $0x4] sm:$0xf]
        %v652 = vld [vmem:[%s8 + $0x8] sm:$0xf]
        %v653 = vld [vmem:[%s8 + $0xc] sm:$0xf]
        %v654 = vld [vmem:[%s8 + $0x10] sm:$0xf]
        %v655 = vld [vmem:[%s8 + $0x14] sm:$0xf]
        %v656 = vld [vmem:[%s8 + $0x18] sm:$0xf]
        %v657 = vld [vmem:[%s8 + $0x1c] sm:$0xf]
        %v658 = vld [vmem:[%s8 + $0x20] sm:$0xf]
        %v659 = vld [vmem:[%s8 + $0x24] sm:$0xf]
        %v660 = vld [vmem:[%s8 + $0x28] sm:$0xf]
        %v661 = vld [vmem:[%s8 + $0x2c] sm:$0xf]
        %v662 = vld [vmem:[%s8 + $0x30] sm:$0xf]
        %v663 = vld [vmem:[%s8 + $0x34] sm:$0xf]
        %v664 = vld [vmem:[%s8 + $0x38] sm:$0xf]
        %v665 = vld [vmem:[%s8 + $0x3c] sm:$0xf]
        %v666 = vld [vmem:[%s9] sm:$0x1]
        %v668 = vlaneseq
        %v669 = vshrl.u32 %v668, 7
        %v670 = vsub.s32 0, %v669
        %v671 = vrot.slane %v666, %v670
        %v689 = vunpack.c.l.b16 %v650
        %v690 = vunpack.c.l.b16 %v651
        %v691 = vunpack.c.l.b16 %v652
        %v692 = vunpack.c.l.b16 %v653
        %v693 = vunpack.c.l.b16 %v654
        %v694 = vunpack.c.l.b16 %v655
        %v695 = vunpack.c.l.b16 %v656
        %v696 = vunpack.c.l.b16 %v657
        %v697 = vunpack.c.l.b16 %v658
        %v698 = vunpack.c.l.b16 %v659
        %v699 = vunpack.c.l.b16 %v660
        %v700 = vunpack.c.l.b16 %v661
        %v701 = vunpack.c.l.b16 %v662
        %v702 = vunpack.c.l.b16 %v663
        %v703 = vunpack.c.l.b16 %v664
        %v704 = vunpack.c.l.b16 %v665
        %v705 = vpack.c.b16 %v690, %v689
        %v706 = vpack.c.b16 %v692, %v691
        %v707 = vpack.c.b16 %v694, %v693
        %v708 = vpack.c.b16 %v696, %v695
        %v709 = vpack.c.b16 %v698, %v697
        %v710 = vpack.c.b16 %v700, %v699
        %v711 = vpack.c.b16 %v702, %v701
        %v712 = vpack.c.b16 %v704, %v703
        %721 = vmatprep.subr.bf16.mxu0 0
        %722 = vmatpush1.bf16.msra.mxu0 %v705
        %723 = vmatprep.subr.bf16.mxu0 0
        %724 = vmatpush1.bf16.msra.mxu0 %v706
        %725 = vmatprep.subr.bf16.mxu0 0
        %726 = vmatpush1.bf16.msra.mxu0 %v707
        %727 = vmatprep.subr.bf16.mxu0 0
        %728 = vmatpush1.bf16.msra.mxu0 %v708
        %729 = vmatprep.subr.bf16.mxu0 0
        %730 = vmatpush1.bf16.msra.mxu0 %v709
        %731 = vmatprep.subr.bf16.mxu0 0
        %732 = vmatpush1.bf16.msra.mxu0 %v710
        %733 = vmatprep.subr.bf16.mxu0 0
        %734 = vmatpush1.bf16.msra.mxu0 %v711
        %735 = vmatprep.subr.bf16.mxu0 0
        %736 = vmatpush1.bf16.msra.mxu0 %v712
        %737 = vmatprep.subr.bf16.mxu0 0
        %738 = vmatpush1.bf16.msra.mxu0 0
        %739 = vmatprep.subr.bf16.mxu0 0
        %740 = vmatpush1.bf16.msra.mxu0 0
        %741 = vmatprep.subr.bf16.mxu0 0
        %742 = vmatpush1.bf16.msra.mxu0 0
        %743 = vmatprep.subr.bf16.mxu0 0
        %744 = vmatpush1.bf16.msra.mxu0 0
        %745 = vmatprep.subr.bf16.mxu0 0
        %746 = vmatpush1.bf16.msra.mxu0 0
        %747 = vmatprep.subr.bf16.mxu0 0
        %748 = vmatpush1.bf16.msra.mxu0 0
        %749 = vmatprep.subr.bf16.mxu0 0
        %750 = vmatpush1.bf16.msra.mxu0 0
        %751 = vmatprep.subr.bf16.mxu0 0
        %752 = vmatpush1.bf16.msra.mxu0 0
        %753 = vmatprep.mubr.bf16.mxu0 0
        %754 = vmatmul.mubr.bf16.gmra.mrb[0].mxu0 %v649
        %v755 = vpop.f32.mrb[0].mxu0
        %v756 = vadd.f32 %v671, %v755
        %v757 = vpop.f32.mrb[0].mxu0
        %v758 = vpop.f32.mrb[0].mxu0
        %v759 = vpop.f32.mrb[0].mxu0
        %760 = vdwg.mxu0
        %v761 = vpack.c.bf16 %v756, %v756
        %v762 = vld [vmem:[%s10] sm:$0xf]
        %v763 = vld [vmem:[%s10 + $0x4] sm:$0xf]
        %v764 = vld [vmem:[%s10 + $0x8] sm:$0xf]
        %v765 = vld [vmem:[%s10 + $0xc] sm:$0xf]
        %v766 = vld [vmem:[%s11] sm:$0x1]
        %v768 = vlaneseq
        %v769 = vshrl.u32 %v768, 7
        %v770 = vsub.s32 0, %v769
        %v771 = vrot.slane %v766, %v770
        %v777 = vunpack.c.l.b16 %v762
        %v778 = vunpack.c.l.b16 %v763
        %v779 = vunpack.c.l.b16 %v764
        %v780 = vunpack.c.l.b16 %v765
        %v781 = vpack.c.b16 %v778, %v777
        %v782 = vpack.c.b16 %v780, %v779
        %v786 = vsel %vm506, %v761, 0
        %788 = vmatprep.subr.bf16.mxu0 0
        %789 = vmatpush1.bf16.msra.mxu0 %v781
        %790 = vmatprep.subr.bf16.mxu0 0
        %791 = vmatpush1.bf16.msra.mxu0 %v782
        %792 = vmatprep.subr.bf16.mxu0 0
        %793 = vmatpush1.bf16.msra.mxu0 0
        %794 = vmatprep.subr.bf16.mxu0 0
        %795 = vmatpush1.bf16.msra.mxu0 0
        %796 = vmatprep.subr.bf16.mxu0 0
        %797 = vmatpush1.bf16.msra.mxu0 0
        %798 = vmatprep.subr.bf16.mxu0 0
        %799 = vmatpush1.bf16.msra.mxu0 0
        %800 = vmatprep.subr.bf16.mxu0 0
        %801 = vmatpush1.bf16.msra.mxu0 0
        %802 = vmatprep.subr.bf16.mxu0 0
        %803 = vmatpush1.bf16.msra.mxu0 0
        %804 = vmatprep.subr.bf16.mxu0 0
        %805 = vmatpush1.bf16.msra.mxu0 0
        %806 = vmatprep.subr.bf16.mxu0 0
        %807 = vmatpush1.bf16.msra.mxu0 0
        %808 = vmatprep.subr.bf16.mxu0 0
        %809 = vmatpush1.bf16.msra.mxu0 0
        %810 = vmatprep.subr.bf16.mxu0 0
        %811 = vmatpush1.bf16.msra.mxu0 0
        %812 = vmatprep.subr.bf16.mxu0 0
        %813 = vmatpush1.bf16.msra.mxu0 0
        %814 = vmatprep.subr.bf16.mxu0 0
        %815 = vmatpush1.bf16.msra.mxu0 0
        %816 = vmatprep.subr.bf16.mxu0 0
        %817 = vmatpush1.bf16.msra.mxu0 0
        %818 = vmatprep.subr.bf16.mxu0 0
        %819 = vmatpush1.bf16.msra.mxu0 0
        %820 = vmatprep.mubr.bf16.mxu0 0
        %821 = vmatmul.mubr.bf16.gmra.mrb[0].mxu0 %v786
        %v822 = vpop.f32.mrb[0].mxu0
        %v823 = vadd.f32 %v771, %v822
        %v824 = vpop.f32.mrb[0].mxu0
        %v825 = vpop.f32.mrb[0].mxu0
        %v826 = vpop.f32.mrb[0].mxu0
        %827 = vdwg.mxu0
        %v828 = vmax.f32 %v823, 0.0
        %v829 = vpack.c.bf16 %v828, %v828
        %v830 = vld [vmem:[%s12] sm:$0xf]
        %v831 = vld [vmem:[%s12 + $0x4] sm:$0xf]
        %v832 = vld [vmem:[%s12 + $0x8] sm:$0xf]
        %v833 = vld [vmem:[%s12 + $0xc] sm:$0xf]
        %v834 = vld [vmem:[%s12 + $0x10] sm:$0xf]
        %v835 = vld [vmem:[%s12 + $0x14] sm:$0xf]
        %v836 = vld [vmem:[%s12 + $0x18] sm:$0xf]
        %v837 = vld [vmem:[%s12 + $0x1c] sm:$0xf]
        %v838 = vld [vmem:[%s12 + $0x20] sm:$0xf]
        %v839 = vld [vmem:[%s12 + $0x24] sm:$0xf]
        %v840 = vld [vmem:[%s12 + $0x28] sm:$0xf]
        %v841 = vld [vmem:[%s12 + $0x2c] sm:$0xf]
        %v842 = vld [vmem:[%s12 + $0x30] sm:$0xf]
        %v843 = vld [vmem:[%s12 + $0x34] sm:$0xf]
        %v844 = vld [vmem:[%s12 + $0x38] sm:$0xf]
        %v845 = vld [vmem:[%s12 + $0x3c] sm:$0xf]
        %v846 = vld [vmem:[%s13] sm:$0x1]
        %v848 = vlaneseq
        %v849 = vshrl.u32 %v848, 7
        %v850 = vsub.s32 0, %v849
        %v851 = vrot.slane %v846, %v850
        %v869 = vunpack.c.l.b16 %v830
        %v870 = vunpack.c.l.b16 %v831
        %v871 = vunpack.c.l.b16 %v832
        %v872 = vunpack.c.l.b16 %v833
        %v873 = vunpack.c.l.b16 %v834
        %v874 = vunpack.c.l.b16 %v835
        %v875 = vunpack.c.l.b16 %v836
        %v876 = vunpack.c.l.b16 %v837
        %v877 = vunpack.c.l.b16 %v838
        %v878 = vunpack.c.l.b16 %v839
        %v879 = vunpack.c.l.b16 %v840
        %v880 = vunpack.c.l.b16 %v841
        %v881 = vunpack.c.l.b16 %v842
        %v882 = vunpack.c.l.b16 %v843
        %v883 = vunpack.c.l.b16 %v844
        %v884 = vunpack.c.l.b16 %v845
        %v885 = vpack.c.b16 %v870, %v869
        %v886 = vpack.c.b16 %v872, %v871
        %v887 = vpack.c.b16 %v874, %v873
        %v888 = vpack.c.b16 %v876, %v875
        %v889 = vpack.c.b16 %v878, %v877
        %v890 = vpack.c.b16 %v880, %v879
        %v891 = vpack.c.b16 %v882, %v881
        %v892 = vpack.c.b16 %v884, %v883
        %901 = vmatprep.subr.bf16.mxu0 0
        %902 = vmatpush1.bf16.msra.mxu0 %v885
        %903 = vmatprep.subr.bf16.mxu0 0
        %904 = vmatpush1.bf16.msra.mxu0 %v886
        %905 = vmatprep.subr.bf16.mxu0 0
        %906 = vmatpush1.bf16.msra.mxu0 %v887
        %907 = vmatprep.subr.bf16.mxu0 0
        %908 = vmatpush1.bf16.msra.mxu0 %v888
        %909 = vmatprep.subr.bf16.mxu0 0
        %910 = vmatpush1.bf16.msra.mxu0 %v889
        %911 = vmatprep.subr.bf16.mxu0 0
        %912 = vmatpush1.bf16.msra.mxu0 %v890
        %913 = vmatprep.subr.bf16.mxu0 0
        %914 = vmatpush1.bf16.msra.mxu0 %v891
        %915 = vmatprep.subr.bf16.mxu0 0
        %916 = vmatpush1.bf16.msra.mxu0 %v892
        %917 = vmatprep.subr.bf16.mxu0 0
        %918 = vmatpush1.bf16.msra.mxu0 0
        %919 = vmatprep.subr.bf16.mxu0 0
        %920 = vmatpush1.bf16.msra.mxu0 0
        %921 = vmatprep.subr.bf16.mxu0 0
        %922 = vmatpush1.bf16.msra.mxu0 0
        %923 = vmatprep.subr.bf16.mxu0 0
        %924 = vmatpush1.bf16.msra.mxu0 0
        %925 = vmatprep.subr.bf16.mxu0 0
        %926 = vmatpush1.bf16.msra.mxu0 0
        %927 = vmatprep.subr.bf16.mxu0 0
        %928 = vmatpush1.bf16.msra.mxu0 0
        %929 = vmatprep.subr.bf16.mxu0 0
        %930 = vmatpush1.bf16.msra.mxu0 0
        %931 = vmatprep.subr.bf16.mxu0 0
        %932 = vmatpush1.bf16.msra.mxu0 0
        %933 = vmatprep.mubr.bf16.mxu0 0
        %934 = vmatmul.mubr.bf16.gmra.mrb[0].mxu0 %v829
        %v935 = vpop.f32.mrb[0].mxu0
        %v936 = vadd.f32 %v851, %v935
        %v937 = vpop.f32.mrb[0].mxu0
        %v938 = vpop.f32.mrb[0].mxu0
        %v939 = vpop.f32.mrb[0].mxu0
        %940 = vdwg.mxu0
        %v941 = vadd.f32 %v550, %v756
        %v942 = vadd.f32 %v941, %v936
        %943 = vst.msk [vmem:[%s471] sm:$0xff] %vm506, %v942
        %s944 = sand.u32 %s340, 1
        %s945 = scalar_lea.sflag [#allocation3], %s944
        %s946 = sand.u32 %s340, 1
        %s947 = smul.addr %s946, 8
        %s948 = scalar_lea.vmem [#allocation2], %s947
        // Predicated region
        $region77: #{encoder_layer_forward.5} parent=75 // pred_check
          %p949 = pneg %p350
        $region78: #{encoder_layer_forward.5} parent=75 // pred_check_branch
          %951 = sbr.rel (%p949) target = $region80
        $region79: #{encoder_layer_forward.5} parent=75 // pred_region
          %s953 = ssub.s32 128, 128
          %954 = vsyncadd %s945, %s953
          %s955 = smul.addr %s28, 128
          %s956 = scalar_lea.hbm %s14, %s955
          %s958 = sshll.u32 %s948, 4
          %s959 = int_to_ptr.vmem [resolvable:$true] %s958
          %961 = dma.vmem_to_hbm [thread:$0]  %s959, 128, %s956, %s945
        $region80: #{encoder_layer_forward.5} parent=75 // pred_fallthru
          _
      $region76: #{encoder_layer_forward.5} parent=5 // pred_fallthru
        _
      %p962 = scmp.le.s32.totalorder 2, %s23
      // Predicated region
      $region81: #{encoder_layer_forward.5} parent=5 // pred_check
        %p963 = pneg %p962
      $region82: #{encoder_layer_forward.5} parent=5 // pred_check_branch
        %965 = sbr.rel (%p963) target = $region84
      $region83: #{encoder_layer_forward.5} parent=5 // pred_region
        %s966 = ssub.s32 %s23, 2
        // Predicated region
        $region85: #{encoder_layer_forward.5} parent=83 // pred_check
          %p967 = pneg %p356
        $region86: #{encoder_layer_forward.5} parent=83 // pred_check_branch
          %969 = sbr.rel (%p967) target = $region88
        $region87: #{encoder_layer_forward.5} parent=83 // pred_region
          %s970 = sand.u32 %s341, 1
          %s971 = scalar_lea.sflag [#allocation3], %s970
          %s972 = sand.u32 %s341, 1
          %s973 = smul.addr %s972, 8
          %s974 = scalar_lea.vmem [#allocation2], %s973
          %975 = dma.done %s971, 128
        $region88: #{encoder_layer_forward.5} parent=83 // pred_fallthru
          _
      $region84: #{encoder_layer_forward.5} parent=5 // pred_fallthru
        _
    $region6: #{encoder_layer_forward.5} parent=1 // loop_footer
      %s27 = sadd.s32 1, %s23
    $region7: #{encoder_layer_forward.5} parent=1 // loop_footer_branch
      %22 = sbr.rel target = $region3
    $region8: #{encoder_layer_forward.5} parent=1 // loop_exit
      _
    %976 = vsyncpa [#allocation3], 1
    %s977 = scalar_lea.sflag [#allocation3], 1
    %978 = vsyncpa %s977, 1

// kernel: encoder_layer_forward.4
$region0: #{encoder_layer_forward.4}
  #allocation0 [shape = 'u32[]', space=smem, size = 0x4, offset = 0x4, fixed_abs, tag = 'smem constant byte address 0x4 - core index']
  #allocation1 [shape = 'u32[144,128]{1,0:T(1,128)}', space=vmem, size = 0x12000, scoped, tag = 'internal scratch']
  #allocation2 [shape = 'f32[8,4]{1,0:T(8,128)}', space=vmem, size = 0x1000, scoped, tag = 'scratch operand']
  #allocation3 [shape = 'f32[8,4]{1,0:T(8,128)}', space=vmem, size = 0x1000, scoped, tag = 'scratch operand']
  #allocation4 [shape = 'f32[8,32]{1,0:T(8,128)}', space=vmem, size = 0x1000, scoped, tag = 'scratch operand']
  %s0 = inlined_call_operand.vmem [shape: bf16[3,2,8,32], index: 0, kind: input, shape index: {}, may-alias: {0,1,2}]
  %s1 = inlined_call_operand.vmem [shape: bf16[3,2,8,32], index: 1, kind: input, shape index: {}, may-alias: {0,1,2}]
  %s2 = inlined_call_operand.vmem [shape: bf16[3,2,8,32], index: 2, kind: input, shape index: {}, may-alias: {0,1,2}]
  %s3 = inlined_call_operand.vmem [shape: bf16[2,8,32], index: 3, kind: output, shape index: {}]
  %s4 = sld [smem:[#allocation0]]
  $region53: #{encoder_layer_forward.4} parent=0
    _
  %s6 = ssub.s32 1, %s4
  %s7 = scalar_select 0, %s6, %s4
  loop: start=0, step=1, limit=4
  $region2: #{encoder_layer_forward.4} parent=0 // loop_pre_header
    _
  $region3: #{encoder_layer_forward.4} parent=0 // loop_header
    %s9 = sphi 0, %s13
    %p10 = scmp.ge.s32.totalorder %s9, 4
    %s16 = sphi 0, %s42
    %s17 = sphi 0, %s38
    %s18 = sphi 0, %s34
    %s19 = sphi 0, %s30
    %s20 = sphi 0, %s16
    %s21 = sphi 0, %s17
    %s22 = sphi 0, %s18
    %s23 = sphi 0, %s19
    %s24 = sphi 0, %s20
    %s25 = sphi 0, %s21
    %s26 = sphi 0, %s22
    %s27 = sphi 0, %s23
    %s49 = sphi 0, %s51
    %s52 = sphi 0, %s49
    %s53 = sphi 0, %s52
    %s69 = sphi 0, %s53
    %s79 = sphi 0, %s81
    %s82 = sphi 0, %s79
    %s83 = sphi 0, %s82
    %s99 = sphi 0, %s83
    %s109 = sphi 0, %s111
    %s112 = sphi 0, %s109
    %s113 = sphi 0, %s112
    %s129 = sphi 0, %s113
    %s139 = sphi 0, %s141
    %s142 = sphi 0, %s139
    %s143 = sphi 0, %s142
    %s159 = sphi 0, %s143
  $region4: #{encoder_layer_forward.4} parent=0 // loop_header_branch
    %12 = sbr.rel (%p10) target = $region8
  $region5: #{encoder_layer_forward.4} parent=0 // loop_body
    %s14 = ssub.s32 %s9, 1
    %s15 = ssub.s32 %s9, 2
    %s28 = sadd.s32 1, %s19
    %p29 = scmp.ge.s32.totalorder %s28, 1
    %s30 = scalar_select %p29, 0, %s28
    %s31 = sadd.s32 1, %s18
    %s32 = scalar_select %p29, %s31, %s18
    %p33 = scmp.ge.s32.totalorder %s32, 1
    %s34 = scalar_select %p33, 0, %s32
    %s35 = sadd.s32 1, %s17
    %s36 = scalar_select %p33, %s35, %s17
    %p37 = scmp.ge.s32.totalorder %s36, 1
    %s38 = scalar_select %p37, 0, %s36
    %s39 = sadd.s32 1, %s16
    %s40 = scalar_select %p37, %s39, %s16
    %p41 = scmp.ge.s32.totalorder %s40, 2
    %s42 = scalar_select %p41, 0, %s40
    %s43 = ssub.s32 %s16, %s42
    %s44 = ssub.s32 %s18, %s34
    %s45 = sor.u32 %s43, %s44
    %s46 = ssub.s32 %s17, %s38
    %s47 = sor.u32 %s45, %s46
    %p48 = scmp.eq.s32.totalorder %s47, 0
    %s50 = sadd.s32 %s49, 1
    %s51 = scalar_select %p48, %s49, %s50
    %p54 = pneg %p48
    %p55 = scmp.eq.s32.totalorder %s9, 1
    %p56 = por %p54, %p55
    %p57 = scmp.ne.s32.totalorder %s49, %s52
    %p58 = scmp.eq.s32.totalorder %s9, 0
    %p59 = por %p57, %p58
    %p60 = scmp.ne.s32.totalorder %s49, %s52
    %p61 = scmp.eq.s32.totalorder %s14, 1
    %p62 = por %p60, %p61
    %p63 = scmp.ne.s32.totalorder %s52, %s53
    %p64 = scmp.eq.s32.totalorder %s14, 0
    %p65 = por %p63, %p64
    %p66 = scmp.ne.s32.totalorder %s52, %s53
    %p67 = scmp.eq.s32.totalorder %s15, 1
    %p68 = por %p66, %p67
    %p70 = scmp.ne.s32.totalorder %s53, %s69
    %p71 = scmp.eq.s32.totalorder %s15, 0
    %p72 = por %p70, %p71
    %s73 = ssub.s32 %s16, %s42
    %s74 = ssub.s32 %s19, %s30
    %s75 = sor.u32 %s73, %s74
    %s76 = ssub.s32 %s17, %s38
    %s77 = sor.u32 %s75, %s76
    %p78 = scmp.eq.s32.totalorder %s77, 0
    %s80 = sadd.s32 %s79, 1
    %s81 = scalar_select %p78, %s79, %s80
    %p84 = pneg %p78
    %p85 = scmp.eq.s32.totalorder %s9, 1
    %p86 = por %p84, %p85
    %p87 = scmp.ne.s32.totalorder %s79, %s82
    %p88 = scmp.eq.s32.totalorder %s9, 0
    %p89 = por %p87, %p88
    %p90 = scmp.ne.s32.totalorder %s79, %s82
    %p91 = scmp.eq.s32.totalorder %s14, 1
    %p92 = por %p90, %p91
    %p93 = scmp.ne.s32.totalorder %s82, %s83
    %p94 = scmp.eq.s32.totalorder %s14, 0
    %p95 = por %p93, %p94
    %p96 = scmp.ne.s32.totalorder %s82, %s83
    %p97 = scmp.eq.s32.totalorder %s15, 1
    %p98 = por %p96, %p97
    %p100 = scmp.ne.s32.totalorder %s83, %s99
    %p101 = scmp.eq.s32.totalorder %s15, 0
    %p102 = por %p100, %p101
    %s103 = ssub.s32 %s16, %s42
    %s104 = ssub.s32 %s19, %s30
    %s105 = sor.u32 %s103, %s104
    %s106 = ssub.s32 %s17, %s38
    %s107 = sor.u32 %s105, %s106
    %p108 = scmp.eq.s32.totalorder %s107, 0
    %s110 = sadd.s32 %s109, 1
    %s111 = scalar_select %p108, %s109, %s110
    %p114 = pneg %p108
    %p115 = scmp.eq.s32.totalorder %s9, 1
    %p116 = por %p114, %p115
    %p117 = scmp.ne.s32.totalorder %s109, %s112
    %p118 = scmp.eq.s32.totalorder %s9, 0
    %p119 = por %p117, %p118
    %p120 = scmp.ne.s32.totalorder %s109, %s112
    %p121 = scmp.eq.s32.totalorder %s14, 1
    %p122 = por %p120, %p121
    %p123 = scmp.ne.s32.totalorder %s112, %s113
    %p124 = scmp.eq.s32.totalorder %s14, 0
    %p125 = por %p123, %p124
    %p126 = scmp.ne.s32.totalorder %s112, %s113
    %p127 = scmp.eq.s32.totalorder %s15, 1
    %p128 = por %p126, %p127
    %p130 = scmp.ne.s32.totalorder %s113, %s129
    %p131 = scmp.eq.s32.totalorder %s15, 0
    %p132 = por %p130, %p131
    %s133 = ssub.s32 %s16, %s42
    %s134 = ssub.s32 %s18, %s34
    %s135 = sor.u32 %s133, %s134
    %s136 = ssub.s32 %s17, %s38
    %s137 = sor.u32 %s135, %s136
    %p138 = scmp.eq.s32.totalorder %s137, 0
    %s140 = sadd.s32 %s139, 1
    %s141 = scalar_select %p138, %s139, %s140
    %p144 = pneg %p138
    %p145 = scmp.eq.s32.totalorder %s9, 1
    %p146 = por %p144, %p145
    %p147 = scmp.ne.s32.totalorder %s139, %s142
    %p148 = scmp.eq.s32.totalorder %s9, 0
    %p149 = por %p147, %p148
    %p150 = scmp.ne.s32.totalorder %s139, %s142
    %p151 = scmp.eq.s32.totalorder %s14, 1
    %p152 = por %p150, %p151
    %p153 = scmp.ne.s32.totalorder %s142, %s143
    %p154 = scmp.eq.s32.totalorder %s14, 0
    %p155 = por %p153, %p154
    %p156 = scmp.ne.s32.totalorder %s142, %s143
    %p157 = scmp.eq.s32.totalorder %s15, 1
    %p158 = por %p156, %p157
    %p160 = scmp.ne.s32.totalorder %s143, %s159
    %p161 = scmp.eq.s32.totalorder %s15, 0
    %p162 = por %p160, %p161
    %p163 = scmp.le.s32.totalorder 1, %s9
    %p164 = scmp.lt.s32.totalorder %s9, 3
    %p165 = pnand %p163, %p164
    %p166 = pneg %p165
    // Predicated region
    $region9: #{encoder_layer_forward.4} parent=5 // pred_check
      _
    $region10: #{encoder_layer_forward.4} parent=5 // pred_check_branch
      %168 = sbr.rel (%p165) target = $region12
    $region11: #{encoder_layer_forward.4} parent=5 // pred_region
      %s169 = ssub.s32 %s9, 1
    $region12: #{encoder_layer_forward.4} parent=5 // pred_fallthru
      _
    %p170 = scmp.lt.s32.totalorder %s9, 2
    // Predicated region
    $region13: #{encoder_layer_forward.4} parent=5 // pred_check
      %p171 = pneg %p170
    $region14: #{encoder_layer_forward.4} parent=5 // pred_check_branch
      %173 = sbr.rel (%p171) target = $region16
    $region15: #{encoder_layer_forward.4} parent=5 // pred_region
      // Predicated region
      $region17: #{encoder_layer_forward.4} parent=15 // pred_check
        %p174 = pneg %p59
      $region18: #{encoder_layer_forward.4} parent=15 // pred_check_branch
        %176 = sbr.rel (%p174) target = $region20
      $region19: #{encoder_layer_forward.4} parent=15 // pred_region
        %p177 = scmp.lt.s32.totalorder %s16, 1
        %s178 = scalar_select %p177, %s16, 1
        %p179 = scmp.lt.s32.totalorder %s18, 0
        %s180 = scalar_select %p179, %s18, 0
        %p181 = scmp.lt.s32.totalorder %s17, 0
        %s182 = scalar_select %p181, %s17, 0
        %s183 = sadd.s32 %s182, %s180
        %s184 = sadd.s32 %s183, %s178
        %s185 = smul.addr %s184, 4
        %s186 = scalar_lea.vmem %s0, %s185
      $region20: #{encoder_layer_forward.4} parent=15 // pred_fallthru
        _
      // Predicated region
      $region21: #{encoder_layer_forward.4} parent=15 // pred_check
        %p187 = pneg %p89
      $region22: #{encoder_layer_forward.4} parent=15 // pred_check_branch
        %189 = sbr.rel (%p187) target = $region24
      $region23: #{encoder_layer_forward.4} parent=15 // pred_region
        %p190 = scmp.lt.s32.totalorder %s16, 1
        %s191 = scalar_select %p190, %s16, 1
        %p192 = scmp.lt.s32.totalorder %s19, 0
        %s193 = scalar_select %p192, %s19, 0
        %p194 = scmp.lt.s32.totalorder %s17, 0
        %s195 = scalar_select %p194, %s17, 0
        %s196 = sadd.s32 %s195, %s193
        %s197 = sadd.s32 %s196, %s191
        %s198 = sadd.s32 %s197, 2
        %s199 = smul.addr %s198, 4
        %s200 = scalar_lea.vmem %s1, %s199
      $region24: #{encoder_layer_forward.4} parent=15 // pred_fallthru
        _
      // Predicated region
      $region25: #{encoder_layer_forward.4} parent=15 // pred_check
        %p201 = pneg %p119
      $region26: #{encoder_layer_forward.4} parent=15 // pred_check_branch
        %203 = sbr.rel (%p201) target = $region28
      $region27: #{encoder_layer_forward.4} parent=15 // pred_region
        %p204 = scmp.lt.s32.totalorder %s16, 1
        %s205 = scalar_select %p204, %s16, 1
        %p206 = scmp.lt.s32.totalorder %s19, 0
        %s207 = scalar_select %p206, %s19, 0
        %p208 = scmp.lt.s32.totalorder %s17, 0
        %s209 = scalar_select %p208, %s17, 0
        %s210 = sadd.s32 %s209, %s207
        %s211 = sadd.s32 %s210, %s205
        %s212 = sadd.s32 %s211, 4
        %s213 = smul.addr %s212, 4
        %s214 = scalar_lea.vmem %s2, %s213
      $region28: #{encoder_layer_forward.4} parent=15 // pred_fallthru
        _
    $region16: #{encoder_layer_forward.4} parent=5 // pred_fallthru
      _
    %p215 = scmp.le.s32.totalorder 1, %s9
    %p216 = scmp.lt.s32.totalorder %s9, 3
    %p217 = pnand %p215, %p216
    %p218 = pneg %p217
    // Predicated region
    $region29: #{encoder_layer_forward.4} parent=5 // pred_check
      _
    $region30: #{encoder_layer_forward.4} parent=5 // pred_check_branch
      %220 = sbr.rel (%p217) target = $region32
    $region31: #{encoder_layer_forward.4} parent=5 // pred_region
      %s221 = ssub.s32 %s9, 1
      %p222 = scmp.lt.s32.totalorder %s20, 1
      %s223 = scalar_select %p222, %s20, 1
      %p224 = scmp.lt.s32.totalorder %s22, 0
      %s225 = scalar_select %p224, %s22, 0
      %p226 = scmp.lt.s32.totalorder %s21, 0
      %s227 = scalar_select %p226, %s21, 0
      %s228 = sadd.s32 %s227, %s225
      %s229 = sadd.s32 %s228, %s223
      %s230 = smul.addr %s229, 4
      %s231 = scalar_lea.vmem %s0, %s230
      %p232 = pneg %p65
      %p233 = pneg %p62
      %p234 = scmp.lt.s32.totalorder %s20, 1
      %s235 = scalar_select %p234, %s20, 1
      %p236 = scmp.lt.s32.totalorder %s23, 0
      %s237 = scalar_select %p236, %s23, 0
      %p238 = scmp.lt.s32.totalorder %s21, 0
      %s239 = scalar_select %p238, %s21, 0
      %s240 = sadd.s32 %s239, %s237
      %s241 = sadd.s32 %s240, %s235
      %s242 = sadd.s32 %s241, 2
      %s243 = smul.addr %s242, 4
      %s244 = scalar_lea.vmem %s1, %s243
      %p245 = pneg %p95
      %p246 = pneg %p92
      %p247 = scmp.lt.s32.totalorder %s20, 1
      %s248 = scalar_select %p247, %s20, 1
      %p249 = scmp.lt.s32.totalorder %s23, 0
      %s250 = scalar_select %p249, %s23, 0
      %p251 = scmp.lt.s32.totalorder %s21, 0
      %s252 = scalar_select %p251, %s21, 0
      %s253 = sadd.s32 %s252, %s250
      %s254 = sadd.s32 %s253, %s248
      %s255 = sadd.s32 %s254, 4
      %s256 = smul.addr %s255, 4
      %s257 = scalar_lea.vmem %s2, %s256
      %p258 = pneg %p125
      %p259 = pneg %p122
      %p260 = pneg %p155
      %p261 = pneg %p152
      %p262 = scmp.lt.s32.totalorder %s20, 1
      %s263 = scalar_select %p262, %s20, 1
      %p264 = scmp.lt.s32.totalorder %s22, 0
      %s265 = scalar_select %p264, %s22, 0
      %p266 = scmp.lt.s32.totalorder %s21, 0
      %s267 = scalar_select %p266, %s21, 0
      %s268 = sadd.s32 %s267, %s265
      %s269 = sadd.s32 %s268, %s263
      %s270 = smul.addr %s269, 4
      %s271 = scalar_lea.vmem %s3, %s270
      %p272 = scmp.lt.s32.totalorder %s20, 1
      %s273 = scalar_select %p272, %s20, 1
      %p274 = scmp.lt.s32.totalorder %s22, 0
      %s275 = scalar_select %p274, %s22, 0
      %p276 = scmp.lt.s32.totalorder %s21, 0
      %s277 = scalar_select %p276, %s21, 0
      %s278 = sadd.s32 %s277, %s275
      %s279 = sadd.s32 %s278, %s273
      %s280 = smul.addr %s279, 4
      %s281 = scalar_lea.vmem %s0, %s280
      %p282 = scmp.lt.s32.totalorder %s20, 1
      %s283 = scalar_select %p282, %s20, 1
      %p284 = scmp.lt.s32.totalorder %s23, 0
      %s285 = scalar_select %p284, %s23, 0
      %p286 = scmp.lt.s32.totalorder %s21, 0
      %s287 = scalar_select %p286, %s21, 0
      %s288 = sadd.s32 %s287, %s285
      %s289 = sadd.s32 %s288, %s283
      %s290 = sadd.s32 %s289, 2
      %s291 = smul.addr %s290, 4
      %s292 = scalar_lea.vmem %s1, %s291
      %p293 = scmp.lt.s32.totalorder %s20, 1
      %s294 = scalar_select %p293, %s20, 1
      %p295 = scmp.lt.s32.totalorder %s23, 0
      %s296 = scalar_select %p295, %s23, 0
      %p297 = scmp.lt.s32.totalorder %s21, 0
      %s298 = scalar_select %p297, %s21, 0
      %s299 = sadd.s32 %s298, %s296
      %s300 = sadd.s32 %s299, %s294
      %s301 = sadd.s32 %s300, 4
      %s302 = smul.addr %s301, 4
      %s303 = scalar_lea.vmem %s2, %s302
      %p304 = scmp.lt.s32.totalorder %s20, 1
      %s305 = scalar_select %p304, %s20, 1
      %p306 = scmp.lt.s32.totalorder %s22, 0
      %s307 = scalar_select %p306, %s22, 0
      %p308 = scmp.lt.s32.totalorder %s21, 0
      %s309 = scalar_select %p308, %s21, 0
      %s310 = sadd.s32 %s309, %s307
      %s311 = sadd.s32 %s310, %s305
      %s312 = smul.addr %s311, 4
      %s313 = scalar_lea.vmem %s3, %s312
      %p315 = scmp.eq.s32.totalorder %s23, 0
      // Predicated region
      $region33: #{encoder_layer_forward.4} parent=31 // pred_check
        %p316 = pneg %p315
      $region34: #{encoder_layer_forward.4} parent=31 // pred_check_branch
        %318 = sbr.rel (%p316) target = $region36
      $region35: #{encoder_layer_forward.4} parent=31 // pred_region
        %vm319 = vcmask 31744
        %320 = vst.msk [vmem:[#allocation2] sm:$0xff] %vm319, -inf
        %321 = vst.msk [vmem:[#allocation3] sm:$0xff] %vm319, 0.0
        %vm322 = vcmask 261120
        %323 = vst.msk [vmem:[#allocation4] sm:$0xff] %vm322, 0.0
      $region36: #{encoder_layer_forward.4} parent=31 // pred_fallthru
        _
      %v324 = vld [vmem:[%s281] sm:$0xf]
      %v325 = vld [vmem:[%s292] sm:$0xf]
      %v326 = vld [vmem:[%s303] sm:$0xf]
      %vm327 = vcmask 64512
      %v329 = vsel %vm327, %v324, 0
      %v332 = vsel %vm327, %v325, 0
      %334 = vmatprep.subr.bf16.mxu0 0
      %335 = vmatpush1.bf16.xpose.msra.mxu0 %v332
      %336 = vmatprep.subr.bf16.mxu0 0
      %337 = vmatpush1.bf16.xpose.msra.mxu0 0
      %338 = vmatprep.subr.bf16.mxu0 0
      %339 = vmatpush1.bf16.xpose.msra.mxu0 0
      %340 = vmatprep.subr.bf16.mxu0 0
      %341 = vmatpush1.bf16.xpose.msra.mxu0 0
      %342 = vmatprep.subr.bf16.mxu0 0
      %343 = vmatpush1.bf16.xpose.msra.mxu0 0
      %344 = vmatprep.subr.bf16.mxu0 0
      %345 = vmatpush1.bf16.xpose.msra.mxu0 0
      %346 = vmatprep.subr.bf16.mxu0 0
      %347 = vmatpush1.bf16.xpose.msra.mxu0 0
      %348 = vmatprep.subr.bf16.mxu0 0
      %349 = vmatpush1.bf16.xpose.msra.mxu0 0
      %350 = vmatprep.subr.bf16.mxu0 0
      %351 = vmatpush1.bf16.xpose.msra.mxu0 0
      %352 = vmatprep.subr.bf16.mxu0 0
      %353 = vmatpush1.bf16.xpose.msra.mxu0 0
      %354 = vmatprep.subr.bf16.mxu0 0
      %355 = vmatpush1.bf16.xpose.msra.mxu0 0
      %356 = vmatprep.subr.bf16.mxu0 0
      %357 = vmatpush1.bf16.xpose.msra.mxu0 0
      %358 = vmatprep.subr.bf16.mxu0 0
      %359 = vmatpush1.bf16.xpose.msra.mxu0 0
      %360 = vmatprep.subr.bf16.mxu0 0
      %361 = vmatpush1.bf16.xpose.msra.mxu0 0
      %362 = vmatprep.subr.bf16.mxu0 0
      %363 = vmatpush1.bf16.xpose.msra.mxu0 0
      %364 = vmatprep.subr.bf16.mxu0 0
      %365 = vmatpush1.bf16.xpose.msra.mxu0 0
      %366 = vmatprep.mubr.bf16.mxu0 0
      %367 = vmatmul.mubr.bf16.gmra.mrb[0].mxu0 %v329
      %v368 = vpop.f32.mrb[0].mxu0
      %v369 = vadd.f32 0.0, %v368
      %v370 = vpop.f32.mrb[0].mxu0
      %v371 = vpop.f32.mrb[0].mxu0
      %v372 = vpop.f32.mrb[0].mxu0
      %373 = vdwg.mxu0
      %v374 = vmul.f32 %v369, 0.35355338
      %v375 = vld [vmem:[#allocation2] sm:$0xff]
      %v376 = vsel %vm327, %v374, -inf
      %377 = vmax.xlane.f32.xlu0 %v376
      %v378 = vpop.xlane.xlu0 %377
      %v379 = vmax.f32 %v375, %v378
      %v380 = vsub.f32 %v375, %v379
      %v381 = vmul.f32 %v380, 1.442695
      %v382 = vpow.pop %v381
      %384 = vset.pattern.permute.xlu0 0
      %385 = vperm.xlu0 %384, %v379
      %v386 = vpop.permute.xlu0 %385
      %v388 = vsub.f32 %v374, %v386
      %v389 = vmul.f32 %v388, 1.442695
      %v390 = vpow.pop %v389
      %v391 = vld [vmem:[#allocation3] sm:$0xff]
      %v392 = vmul.f32 %v382, %v391
      %v393 = vsel %vm327, %v390, 0.0
      %394 = vadd.xlane.f32.xlu0 %v393
      %v395 = vpop.xlane.xlu0 %394
      %v396 = vadd.f32 %v392, %v395
      %vm397 = vcmask 7168
      %398 = vst.msk [vmem:[#allocation3] sm:$0xff] %vm397, %v396
      %v399 = vpack.c.bf16 %v390, %v390
      %v401 = vsel %vm327, %v399, 0
      %vm403 = vcmask 1043456
      %v405 = vsel %vm403, %v326, 0
      %407 = vmatprep.subr.bf16.mxu0 0
      %408 = vmatpush1.bf16.msra.mxu0 %v405
      %409 = vmatprep.subr.bf16.mxu0 0
      %410 = vmatpush1.bf16.msra.mxu0 0
      %411 = vmatprep.subr.bf16.mxu0 0
      %412 = vmatpush1.bf16.msra.mxu0 0
      %413 = vmatprep.subr.bf16.mxu0 0
      %414 = vmatpush1.bf16.msra.mxu0 0
      %415 = vmatprep.subr.bf16.mxu0 0
      %416 = vmatpush1.bf16.msra.mxu0 0
      %417 = vmatprep.subr.bf16.mxu0 0
      %418 = vmatpush1.bf16.msra.mxu0 0
      %419 = vmatprep.subr.bf16.mxu0 0
      %420 = vmatpush1.bf16.msra.mxu0 0
      %421 = vmatprep.subr.bf16.mxu0 0
      %422 = vmatpush1.bf16.msra.mxu0 0
      %423 = vmatprep.subr.bf16.mxu0 0
      %424 = vmatpush1.bf16.msra.mxu0 0
      %425 = vmatprep.subr.bf16.mxu0 0
      %426 = vmatpush1.bf16.msra.mxu0 0
      %427 = vmatprep.subr.bf16.mxu0 0
      %428 = vmatpush1.bf16.msra.mxu0 0
      %429 = vmatprep.subr.bf16.mxu0 0
      %430 = vmatpush1.bf16.msra.mxu0 0
      %431 = vmatprep.subr.bf16.mxu0 0
      %432 = vmatpush1.bf16.msra.mxu0 0
      %433 = vmatprep.subr.bf16.mxu0 0
      %434 = vmatpush1.bf16.msra.mxu0 0
      %435 = vmatprep.subr.bf16.mxu0 0
      %436 = vmatpush1.bf16.msra.mxu0 0
      %437 = vmatprep.subr.bf16.mxu0 0
      %438 = vmatpush1.bf16.msra.mxu0 0
      %439 = vmatprep.mubr.bf16.mxu0 0
      %440 = vmatmul.mubr.bf16.gmra.mrb[0].mxu0 %v401
      %v441 = vpop.f32.mrb[0].mxu0
      %v442 = vadd.f32 0.0, %v441
      %v443 = vpop.f32.mrb[0].mxu0
      %v444 = vpop.f32.mrb[0].mxu0
      %v445 = vpop.f32.mrb[0].mxu0
      %446 = vdwg.mxu0
      %v447 = vld [vmem:[#allocation4] sm:$0xff]
      %449 = vset.pattern.permute.xlu0 0
      %450 = vperm.xlu0 %449, %v382
      %v451 = vpop.permute.xlu0 %450
      %v453 = vmul.f32 %v451, %v447
      %v454 = vadd.f32 %v453, %v442
      %455 = vst.msk [vmem:[#allocation4] sm:$0xff] %vm327, %v454
      %456 = vst.msk [vmem:[#allocation2] sm:$0xff] %vm397, %v379
      %v458 = vunpack.c.l.b16 %v324
      %v459 = vpack.c.b16 %v458, %v458
      %460 = vrot.lane.b32.xlu0 %v459, 120
      %v461 = vpop.permute.xlu0 %460
      %v463 = vunpack.c.l.b16 %v325
      %v464 = vpack.c.b16 %v463, %v463
      %465 = vrot.lane.b32.xlu0 %v464, 120
      %v466 = vpop.permute.xlu0 %465
      %v468 = vsel %vm327, %v461, 0
      %v471 = vsel %vm327, %v466, 0
      %473 = vmatprep.subr.bf16.mxu0 0
      %474 = vmatpush1.bf16.xpose.msra.mxu0 %v471
      %475 = vmatprep.subr.bf16.mxu0 0
      %476 = vmatpush1.bf16.xpose.msra.mxu0 0
      %477 = vmatprep.subr.bf16.mxu0 0
      %478 = vmatpush1.bf16.xpose.msra.mxu0 0
      %479 = vmatprep.subr.bf16.mxu0 0
      %480 = vmatpush1.bf16.xpose.msra.mxu0 0
      %481 = vmatprep.subr.bf16.mxu0 0
      %482 = vmatpush1.bf16.xpose.msra.mxu0 0
      %483 = vmatprep.subr.bf16.mxu0 0
      %484 = vmatpush1.bf16.xpose.msra.mxu0 0
      %485 = vmatprep.subr.bf16.mxu0 0
      %486 = vmatpush1.bf16.xpose.msra.mxu0 0
      %487 = vmatprep.subr.bf16.mxu0 0
      %488 = vmatpush1.bf16.xpose.msra.mxu0 0
      %489 = vmatprep.subr.bf16.mxu0 0
      %490 = vmatpush1.bf16.xpose.msra.mxu0 0
      %491 = vmatprep.subr.bf16.mxu0 0
      %492 = vmatpush1.bf16.xpose.msra.mxu0 0
      %493 = vmatprep.subr.bf16.mxu0 0
      %494 = vmatpush1.bf16.xpose.msra.mxu0 0
      %495 = vmatprep.subr.bf16.mxu0 0
      %496 = vmatpush1.bf16.xpose.msra.mxu0 0
      %497 = vmatprep.subr.bf16.mxu0 0
      %498 = vmatpush1.bf16.xpose.msra.mxu0 0
      %499 = vmatprep.subr.bf16.mxu0 0
      %500 = vmatpush1.bf16.xpose.msra.mxu0 0
      %501 = vmatprep.subr.bf16.mxu0 0
      %502 = vmatpush1.bf16.xpose.msra.mxu0 0
      %503 = vmatprep.subr.bf16.mxu0 0
      %504 = vmatpush1.bf16.xpose.msra.mxu0 0
      %505 = vmatprep.mubr.bf16.mxu0 0
      %506 = vmatmul.mubr.bf16.gmra.mrb[0].mxu0 %v468
      %v507 = vpop.f32.mrb[0].mxu0
      %v508 = vadd.f32 0.0, %v507
      %v509 = vpop.f32.mrb[0].mxu0
      %v510 = vpop.f32.mrb[0].mxu0
      %v511 = vpop.f32.mrb[0].mxu0
      %512 = vdwg.mxu0
      %v513 = vmul.f32 %v508, 0.35355338
      %v514 = vld [vmem:[#allocation2] sm:$0xff]
      %v515 = vsel %vm327, %v513, -inf
      %516 = vmax.xlane.f32.xlu0 %v515
      %v517 = vpop.xlane.xlu0 %516
      %v518 = vmax.f32 %v514, %v517
      %v519 = vsub.f32 %v514, %v518
      %v520 = vmul.f32 %v519, 1.442695
      %v521 = vpow.pop %v520
      %523 = vset.pattern.permute.xlu0 1
      %524 = vperm.xlu0 %523, %v518
      %v525 = vpop.permute.xlu0 %524
      %v527 = vsub.f32 %v513, %v525
      %v528 = vmul.f32 %v527, 1.442695
      %v529 = vpow.pop %v528
      %v530 = vld [vmem:[#allocation3] sm:$0xff]
      %v531 = vmul.f32 %v521, %v530
      %v532 = vsel %vm327, %v529, 0.0
      %533 = vadd.xlane.f32.xlu0 %v532
      %v534 = vpop.xlane.xlu0 %533
      %v535 = vadd.f32 %v531, %v534
      %vm536 = vcmask 15368
      %537 = vst.msk [vmem:[#allocation3] sm:$0xff] %vm536, %v535
      %v538 = vpack.c.bf16 %v529, %v529
      %v540 = vunpack.c.l.b16 %v326
      %v541 = vpack.c.b16 %v540, %v540
      %542 = vrot.lane.b32.xlu0 %v541, 120
      %v543 = vpop.permute.xlu0 %542
      %v545 = vsel %vm327, %v538, 0
      %v548 = vsel %vm403, %v543, 0
      %550 = vmatprep.subr.bf16.mxu0 0
      %551 = vmatpush1.bf16.msra.mxu0 %v548
      %552 = vmatprep.subr.bf16.mxu0 0
      %553 = vmatpush1.bf16.msra.mxu0 0
      %554 = vmatprep.subr.bf16.mxu0 0
      %555 = vmatpush1.bf16.msra.mxu0 0
      %556 = vmatprep.subr.bf16.mxu0 0
      %557 = vmatpush1.bf16.msra.mxu0 0
      %558 = vmatprep.subr.bf16.mxu0 0
      %559 = vmatpush1.bf16.msra.mxu0 0
      %560 = vmatprep.subr.bf16.mxu0 0
      %561 = vmatpush1.bf16.msra.mxu0 0
      %562 = vmatprep.subr.bf16.mxu0 0
      %563 = vmatpush1.bf16.msra.mxu0 0
      %564 = vmatprep.subr.bf16.mxu0 0
      %565 = vmatpush1.bf16.msra.mxu0 0
      %566 = vmatprep.subr.bf16.mxu0 0
      %567 = vmatpush1.bf16.msra.mxu0 0
      %568 = vmatprep.subr.bf16.mxu0 0
      %569 = vmatpush1.bf16.msra.mxu0 0
      %570 = vmatprep.subr.bf16.mxu0 0
      %571 = vmatpush1.bf16.msra.mxu0 0
      %572 = vmatprep.subr.bf16.mxu0 0
      %573 = vmatpush1.bf16.msra.mxu0 0
      %574 = vmatprep.subr.bf16.mxu0 0
      %575 = vmatpush1.bf16.msra.mxu0 0
      %576 = vmatprep.subr.bf16.mxu0 0
      %577 = vmatpush1.bf16.msra.mxu0 0
      %578 = vmatprep.subr.bf16.mxu0 0
      %579 = vmatpush1.bf16.msra.mxu0 0
      %580 = vmatprep.subr.bf16.mxu0 0
      %581 = vmatpush1.bf16.msra.mxu0 0
      %582 = vmatprep.mubr.bf16.mxu0 0
      %583 = vmatmul.mubr.bf16.gmra.mrb[0].mxu0 %v545
      %v584 = vpop.f32.mrb[0].mxu0
      %v585 = vadd.f32 0.0, %v584
      %v586 = vpop.f32.mrb[0].mxu0
      %v587 = vpop.f32.mrb[0].mxu0
      %v588 = vpop.f32.mrb[0].mxu0
      %589 = vdwg.mxu0
      %v590 = vld [vmem:[#allocation4] sm:$0xff]
      %592 = vset.pattern.permute.xlu0 1
      %593 = vperm.xlu0 %592, %v521
      %v594 = vpop.permute.xlu0 %593
      %v596 = vmul.f32 %v594, %v590
      %598 = vrot.lane.b32.xlu0 %v585, 8
      %v599 = vpop.permute.xlu0 %598
      %v601 = vadd.f32 %v596, %v599
      %vm602 = vcmask 130112
      %603 = vst.msk [vmem:[#allocation4] sm:$0xff] %vm602, %v601
      %604 = vst.msk [vmem:[#allocation2] sm:$0xff] %vm536, %v518
      %605 = vrot.lane.b32.xlu0 %v459, 112
      %v606 = vpop.permute.xlu0 %605
      %607 = vrot.lane.b32.xlu0 %v464, 112
      %v608 = vpop.permute.xlu0 %607
      %v610 = vsel %vm327, %v606, 0
      %v613 = vsel %vm327, %v608, 0
      %615 = vmatprep.subr.bf16.mxu0 0
      %616 = vmatpush1.bf16.xpose.msra.mxu0 %v613
      %617 = vmatprep.subr.bf16.mxu0 0
      %618 = vmatpush1.bf16.xpose.msra.mxu0 0
      %619 = vmatprep.subr.bf16.mxu0 0
      %620 = vmatpush1.bf16.xpose.msra.mxu0 0
      %621 = vmatprep.subr.bf16.mxu0 0
      %622 = vmatpush1.bf16.xpose.msra.mxu0 0
      %623 = vmatprep.subr.bf16.mxu0 0
      %624 = vmatpush1.bf16.xpose.msra.mxu0 0
      %625 = vmatprep.subr.bf16.mxu0 0
      %626 = vmatpush1.bf16.xpose.msra.mxu0 0
      %627 = vmatprep.subr.bf16.mxu0 0
      %628 = vmatpush1.bf16.xpose.msra.mxu0 0
      %629 = vmatprep.subr.bf16.mxu0 0
      %630 = vmatpush1.bf16.xpose.msra.mxu0 0
      %631 = vmatprep.subr.bf16.mxu0 0
      %632 = vmatpush1.bf16.xpose.msra.mxu0 0
      %633 = vmatprep.subr.bf16.mxu0 0
      %634 = vmatpush1.bf16.xpose.msra.mxu0 0
      %635 = vmatprep.subr.bf16.mxu0 0
      %636 = vmatpush1.bf16.xpose.msra.mxu0 0
      %637 = vmatprep.subr.bf16.mxu0 0
      %638 = vmatpush1.bf16.xpose.msra.mxu0 0
      %639 = vmatprep.subr.bf16.mxu0 0
      %640 = vmatpush1.bf16.xpose.msra.mxu0 0
      %641 = vmatprep.subr.bf16.mxu0 0
      %642 = vmatpush1.bf16.xpose.msra.mxu0 0
      %643 = vmatprep.subr.bf16.mxu0 0
      %644 = vmatpush1.bf16.xpose.msra.mxu0 0
      %645 = vmatprep.subr.bf16.mxu0 0
      %646 = vmatpush1.bf16.xpose.msra.mxu0 0
      %647 = vmatprep.mubr.bf16.mxu0 0
      %648 = vmatmul.mubr.bf16.gmra.mrb[0].mxu0 %v610
      %v649 = vpop.f32.mrb[0].mxu0
      %v650 = vadd.f32 0.0, %v649
      %v651 = vpop.f32.mrb[0].mxu0
      %v652 = vpop.f32.mrb[0].mxu0
      %v653 = vpop.f32.mrb[0].mxu0
      %654 = vdwg.mxu0
      %v655 = vmul.f32 %v650, 0.35355338
      %v656 = vld [vmem:[#allocation2] sm:$0xff]
      %v657 = vsel %vm327, %v655, -inf
      %658 = vmax.xlane.f32.xlu0 %v657
      %v659 = vpop.xlane.xlu0 %658
      %v660 = vmax.f32 %v656, %v659
      %v661 = vsub.f32 %v656, %v660
      %v662 = vmul.f32 %v661, 1.442695
      %v663 = vpow.pop %v662
      %665 = vset.pattern.permute.xlu0 2
      %666 = vperm.xlu0 %665, %v660
      %v667 = vpop.permute.xlu0 %666
      %v669 = vsub.f32 %v655, %v667
      %v670 = vmul.f32 %v669, 1.442695
      %v671 = vpow.pop %v670
      %v672 = vld [vmem:[#allocation3] sm:$0xff]
      %v673 = vmul.f32 %v663, %v672
      %v674 = vsel %vm327, %v671, 0.0
      %675 = vadd.xlane.f32.xlu0 %v674
      %v676 = vpop.xlane.xlu0 %675
      %v677 = vadd.f32 %v673, %v676
      %vm678 = vcmask 23568
      %679 = vst.msk [vmem:[#allocation3] sm:$0xff] %vm678, %v677
      %v680 = vpack.c.bf16 %v671, %v671
      %681 = vrot.lane.b32.xlu0 %v541, 112
      %v682 = vpop.permute.xlu0 %681
      %v684 = vsel %vm327, %v680, 0
      %v687 = vsel %vm403, %v682, 0
      %689 = vmatprep.subr.bf16.mxu0 0
      %690 = vmatpush1.bf16.msra.mxu0 %v687
      %691 = vmatprep.subr.bf16.mxu0 0
      %692 = vmatpush1.bf16.msra.mxu0 0
      %693 = vmatprep.subr.bf16.mxu0 0
      %694 = vmatpush1.bf16.msra.mxu0 0
      %695 = vmatprep.subr.bf16.mxu0 0
      %696 = vmatpush1.bf16.msra.mxu0 0
      %697 = vmatprep.subr.bf16.mxu0 0
      %698 = vmatpush1.bf16.msra.mxu0 0
      %699 = vmatprep.subr.bf16.mxu0 0
      %700 = vmatpush1.bf16.msra.mxu0 0
      %701 = vmatprep.subr.bf16.mxu0 0
      %702 = vmatpush1.bf16.msra.mxu0 0
      %703 = vmatprep.subr.bf16.mxu0 0
      %704 = vmatpush1.bf16.msra.mxu0 0
      %705 = vmatprep.subr.bf16.mxu0 0
      %706 = vmatpush1.bf16.msra.mxu0 0
      %707 = vmatprep.subr.bf16.mxu0 0
      %708 = vmatpush1.bf16.msra.mxu0 0
      %709 = vmatprep.subr.bf16.mxu0 0
      %710 = vmatpush1.bf16.msra.mxu0 0
      %711 = vmatprep.subr.bf16.mxu0 0
      %712 = vmatpush1.bf16.msra.mxu0 0
      %713 = vmatprep.subr.bf16.mxu0 0
      %714 = vmatpush1.bf16.msra.mxu0 0
      %715 = vmatprep.subr.bf16.mxu0 0
      %716 = vmatpush1.bf16.msra.mxu0 0
      %717 = vmatprep.subr.bf16.mxu0 0
      %718 = vmatpush1.bf16.msra.mxu0 0
      %719 = vmatprep.subr.bf16.mxu0 0
      %720 = vmatpush1.bf16.msra.mxu0 0
      %721 = vmatprep.mubr.bf16.mxu0 0
      %722 = vmatmul.mubr.bf16.gmra.mrb[0].mxu0 %v684
      %v723 = vpop.f32.mrb[0].mxu0
      %v724 = vadd.f32 0.0, %v723
      %v725 = vpop.f32.mrb[0].mxu0
      %v726 = vpop.f32.mrb[0].mxu0
      %v727 = vpop.f32.mrb[0].mxu0
      %728 = vdwg.mxu0
      %v729 = vld [vmem:[#allocation4] sm:$0xff]
      %731 = vset.pattern.permute.xlu0 2
      %732 = vperm.xlu0 %731, %v663
      %v733 = vpop.permute.xlu0 %732
      %v735 = vmul.f32 %v733, %v729
      %737 = vrot.lane.b32.xlu0 %v724, 16
      %v738 = vpop.permute.xlu0 %737
      %v740 = vadd.f32 %v735, %v738
      %vm741 = vcmask 195712
      %742 = vst.msk [vmem:[#allocation4] sm:$0xff] %vm741, %v740
      %743 = vst.msk [vmem:[#allocation2] sm:$0xff] %vm678, %v660
      %744 = vrot.lane.b32.xlu0 %v459, 104
      %v745 = vpop.permute.xlu0 %744
      %746 = vrot.lane.b32.xlu0 %v464, 104
      %v747 = vpop.permute.xlu0 %746
      %v749 = vsel %vm327, %v745, 0
      %v752 = vsel %vm327, %v747, 0
      %754 = vmatprep.subr.bf16.mxu0 0
      %755 = vmatpush1.bf16.xpose.msra.mxu0 %v752
      %756 = vmatprep.subr.bf16.mxu0 0
      %757 = vmatpush1.bf16.xpose.msra.mxu0 0
      %758 = vmatprep.subr.bf16.mxu0 0
      %759 = vmatpush1.bf16.xpose.msra.mxu0 0
      %760 = vmatprep.subr.bf16.mxu0 0
      %761 = vmatpush1.bf16.xpose.msra.mxu0 0
      %762 = vmatprep.subr.bf16.mxu0 0
      %763 = vmatpush1.bf16.xpose.msra.mxu0 0
      %764 = vmatprep.subr.bf16.mxu0 0
      %765 = vmatpush1.bf16.xpose.msra.mxu0 0
      %766 = vmatprep.subr.bf16.mxu0 0
      %767 = vmatpush1.bf16.xpose.msra.mxu0 0
      %768 = vmatprep.subr.bf16.mxu0 0
      %769 = vmatpush1.bf16.xpose.msra.mxu0 0
      %770 = vmatprep.subr.bf16.mxu0 0
      %771 = vmatpush1.bf16.xpose.msra.mxu0 0
      %772 = vmatprep.subr.bf16.mxu0 0
      %773 = vmatpush1.bf16.xpose.msra.mxu0 0
      %774 = vmatprep.subr.bf16.mxu0 0
      %775 = vmatpush1.bf16.xpose.msra.mxu0 0
      %776 = vmatprep.subr.bf16.mxu0 0
      %777 = vmatpush1.bf16.xpose.msra.mxu0 0
      %778 = vmatprep.subr.bf16.mxu0 0
      %779 = vmatpush1.bf16.xpose.msra.mxu0 0
      %780 = vmatprep.subr.bf16.mxu0 0
      %781 = vmatpush1.bf16.xpose.msra.mxu0 0
      %782 = vmatprep.subr.bf16.mxu0 0
      %783 = vmatpush1.bf16.xpose.msra.mxu0 0
      %784 = vmatprep.subr.bf16.mxu0 0
      %785 = vmatpush1.bf16.xpose.msra.mxu0 0
      %786 = vmatprep.mubr.bf16.mxu0 0
      %787 = vmatmul.mubr.bf16.gmra.mrb[0].mxu0 %v749
      %v788 = vpop.f32.mrb[0].mxu0
      %v789 = vadd.f32 0.0, %v788
      %v790 = vpop.f32.mrb[0].mxu0
      %v791 = vpop.f32.mrb[0].mxu0
      %v792 = vpop.f32.mrb[0].mxu0
      %793 = vdwg.mxu0
      %v794 = vmul.f32 %v789, 0.35355338
      %v795 = vld [vmem:[#allocation2] sm:$0xff]
      %v796 = vsel %vm327, %v794, -inf
      %797 = vmax.xlane.f32.xlu0 %v796
      %v798 = vpop.xlane.xlu0 %797
      %v799 = vmax.f32 %v795, %v798
      %v800 = vsub.f32 %v795, %v799
      %v801 = vmul.f32 %v800, 1.442695
      %v802 = vpow.pop %v801
      %804 = vset.pattern.permute.xlu0 3
      %805 = vperm.xlu0 %804, %v799
      %v806 = vpop.permute.xlu0 %805
      %v808 = vsub.f32 %v794, %v806
      %v809 = vmul.f32 %v808, 1.442695
      %v810 = vpow.pop %v809
      %v811 = vld [vmem:[#allocation3] sm:$0xff]
      %v812 = vmul.f32 %v802, %v811
      %v813 = vsel %vm327, %v810, 0.0
      %814 = vadd.xlane.f32.xlu0 %v813
      %v815 = vpop.xlane.xlu0 %814
      %v816 = vadd.f32 %v812, %v815
      %vm817 = vcmask 31768
      %818 = vst.msk [vmem:[#allocation3] sm:$0xff] %vm817, %v816
      %v819 = vpack.c.bf16 %v810, %v810
      %820 = vrot.lane.b32.xlu0 %v541, 104
      %v821 = vpop.permute.xlu0 %820
      %v823 = vsel %vm327, %v819, 0
      %v826 = vsel %vm403, %v821, 0
      %828 = vmatprep.subr.bf16.mxu0 0
      %829 = vmatpush1.bf16.msra.mxu0 %v826
      %830 = vmatprep.subr.bf16.mxu0 0
      %831 = vmatpush1.bf16.msra.mxu0 0
      %832 = vmatprep.subr.bf16.mxu0 0
      %833 = vmatpush1.bf16.msra.mxu0 0
      %834 = vmatprep.subr.bf16.mxu0 0
      %835 = vmatpush1.bf16.msra.mxu0 0
      %836 = vmatprep.subr.bf16.mxu0 0
      %837 = vmatpush1.bf16.msra.mxu0 0
      %838 = vmatprep.subr.bf16.mxu0 0
      %839 = vmatpush1.bf16.msra.mxu0 0
      %840 = vmatprep.subr.bf16.mxu0 0
      %841 = vmatpush1.bf16.msra.mxu0 0
      %842 = vmatprep.subr.bf16.mxu0 0
      %843 = vmatpush1.bf16.msra.mxu0 0
      %844 = vmatprep.subr.bf16.mxu0 0
      %845 = vmatpush1.bf16.msra.mxu0 0
      %846 = vmatprep.subr.bf16.mxu0 0
      %847 = vmatpush1.bf16.msra.mxu0 0
      %848 = vmatprep.subr.bf16.mxu0 0
      %849 = vmatpush1.bf16.msra.mxu0 0
      %850 = vmatprep.subr.bf16.mxu0 0
      %851 = vmatpush1.bf16.msra.mxu0 0
      %852 = vmatprep.subr.bf16.mxu0 0
      %853 = vmatpush1.bf16.msra.mxu0 0
      %854 = vmatprep.subr.bf16.mxu0 0
      %855 = vmatpush1.bf16.msra.mxu0 0
      %856 = vmatprep.subr.bf16.mxu0 0
      %857 = vmatpush1.bf16.msra.mxu0 0
      %858 = vmatprep.subr.bf16.mxu0 0
      %859 = vmatpush1.bf16.msra.mxu0 0
      %860 = vmatprep.mubr.bf16.mxu0 0
      %861 = vmatmul.mubr.bf16.gmra.mrb[0].mxu0 %v823
      %v862 = vpop.f32.mrb[0].mxu0
      %v863 = vadd.f32 0.0, %v862
      %v864 = vpop.f32.mrb[0].mxu0
      %v865 = vpop.f32.mrb[0].mxu0
      %v866 = vpop.f32.mrb[0].mxu0
      %867 = vdwg.mxu0
      %v868 = vld [vmem:[#allocation4] sm:$0xff]
      %870 = vset.pattern.permute.xlu0 3
      %871 = vperm.xlu0 %870, %v802
      %v872 = vpop.permute.xlu0 %871
      %v874 = vmul.f32 %v872, %v868
      %876 = vrot.lane.b32.xlu0 %v863, 24
      %v877 = vpop.permute.xlu0 %876
      %v879 = vadd.f32 %v874, %v877
      %vm880 = vcmask 261312
      %881 = vst.msk [vmem:[#allocation4] sm:$0xff] %vm880, %v879
      %882 = vst.msk [vmem:[#allocation2] sm:$0xff] %vm817, %v799
      // Predicated region
      $region37: #{encoder_layer_forward.4} parent=31 // pred_check
        %p883 = pneg %p315
      $region38: #{encoder_layer_forward.4} parent=31 // pred_check_branch
        %885 = sbr.rel (%p883) target = $region40
      $region39: #{encoder_layer_forward.4} parent=31 // pred_region
        %v886 = vld [vmem:[#allocation3] sm:$0xff]
        %v887 = vrcp.pop %v886
        %v888 = vld [vmem:[#allocation4] sm:$0xff]
        %890 = vset.pattern.permute.xlu0 0
        %891 = vperm.xlu0 %890, %v887
        %v892 = vpop.permute.xlu0 %891
        %v894 = vmul.f32 %v888, %v892
        %v895 = vpack.c.bf16 %v894, %v894
        %vm896 = vcmask 60416
        %897 = vst.msk [vmem:[%s313] sm:$0xf] %vm896, %v895
        %v898 = vld [vmem:[#allocation3] sm:$0xff]
        %v899 = vrcp.pop %v898
        %v900 = vld [vmem:[#allocation4] sm:$0xff]
        %902 = vset.pattern.permute.xlu0 1
        %903 = vperm.xlu0 %902, %v899
        %v904 = vpop.permute.xlu0 %903
        %v906 = vmul.f32 %v900, %v904
        %v907 = vpack.c.bf16 %v906, %v906
        %vm908 = vcmask 126016
        %909 = vst.msk [vmem:[%s313] sm:$0xf] %vm908, %v907
        %v910 = vld [vmem:[#allocation3] sm:$0xff]
        %v911 = vrcp.pop %v910
        %v912 = vld [vmem:[#allocation4] sm:$0xff]
        %914 = vset.pattern.permute.xlu0 2
        %915 = vperm.xlu0 %914, %v911
        %v916 = vpop.permute.xlu0 %915
        %v918 = vmul.f32 %v912, %v916
        %v919 = vpack.c.bf16 %v918, %v918
        %vm920 = vcmask 191616
        %921 = vst.msk [vmem:[%s313] sm:$0xf] %vm920, %v919
        %v922 = vld [vmem:[#allocation3] sm:$0xff]
        %v923 = vrcp.pop %v922
        %v924 = vld [vmem:[#allocation4] sm:$0xff]
        %926 = vset.pattern.permute.xlu0 3
        %927 = vperm.xlu0 %926, %v923
        %v928 = vpop.permute.xlu0 %927
        %v930 = vmul.f32 %v924, %v928
        %v931 = vpack.c.bf16 %v930, %v930
        %vm932 = vcmask 257216
        %933 = vst.msk [vmem:[%s313] sm:$0xf] %vm932, %v931
      $region40: #{encoder_layer_forward.4} parent=31 // pred_fallthru
        _
      %p934 = scmp.lt.s32.totalorder %s20, 1
      %s935 = scalar_select %p934, %s20, 1
      %p936 = scmp.lt.s32.totalorder %s22, 0
      %s937 = scalar_select %p936, %s22, 0
      %p938 = scmp.lt.s32.totalorder %s21, 0
      %s939 = scalar_select %p938, %s21, 0
      %s940 = sadd.s32 %s939, %s937
      %s941 = sadd.s32 %s940, %s935
      %s942 = smul.addr %s941, 4
      %s943 = scalar_lea.vmem %s3, %s942
      // Predicated region
      $region41: #{encoder_layer_forward.4} parent=31 // pred_check
        %p944 = pneg %p152
      $region42: #{encoder_layer_forward.4} parent=31 // pred_check_branch
        %946 = sbr.rel (%p944) target = $region44
      $region43: #{encoder_layer_forward.4} parent=31 // pred_region
        _
      $region44: #{encoder_layer_forward.4} parent=31 // pred_fallthru
        _
    $region32: #{encoder_layer_forward.4} parent=5 // pred_fallthru
      _
    %p947 = scmp.le.s32.totalorder 2, %s9
    // Predicated region
    $region45: #{encoder_layer_forward.4} parent=5 // pred_check
      %p948 = pneg %p947
    $region46: #{encoder_layer_forward.4} parent=5 // pred_check_branch
      %950 = sbr.rel (%p948) target = $region48
    $region47: #{encoder_layer_forward.4} parent=5 // pred_region
      %s951 = ssub.s32 %s9, 2
      // Predicated region
      $region49: #{encoder_layer_forward.4} parent=47 // pred_check
        %p952 = pneg %p158
      $region50: #{encoder_layer_forward.4} parent=47 // pred_check_branch
        %954 = sbr.rel (%p952) target = $region52
      $region51: #{encoder_layer_forward.4} parent=47 // pred_region
        %p955 = scmp.lt.s32.totalorder %s24, 1
        %s956 = scalar_select %p955, %s24, 1
        %p957 = scmp.lt.s32.totalorder %s26, 0
        %s958 = scalar_select %p957, %s26, 0
        %p959 = scmp.lt.s32.totalorder %s25, 0
        %s960 = scalar_select %p959, %s25, 0
        %s961 = sadd.s32 %s960, %s958
        %s962 = sadd.s32 %s961, %s956
        %s963 = smul.addr %s962, 4
        %s964 = scalar_lea.vmem %s3, %s963
      $region52: #{encoder_layer_forward.4} parent=47 // pred_fallthru
        _
    $region48: #{encoder_layer_forward.4} parent=5 // pred_fallthru
      _
  $region6: #{encoder_layer_forward.4} parent=0 // loop_footer
    %s13 = sadd.s32 1, %s9
  $region7: #{encoder_layer_forward.4} parent=0 // loop_footer_branch
    %8 = sbr.rel target = $region3
  $region8: #{encoder_layer_forward.4} parent=0 // loop_exit
    _

</llo_original>
